<compile_context>
chip_gen: v5e
topology: v5e:2x2
jax: 0.10.0
libtpu: 0.0.40
codegen_flags: <defaults>
</compile_context>

<pallas_src>
import functools

import numpy as np
import jax
import jax.numpy as jnp
from jax.experimental import pallas as pl
from jax.experimental.pallas import tpu as pltpu

SR = 2048
FMIN = 15
N_BINS = 64
BPO = 12
HOP = 32
WAVE_LEN = 4096
EXT_LEN = WAVE_LEN + 2 * 2048          # 8192 (window / whitened-signal length)
IMG = 256
T0 = 64 + 64 - 8                       # 120: first CQT time-frame kept by the crop
NT = (192 - 8) - T0                    # 64 frames survive the crop
N_STEM = 32                            # stand-in stem output channels
WO = IMG // 2                          # 128 conv-stem output spatial size


# ----------------------------------------------------------------------------------
# deterministic parameter / constant construction (numpy only, fixed seed)
# ----------------------------------------------------------------------------------

def tukey_window(N, alpha=0.5):
    n = np.arange(N, dtype=np.float64)
    w = np.ones(N, dtype=np.float64)
    width = int(np.floor(alpha * (N - 1) / 2.0))
    n1 = n[:width + 1]
    w[:width + 1] = 0.5 * (1.0 + np.cos(np.pi * (2.0 * n1 / (alpha * (N - 1)) - 1.0)))
    w[N - width - 1:] = w[:width + 1][::-1]
    return w.astype(np.float32)


def nuttall_window(M):
    a = [0.3635819, 0.4891775, 0.1365995, 0.0106411]
    n = np.arange(M, dtype=np.float64)
    fac = 2.0 * np.pi * n / max(M - 1, 1)
    return a[0] - a[1] * np.cos(fac) + a[2] * np.cos(2 * fac) - a[3] * np.cos(3 * fac)


def build_cqt_kernels(sr=SR, fmin=FMIN, n_bins=N_BINS, bpo=BPO):
    """Approximation of nnAudio CQT1992v2 kernels (nuttall window, norm=1).

    Returns (fft_len, trim_lo, mat) where mat is the cross-correlation matrix
    restricted to its nonzero row support (rounded to multiples of 128):
        frames[M, K_trim] @ mat[K_trim, 2*n_bins] -> [real | imag]
    """
    Q = 1.0 / (2.0 ** (1.0 / bpo) - 1.0)
    freqs = fmin * 2.0 ** (np.arange(n_bins) / float(bpo))
    fft_len = int(2 ** np.ceil(np.log2(np.ceil(Q * sr / fmin))))
    kern = np.zeros((n_bins, fft_len), dtype=np.complex128)
    for k, f in enumerate(freqs):
        l = int(np.ceil(Q * sr / f))
        start = int(np.ceil(fft_len / 2.0 - l / 2.0)) - (l % 2)
        win = nuttall_window(l)
        sig = win * np.exp(2j * np.pi * np.arange(l) * f / sr)
        sig = sig / np.abs(sig).sum()            # norm = 1 (L1)
        kern[k, start:start + l] = sig
    mat = np.concatenate([kern.real, kern.imag], axis=0).T.astype(np.float32)  # (fft_len, 128)
    # trim the all-zero outer rows (kernels are centered) -> ~45% less K, exact result
    nz = np.where(np.abs(mat).sum(axis=1) > 0)[0]
    lo = int(nz[0] // 128) * 128
    hi = int(min(fft_len, int(np.ceil((nz[-1] + 1) / 128.0)) * 128))
    return fft_len, lo, mat[lo:hi]


def interp_matrix(n_in, n_out):
    """Bilinear interpolation matrix along one axis, align_corners=True."""
    A = np.zeros((n_out, n_in), dtype=np.float32)
    scale = (n_in - 1) / (n_out - 1)
    for i in range(n_out):
        src = i * scale
        i0 = min(int(np.floor(src)), n_in - 2)
        w = src - i0
        A[i, i0] = 1.0 - w
        A[i, i0 + 1] = w
    return A


# module-level CQT constants (deterministic; Python ints stay static under jit)
FFT_LEN, TRIM_LO, CQT_MAT_NP = build_cqt_kernels()
K_TRIM = CQT_MAT_NP.shape[0]                       # 2304 for these hyper-params
FRAME_BASE = T0 * HOP - FFT_LEN // 2 + TRIM_LO     # frame start offset in whitened signal
assert FRAME_BASE >= 0
assert FRAME_BASE + (NT - 1) * HOP + K_TRIM <= EXT_LEN   # no reflect padding needed
assert K_TRIM % 128 == 0 and NT % 8 == 0
FRAME_STARTS = tuple(FRAME_BASE + HOP * i for i in range(NT))


# ----------------------------------------------------------------------------------
# Pallas kernel 1: fused CQT-magnitude + log(8x+1) + bilinear 64->256 resize per wave
# ----------------------------------------------------------------------------------

def _cqt_img_kernel(f_ref, k_ref, a_ref, at_ref, o_ref):
    # (NT, K_TRIM) bf16 @ (K_TRIM, 2*N_BINS) bf16 -> f32 accumulate on the MXU
    acc = jnp.dot(f_ref[0], k_ref[...], preferred_element_type=jnp.float32)   # (64, 128)
    re = acc[:, :N_BINS]
    im = acc[:, N_BINS:]
    z = jnp.log(8.0 * jnp.sqrt(re * re + im * im) + 1.0)                      # (time, freq)
    # bilinear resize, align_corners=True:  out^T = A @ z @ A^T  (time x freq)
    u = jnp.dot(a_ref[...], z, preferred_element_type=jnp.float32)            # (256, 64)
    o_ref[0] = jnp.dot(u, at_ref[...], preferred_element_type=jnp.float32)    # (256t, 256f)


def cqt_log_resize(frames, kmat, A, AT):
    """frames: (NW, NT, K_TRIM) bf16 -> (NW, 256, 256) f32 images in (time, freq) order."""
    NW, nt, kt = frames.shape
    nb2 = kmat.shape[1]
    return pl.pallas_call(
        _cqt_img_kernel,
        out_shape=jax.ShapeDtypeStruct((NW, IMG, IMG), jnp.float32),
        grid_spec=pltpu.PrefetchScalarGridSpec(
            num_scalar_prefetch=0,
            grid=(NW,),
            in_specs=[pl.BlockSpec((1, nt, kt), lambda i: (i, 0, 0)),
                      pl.BlockSpec((kt, nb2), lambda i: (0, 0)),       # whole CQT matrix in VMEM
                      pl.BlockSpec((IMG, N_BINS), lambda i: (0, 0)),
                      pl.BlockSpec((N_BINS, IMG), lambda i: (0, 0))],
            out_specs=pl.BlockSpec((1, IMG, IMG), lambda i: (i, 0, 0))),
        compiler_params=pltpu.CompilerParams(
            dimension_semantics=("parallel",)),
    )(frames, kmat, A, AT)


# ----------------------------------------------------------------------------------
# Pallas kernel 2: fused bias + ReLU + global-average-pool + Linear(.,1) head
# ----------------------------------------------------------------------------------

def _head_kernel(inv_hw, x_ref, b_ref, w_ref, bfc_ref, o_ref):
    # x_ref block: (1, Ho, Wo*F) lane-dense NHWC conv output (bias not yet added)
    x = jnp.maximum(x_ref[0] + b_ref[...], 0.0)            # (Ho, Wo*F)
    y = x * w_ref[...]                                     # fold fc weight into the pool
    s = jnp.sum(y, axis=1, keepdims=True)                  # (Ho, 1)
    o_ref[0] = jnp.sum(s, axis=0, keepdims=True) * inv_hw + bfc_ref[...]   # (1, 1)


def head_relu_gap_fc(co_flat, b_flat, w_flat, b_fc, n_pix):
    """co_flat: (B, Ho, Wo*F) f32, b_flat/w_flat: (1, Wo*F), b_fc: (1,1) -> (B, 1, 1)."""
    B, Ho, WF = co_flat.shape
    return pl.pallas_call(
        functools.partial(_head_kernel, 1.0 / float(n_pix)),
        out_shape=jax.ShapeDtypeStruct((B, 1, 1), jnp.float32),
        grid_spec=pltpu.PrefetchScalarGridSpec(
            num_scalar_prefetch=0,
            grid=(B,),
            in_specs=[pl.BlockSpec((1, Ho, WF), lambda i: (i, 0, 0)),
                      pl.BlockSpec((1, WF), lambda i: (0, 0)),
                      pl.BlockSpec((1, WF), lambda i: (0, 0)),
                      pl.BlockSpec((1, 1), lambda i: (0, 0))],
            out_specs=pl.BlockSpec((1, 1, 1), lambda i: (i, 0, 0))),
        compiler_params=pltpu.CompilerParams(
            dimension_semantics=("parallel",)),
    )(co_flat, b_flat, w_flat, b_fc)


# ----------------------------------------------------------------------------------
# full forward (XLA glue for FFT / conv, Pallas for the fused compute stages)
# ----------------------------------------------------------------------------------

@jax.jit
def forward(x, window, avr_spec, kmat, A, AT, w_conv, bc_flat, wfc_flat, b_fc):
    B, C, L = x.shape
    c = x.reshape(B * C, L)

    # antisymmetric edge extension (matches the torch flip/cat construction)
    cf = c[:, ::-1]
    left = -cf[:, L - 2049:-1] + 2.0 * c[:, :1]
    right = -cf[:, 1:2049] + 2.0 * c[:, -1:]
    c_ext = jnp.concatenate([left, c, right], axis=1)                    # (B*C, 8192)

    # spectral whitening  (TODO(synk): no Pallas FFT primitive; uses jnp.fft)
    avr = jnp.tile(avr_spec, (B, 1))
    wh = jnp.real(jnp.fft.ifft(jnp.fft.fft(c_ext * window[None, :]) / avr))

    # Only the 64 frames kept by the reference time crop, trimmed to the nonzero CQT
    # kernel support.  Static slices + stack -> no gather HLO, ~2.4 MB in bf16.
    wh_bf = wh.astype(jnp.bfloat16)
    frames = jnp.stack([wh_bf[:, s:s + K_TRIM] for s in FRAME_STARTS], axis=1)  # (B*C, 64, 2304)

    # fused CQT magnitude + log(8x+1) + bilinear resize -> (B*C, 256time, 256freq)
    img_t = cqt_log_resize(frames, kmat, A, AT)
    img = jnp.transpose(img_t.reshape(B, C, IMG, IMG), (0, 1, 3, 2))     # (B, C, freq, time)

    # frequency-encoding channel (varies along the freq axis)
    fe = (2.0 * jnp.arange(IMG, dtype=jnp.float32) / IMG - 1.0)[:, None]
    fe = jnp.broadcast_to(fe[None, None], (B, 1, IMG, IMG))
    img5 = jnp.concatenate([img, fe], axis=1)                            # (B, 5, 256, 256)

    # stand-in encoder stem: 7x7 stride-2 conv via XLA's native conv (NHWC output is
    # lane-dense for the Pallas head; no im2col / HBM transpose materialization).
    # TODO(synk): full pretrained timm ResNet backbone not reproduced.
    co = jax.lax.conv_general_dilated(
        img5, w_conv, window_strides=(2, 2), padding=((3, 3), (3, 3)),
        dimension_numbers=('NCHW', 'OIHW', 'NHWC'))                      # (B, 128, 128, 32)
    Bc, Ho, Wo, F = co.shape
    co_flat = co.reshape(Bc, Ho, Wo * F)                                 # free reshape, lane-dense

    out = head_relu_gap_fc(co_flat, bc_flat, wfc_flat, b_fc, Ho * Wo)    # (B, 1, 1)
    return out.reshape(B, 1)


class Model2DPallas:
    def __init__(self, n_stem=N_STEM):
        rng = np.random.RandomState(0)
        self.window = jnp.asarray(tukey_window(EXT_LEN, 0.5))
        # synthetic deterministic average spectrum (stand-in for avr_w0.pth), shape (4, 8192)
        k = np.arange(EXT_LEN, dtype=np.float64)
        avr = (1.0 + 0.25 * np.abs(np.sin(2.0 * np.pi * k / EXT_LEN)))[None, :]
        avr = (avr * (1.0 + 0.1 * np.arange(4)[:, None])).astype(np.float32)
        self.avr_spec = jnp.asarray(avr)

        # trimmed CQT kernel matrix, bf16 inputs with f32 accumulation in the kernel
        self.kmat = jnp.asarray(CQT_MAT_NP).astype(jnp.bfloat16)          # (K_TRIM, 128)

        A = interp_matrix(N_BINS, IMG)
        self.A = jnp.asarray(A)                                           # (256, 64)
        self.AT = jnp.asarray(np.ascontiguousarray(A.T))                  # (64, 256)

        # stand-in encoder params (5 input channels after frequency encoding)
        self.w_conv = jnp.asarray(rng.randn(n_stem, 5, 7, 7).astype(np.float32) * 0.05)
        b_conv = rng.randn(n_stem).astype(np.float32) * 0.01
        w_fc = rng.randn(n_stem).astype(np.float32) * 0.1
        # pre-tiled (1, Wo*F) vectors so the head kernel stays fully lane-dense
        self.bc_flat = jnp.asarray(np.tile(b_conv, WO)[None, :])          # (1, 4096)
        self.wfc_flat = jnp.asarray(np.tile(w_fc, WO)[None, :])           # (1, 4096)
        self.b_fc = jnp.asarray(np.zeros((1, 1), np.float32))

    def __call__(self, x):
        return forward(x, self.window, self.avr_spec, self.kmat, self.A, self.AT,
                       self.w_conv, self.bc_flat, self.wfc_flat, self.b_fc)


if __name__ == "__main__":
    key = jax.random.PRNGKey(0)
    x = jax.random.normal(key, (2, 4, WAVE_LEN), dtype=jnp.float32)      # (B=2, C=4, L=4096)
    model = Model2DPallas()
    out = jax.block_until_ready(model(x))
    assert out.shape == (2, 1), out.shape
    assert bool(jnp.all(jnp.isfinite(out)))
    print("KERNEL_OK")
</pallas_src>

<mosaic_0001>
module attributes {stable_mosaic.version = 11 : i64} {
  func.func @_cqt_img_kernel(%arg0: i32, %arg1: memref<1x64x2304xbf16, #tpu.memory_space<vmem>>, %arg2: memref<2304x128xbf16, #tpu.memory_space<vmem>>, %arg3: memref<256x64xf32, #tpu.memory_space<vmem>>, %arg4: memref<64x256xf32, #tpu.memory_space<vmem>>, %arg5: memref<1x256x256xf32, #tpu.memory_space<vmem>>) attributes {dimension_semantics = [#tpu.dimension_semantics<parallel>], iteration_bounds = array<i64: 8>, scalar_prefetch = 0 : i64, scratch_operands = 0 : i64, tpu.core_type = #tpu.core_type<tc>, window_params = [{transform_indices = @transform_0, window_bounds = array<i64: 1, 64, 2304>}, {pipeline_mode = #tpu.pipeline_mode<synchronous>, transform_indices = @transform_1, window_bounds = array<i64: 2304, 128>}, {pipeline_mode = #tpu.pipeline_mode<synchronous>, transform_indices = @transform_2, window_bounds = array<i64: 256, 64>}, {pipeline_mode = #tpu.pipeline_mode<synchronous>, transform_indices = @transform_3, window_bounds = array<i64: 64, 256>}, {transform_indices = @transform_4, window_bounds = array<i64: 1, 256, 256>}]} {
    %c0 = arith.constant 0 : index
    %c0_0 = arith.constant 0 : index
    %c0_1 = arith.constant 0 : index
    %0 = vector.load %arg1[%c0, %c0_0, %c0_1] : memref<1x64x2304xbf16, #tpu.memory_space<vmem>>, vector<1x64x2304xbf16>
    %1 = vector.shape_cast %0 : vector<1x64x2304xbf16> to vector<64x2304xbf16>
    %c0_2 = arith.constant 0 : index
    %c0_3 = arith.constant 0 : index
    %2 = vector.load %arg2[%c0_2, %c0_3] : memref<2304x128xbf16, #tpu.memory_space<vmem>>, vector<2304x128xbf16>
    %cst = arith.constant dense<0.000000e+00> : vector<64x128xf32>
    %3 = tpu.matmul %1, %2, %cst {dimension_numbers = #tpu.dot_dimension_numbers<[1], [0], [0], [1], [0, 0, 1, 1], [], []>} : vector<64x2304xbf16>, vector<2304x128xbf16>, vector<64x128xf32> -> vector<64x128xf32>
    %4 = vector.extract_strided_slice %3 {offsets = [0, 0], sizes = [64, 64], strides = [1, 1]} : vector<64x128xf32> to vector<64x64xf32>
    %5 = vector.extract_strided_slice %3 {offsets = [0, 64], sizes = [64, 64], strides = [1, 1]} : vector<64x128xf32> to vector<64x64xf32>
    %6 = arith.mulf %4, %4 : vector<64x64xf32>
    %7 = arith.mulf %5, %5 : vector<64x64xf32>
    %8 = arith.addf %6, %7 : vector<64x64xf32>
    %9 = math.sqrt %8 : vector<64x64xf32>
    %cst_4 = arith.constant 8.000000e+00 : f32
    %10 = vector.broadcast %cst_4 : f32 to vector<64x64xf32>
    %11 = arith.mulf %10, %9 : vector<64x64xf32>
    %cst_5 = arith.constant 1.000000e+00 : f32
    %12 = vector.broadcast %cst_5 : f32 to vector<64x64xf32>
    %13 = arith.addf %11, %12 : vector<64x64xf32>
    %14 = math.log %13 : vector<64x64xf32>
    %c0_6 = arith.constant 0 : index
    %c0_7 = arith.constant 0 : index
    %15 = vector.load %arg3[%c0_6, %c0_7] : memref<256x64xf32, #tpu.memory_space<vmem>>, vector<256x64xf32>
    %cst_8 = arith.constant dense<0.000000e+00> : vector<256x64xf32>
    %16 = tpu.matmul %15, %14, %cst_8 {dimension_numbers = #tpu.dot_dimension_numbers<[1], [0], [0], [1], [0, 0, 1, 1], [], []>} : vector<256x64xf32>, vector<64x64xf32>, vector<256x64xf32> -> vector<256x64xf32>
    %c0_9 = arith.constant 0 : index
    %c0_10 = arith.constant 0 : index
    %17 = vector.load %arg4[%c0_9, %c0_10] : memref<64x256xf32, #tpu.memory_space<vmem>>, vector<64x256xf32>
    %cst_11 = arith.constant dense<0.000000e+00> : vector<256x256xf32>
    %18 = tpu.matmul %16, %17, %cst_11 {dimension_numbers = #tpu.dot_dimension_numbers<[1], [0], [0], [1], [0, 0, 1, 1], [], []>} : vector<256x64xf32>, vector<64x256xf32>, vector<256x256xf32> -> vector<256x256xf32>
    %c0_12 = arith.constant 0 : index
    %c0_13 = arith.constant 0 : index
    %c0_14 = arith.constant 0 : index
    %19 = vector.load %arg5[%c0_12, %c0_13, %c0_14] : memref<1x256x256xf32, #tpu.memory_space<vmem>>, vector<1x256x256xf32>
    %20 = vector.shape_cast %19 : vector<1x256x256xf32> to vector<256x256xf32>
    %21 = vector.shape_cast %18 : vector<256x256xf32> to vector<1x256x256xf32>
    tpu.vector_store %arg5[%c0_12, %c0_13, %c0_14], %21 {strides = array<i32>} : memref<1x256x256xf32, #tpu.memory_space<vmem>>, vector<1x256x256xf32>,
    return
  }
  func.func @transform_0(%arg0: i32) -> (i32, i32, i32) {
    %c0_i32 = arith.constant 0 : i32
    %c0_i32_0 = arith.constant 0 : i32
    %c0_i32_1 = arith.constant 0 : i32
    return %arg0, %c0_i32, %c0_i32_0 : i32, i32, i32
  }
  func.func @transform_1(%arg0: i32) -> (i32, i32) {
    %c0_i32 = arith.constant 0 : i32
    %c0_i32_0 = arith.constant 0 : i32
    %c0_i32_1 = arith.constant 0 : i32
    return %c0_i32, %c0_i32_0 : i32, i32
  }
  func.func @transform_2(%arg0: i32) -> (i32, i32) {
    %c0_i32 = arith.constant 0 : i32
    %c0_i32_0 = arith.constant 0 : i32
    %c0_i32_1 = arith.constant 0 : i32
    return %c0_i32, %c0_i32_0 : i32, i32
  }
  func.func @transform_3(%arg0: i32) -> (i32, i32) {
    %c0_i32 = arith.constant 0 : i32
    %c0_i32_0 = arith.constant 0 : i32
    %c0_i32_1 = arith.constant 0 : i32
    return %c0_i32, %c0_i32_0 : i32, i32
  }
  func.func @transform_4(%arg0: i32) -> (i32, i32, i32) {
    %c0_i32 = arith.constant 0 : i32
    %c0_i32_0 = arith.constant 0 : i32
    %c0_i32_1 = arith.constant 0 : i32
    return %arg0, %c0_i32, %c0_i32_0 : i32, i32, i32
  }
}

module attributes {stable_mosaic.version = 11 : i64} {
  func.func @_head_kernel(%arg0: i32, %arg1: memref<1x128x4096xf32, #tpu.memory_space<vmem>>, %arg2: memref<1x4096xf32, #tpu.memory_space<vmem>>, %arg3: memref<1x4096xf32, #tpu.memory_space<vmem>>, %arg4: memref<1x1xf32, #tpu.memory_space<vmem>>, %arg5: memref<1x1x1xf32, #tpu.memory_space<vmem>>) attributes {dimension_semantics = [#tpu.dimension_semantics<parallel>], iteration_bounds = array<i64: 2>, scalar_prefetch = 0 : i64, scratch_operands = 0 : i64, tpu.core_type = #tpu.core_type<tc>, window_params = [{transform_indices = @transform_0, window_bounds = array<i64: 1, 128, 4096>}, {pipeline_mode = #tpu.pipeline_mode<synchronous>, transform_indices = @transform_1, window_bounds = array<i64: 1, 4096>}, {pipeline_mode = #tpu.pipeline_mode<synchronous>, transform_indices = @transform_2, window_bounds = array<i64: 1, 4096>}, {pipeline_mode = #tpu.pipeline_mode<synchronous>, transform_indices = @transform_3, window_bounds = array<i64: 1, 1>}, {transform_indices = @transform_4, window_bounds = array<i64: 1, 1, 1>}]} {
    %c0 = arith.constant 0 : index
    %c0_0 = arith.constant 0 : index
    %c0_1 = arith.constant 0 : index
    %0 = vector.load %arg1[%c0, %c0_0, %c0_1] : memref<1x128x4096xf32, #tpu.memory_space<vmem>>, vector<1x128x4096xf32>
    %1 = vector.shape_cast %0 : vector<1x128x4096xf32> to vector<128x4096xf32>
    %c0_2 = arith.constant 0 : index
    %c0_3 = arith.constant 0 : index
    %2 = vector.load %arg2[%c0_2, %c0_3] : memref<1x4096xf32, #tpu.memory_space<vmem>>, vector<1x4096xf32>
    %3 = vector.broadcast %2 : vector<1x4096xf32> to vector<128x4096xf32>
    %4 = arith.addf %1, %3 : vector<128x4096xf32>
    %cst = arith.constant 0.000000e+00 : f32
    %5 = vector.broadcast %cst : f32 to vector<128x4096xf32>
    %6 = arith.maximumf %4, %5 : vector<128x4096xf32>
    %c0_4 = arith.constant 0 : index
    %c0_5 = arith.constant 0 : index
    %7 = vector.load %arg3[%c0_4, %c0_5] : memref<1x4096xf32, #tpu.memory_space<vmem>>, vector<1x4096xf32>
    %8 = vector.broadcast %7 : vector<1x4096xf32> to vector<128x4096xf32>
    %9 = arith.mulf %6, %8 : vector<128x4096xf32>
    %cst_6 = arith.constant dense<0.000000e+00> : vector<128xf32>
    %10 = vector.multi_reduction <add>, %9, %cst_6 [1] : vector<128x4096xf32> to vector<128xf32>
    %11 = vector.shape_cast %10 : vector<128xf32> to vector<128x1xf32>
    %cst_7 = arith.constant dense<0.000000e+00> : vector<1xf32>
    %12 = vector.multi_reduction <add>, %11, %cst_7 [0] : vector<128x1xf32> to vector<1xf32>
    %13 = vector.shape_cast %12 : vector<1xf32> to vector<1x1xf32>
    %cst_8 = arith.constant 6.10351563E-5 : f32
    %14 = vector.broadcast %cst_8 : f32 to vector<1x1xf32>
    %15 = arith.mulf %13, %14 : vector<1x1xf32>
    %c0_9 = arith.constant 0 : index
    %c0_10 = arith.constant 0 : index
    %16 = vector.load %arg4[%c0_9, %c0_10] : memref<1x1xf32, #tpu.memory_space<vmem>>, vector<1x1xf32>
    %17 = arith.addf %15, %16 : vector<1x1xf32>
    %c0_11 = arith.constant 0 : index
    %c0_12 = arith.constant 0 : index
    %c0_13 = arith.constant 0 : index
    %18 = vector.load %arg5[%c0_11, %c0_12, %c0_13] : memref<1x1x1xf32, #tpu.memory_space<vmem>>, vector<1x1x1xf32>
    %19 = vector.shape_cast %18 : vector<1x1x1xf32> to vector<1x1xf32>
    %20 = vector.shape_cast %17 : vector<1x1xf32> to vector<1x1x1xf32>
    tpu.vector_store %arg5[%c0_11, %c0_12, %c0_13], %20 {strides = array<i32>} : memref<1x1x1xf32, #tpu.memory_space<vmem>>, vector<1x1x1xf32>,
    return
  }
  func.func @transform_0(%arg0: i32) -> (i32, i32, i32) {
    %c0_i32 = arith.constant 0 : i32
    %c0_i32_0 = arith.constant 0 : i32
    %c0_i32_1 = arith.constant 0 : i32
    return %arg0, %c0_i32, %c0_i32_0 : i32, i32, i32
  }
  func.func @transform_1(%arg0: i32) -> (i32, i32) {
    %c0_i32 = arith.constant 0 : i32
    %c0_i32_0 = arith.constant 0 : i32
    %c0_i32_1 = arith.constant 0 : i32
    return %c0_i32, %c0_i32_0 : i32, i32
  }
  func.func @transform_2(%arg0: i32) -> (i32, i32) {
    %c0_i32 = arith.constant 0 : i32
    %c0_i32_0 = arith.constant 0 : i32
    %c0_i32_1 = arith.constant 0 : i32
    return %c0_i32, %c0_i32_0 : i32, i32
  }
  func.func @transform_3(%arg0: i32) -> (i32, i32) {
    %c0_i32 = arith.constant 0 : i32
    %c0_i32_0 = arith.constant 0 : i32
    %c0_i32_1 = arith.constant 0 : i32
    return %c0_i32, %c0_i32_0 : i32, i32
  }
  func.func @transform_4(%arg0: i32) -> (i32, i32, i32) {
    %c0_i32 = arith.constant 0 : i32
    %c0_i32_0 = arith.constant 0 : i32
    %c0_i32_1 = arith.constant 0 : i32
    return %arg0, %c0_i32, %c0_i32_0 : i32, i32, i32
  }
}

</mosaic_0001>

<llo_original>
// kernel: reverse.1
$region0: #{reverse.1}
  %s0 = inlined_call_operand.vmem [shape: f32[8,2048], index: 0, kind: input, shape index: {}]
  %s1 = inlined_call_operand.vmem [shape: f32[8,2048], index: 1, kind: output, shape index: {}]
  %v2 = vlaneseq
  %v3 = vsub.s32 127, %v2
  %4 = vset.pattern.permute.xlu0 %v3
  $region1: #{reverse.1} parent=0
    #allocation0 [shape = 'u8[8192]{0}', space=vmem, size = 0x2000, scoped, tag = 'operand span for operand 0']
    #allocation1 [shape = 'u8[8192]{0}', space=vmem, size = 0x2000, scoped, tag = 'operand span for operand 1']
    loop: start=0, step=1, limit=18
    $region2: #{reverse.1} parent=1 // loop_pre_header
      _
    $region3: #{reverse.1} parent=1 // loop_header
      %s6 = sphi 0, %s10
      %p7 = scmp.ge.s32.totalorder %s6, 18
      %s13 = sphi 0, %s25
      %s14 = sphi 0, %s21
      %s15 = sphi 0, %s13
      %s16 = sphi 0, %s14
      %s17 = sphi 0, %s15
      %s18 = sphi 0, %s16
    $region4: #{reverse.1} parent=1 // loop_header_branch
      %9 = sbr.rel (%p7) target = $region8
    $region5: #{reverse.1} parent=1 // loop_body
      %s11 = ssub.s32 %s6, 1
      %s12 = ssub.s32 %s6, 2
      %s19 = sadd.s32 1, %s14
      %p20 = scmp.ge.s32.totalorder %s19, 16
      %s21 = scalar_select %p20, 0, %s19
      %s22 = sadd.s32 1, %s13
      %s23 = scalar_select %p20, %s22, %s13
      %p24 = scmp.ge.s32.totalorder %s23, 1
      %s25 = scalar_select %p24, 0, %s23
      %p26 = scmp.le.s32.totalorder 1, %s6
      %p27 = scmp.lt.s32.totalorder %s6, 17
      %p28 = pnand %p26, %p27
      %p29 = pneg %p28
      // Predicated region
      $region9: #{reverse.1} parent=5 // pred_check
        _
      $region10: #{reverse.1} parent=5 // pred_check_branch
        %31 = sbr.rel (%p28) target = $region12
      $region11: #{reverse.1} parent=5 // pred_region
        %s32 = ssub.s32 %s6, 1
      $region12: #{reverse.1} parent=5 // pred_fallthru
        _
      %p33 = scmp.lt.s32.totalorder %s6, 16
      // Predicated region
      $region13: #{reverse.1} parent=5 // pred_check
        %p34 = pneg %p33
      $region14: #{reverse.1} parent=5 // pred_check_branch
        %36 = sbr.rel (%p34) target = $region16
      $region15: #{reverse.1} parent=5 // pred_region
        %s37 = sand.u32 %s6, 1
        %s38 = sand.u32 %s6, 1
        %s39 = smul.addr %s38, 8
        %s40 = scalar_lea.vmem [#allocation0], %s39
        %s41 = ssub.s32 15, %s14
        %s42 = smul.addr %s13, 16
        %s43 = sadd.s32 %s41, %s42
        %s44 = smul.addr %s43, 8
        %s45 = scalar_lea.vmem %s0, %s44
        // Predicated region
        $region17: #{reverse.1} parent=15 // pred_check
          _
        $region18: #{reverse.1} parent=15 // pred_check_branch
          %47 = sbr.rel (0) target = $region20
        $region19: #{reverse.1} parent=15 // pred_region
          // Predicated region
          $region21: #{reverse.1} parent=19 // pred_check
            _
          $region22: #{reverse.1} parent=19 // pred_check_branch
            %49 = sbr.rel (0) target = $region24
          $region23: #{reverse.1} parent=19 // pred_region
            // Predicated region
            $region36: #{reverse.1} parent=23 // pred_check
              _
            $region37: #{reverse.1} parent=23 // pred_check_branch
              %65 = sbr.rel (0) target = $region39
            $region38: #{reverse.1} parent=23 // pred_region
              loop: start=0, step=1, limit=1
              $region40: #{reverse.1} parent=38 // loop_pre_header
                _
              $region41: #{reverse.1} parent=38 // loop_header
                %s67 = sphi 0, %s71
                %p68 = scmp.ge.s32.totalorder %s67, 1
                %s72 = sphi %s45, %s45
                %s73 = sphi %s40, %s40
              $region42: #{reverse.1} parent=38 // loop_header_branch
                %70 = sbr.rel (%p68) target = $region46
              $region43: #{reverse.1} parent=38 // loop_body
                %v74 = vld [vmem:[%s72] sm:$0xff]
                %75 = vst [vmem:[%s73] sm:$0xff] %v74
              $region44: #{reverse.1} parent=38 // loop_footer
                %s71 = sadd.s32 1, %s67
              $region45: #{reverse.1} parent=38 // loop_footer_branch
                %66 = sbr.rel target = $region41
              $region46: #{reverse.1} parent=38 // loop_exit
                _
            $region39: #{reverse.1} parent=23 // pred_fallthru
              _
            // Predicated region
            $region47: #{reverse.1} parent=23 // pred_check
              _
            $region48: #{reverse.1} parent=23 // pred_check_branch
              %77 = sbr.rel target = $region50
            $region49: #{reverse.1} parent=23 // pred_region
              _
            $region50: #{reverse.1} parent=23 // pred_fallthru
              _
          $region24: #{reverse.1} parent=19 // pred_fallthru
            _
          // Predicated region
          $region25: #{reverse.1} parent=19 // pred_check
            _
          $region26: #{reverse.1} parent=19 // pred_check_branch
            %51 = sbr.rel target = $region28
          $region27: #{reverse.1} parent=19 // pred_region
            %s53 = ssub.s32 256, 1
            loop: start=0, step=1, limit=1
            $region29: #{reverse.1} parent=27 // loop_pre_header
              _
            $region30: #{reverse.1} parent=27 // loop_header
              %s55 = sphi 0, %s59
              %p56 = scmp.ge.s32.totalorder %s55, 1
              %s60 = sphi %s45, %s45
              %s61 = sphi %s40, %s40
            $region31: #{reverse.1} parent=27 // loop_header_branch
              %58 = sbr.rel (%p56) target = $region35
            $region32: #{reverse.1} parent=27 // loop_body
              %v62 = vld [vmem:[%s60] sm:%s53]
              %63 = vst [vmem:[%s61] sm:%s53] %v62
            $region33: #{reverse.1} parent=27 // loop_footer
              %s59 = sadd.s32 1, %s55
            $region34: #{reverse.1} parent=27 // loop_footer_branch
              %54 = sbr.rel target = $region30
            $region35: #{reverse.1} parent=27 // loop_exit
              _
          $region28: #{reverse.1} parent=19 // pred_fallthru
            _
        $region20: #{reverse.1} parent=15 // pred_fallthru
          _
        %78 = vnop
      $region16: #{reverse.1} parent=5 // pred_fallthru
        _
      %p79 = scmp.le.s32.totalorder 1, %s6
      %p80 = scmp.lt.s32.totalorder %s6, 17
      %p81 = pnand %p79, %p80
      %p82 = pneg %p81
      // Predicated region
      $region51: #{reverse.1} parent=5 // pred_check
        _
      $region52: #{reverse.1} parent=5 // pred_check_branch
        %84 = sbr.rel (%p81) target = $region54
      $region53: #{reverse.1} parent=5 // pred_region
        %s85 = ssub.s32 %s6, 1
        %s86 = sand.u32 %s11, 1
        %s87 = sand.u32 %s11, 1
        %s88 = smul.addr %s87, 8
        %s89 = scalar_lea.vmem [#allocation0], %s88
        %s90 = sand.u32 %s11, 1
        %s91 = sand.u32 %s11, 1
        %s92 = smul.addr %s91, 8
        %s93 = scalar_lea.vmem [#allocation0], %s92
        %s94 = sand.u32 %s11, 1
        %s95 = sand.u32 %s11, 1
        %s96 = smul.addr %s95, 8
        %s97 = scalar_lea.vmem [#allocation1], %s96
        %s98 = ssub.s32 15, %s16
        %v99 = vld [vmem:[%s89] sm:$0xff]
        %100 = vperm.xlu0 %4, %v99
        %v101 = vpop.permute.xlu0 %100
        %102 = vst [vmem:[%s97] sm:$0xff] %v101
        %s103 = sand.u32 %s11, 1
        %s104 = sand.u32 %s11, 1
        %s105 = smul.addr %s104, 8
        %s106 = scalar_lea.vmem [#allocation1], %s105
        %s107 = smul.addr %s15, 16
        %s108 = sadd.s32 %s16, %s107
        %s109 = smul.addr %s108, 8
        %s110 = scalar_lea.vmem %s1, %s109
        // Predicated region
        $region55: #{reverse.1} parent=53 // pred_check
          _
        $region56: #{reverse.1} parent=53 // pred_check_branch
          %112 = sbr.rel (0) target = $region58
        $region57: #{reverse.1} parent=53 // pred_region
          // Predicated region
          $region59: #{reverse.1} parent=57 // pred_check
            _
          $region60: #{reverse.1} parent=57 // pred_check_branch
            %114 = sbr.rel (0) target = $region62
          $region61: #{reverse.1} parent=57 // pred_region
            // Predicated region
            $region74: #{reverse.1} parent=61 // pred_check
              _
            $region75: #{reverse.1} parent=61 // pred_check_branch
              %130 = sbr.rel (0) target = $region77
            $region76: #{reverse.1} parent=61 // pred_region
              loop: start=0, step=1, limit=1
              $region78: #{reverse.1} parent=76 // loop_pre_header
                _
              $region79: #{reverse.1} parent=76 // loop_header
                %s132 = sphi 0, %s136
                %p133 = scmp.ge.s32.totalorder %s132, 1
                %s137 = sphi %s106, %s106
                %s138 = sphi %s110, %s110
              $region80: #{reverse.1} parent=76 // loop_header_branch
                %135 = sbr.rel (%p133) target = $region84
              $region81: #{reverse.1} parent=76 // loop_body
                %v139 = vld [vmem:[%s137] sm:$0xff]
                %140 = vst [vmem:[%s138] sm:$0xff] %v139
              $region82: #{reverse.1} parent=76 // loop_footer
                %s136 = sadd.s32 1, %s132
              $region83: #{reverse.1} parent=76 // loop_footer_branch
                %131 = sbr.rel target = $region79
              $region84: #{reverse.1} parent=76 // loop_exit
                _
            $region77: #{reverse.1} parent=61 // pred_fallthru
              _
            // Predicated region
            $region85: #{reverse.1} parent=61 // pred_check
              _
            $region86: #{reverse.1} parent=61 // pred_check_branch
              %142 = sbr.rel target = $region88
            $region87: #{reverse.1} parent=61 // pred_region
              _
            $region88: #{reverse.1} parent=61 // pred_fallthru
              _
          $region62: #{reverse.1} parent=57 // pred_fallthru
            _
          // Predicated region
          $region63: #{reverse.1} parent=57 // pred_check
            _
          $region64: #{reverse.1} parent=57 // pred_check_branch
            %116 = sbr.rel target = $region66
          $region65: #{reverse.1} parent=57 // pred_region
            %s118 = ssub.s32 256, 1
            loop: start=0, step=1, limit=1
            $region67: #{reverse.1} parent=65 // loop_pre_header
              _
            $region68: #{reverse.1} parent=65 // loop_header
              %s120 = sphi 0, %s124
              %p121 = scmp.ge.s32.totalorder %s120, 1
              %s125 = sphi %s106, %s106
              %s126 = sphi %s110, %s110
            $region69: #{reverse.1} parent=65 // loop_header_branch
              %123 = sbr.rel (%p121) target = $region73
            $region70: #{reverse.1} parent=65 // loop_body
              %v127 = vld [vmem:[%s125] sm:%s118]
              %128 = vst [vmem:[%s126] sm:%s118] %v127
            $region71: #{reverse.1} parent=65 // loop_footer
              %s124 = sadd.s32 1, %s120
            $region72: #{reverse.1} parent=65 // loop_footer_branch
              %119 = sbr.rel target = $region68
            $region73: #{reverse.1} parent=65 // loop_exit
              _
          $region66: #{reverse.1} parent=57 // pred_fallthru
            _
        $region58: #{reverse.1} parent=53 // pred_fallthru
          _
        %143 = vnop
      $region54: #{reverse.1} parent=5 // pred_fallthru
        _
      %p144 = scmp.le.s32.totalorder 2, %s6
      // Predicated region
      $region89: #{reverse.1} parent=5 // pred_check
        %p145 = pneg %p144
      $region90: #{reverse.1} parent=5 // pred_check_branch
        %147 = sbr.rel (%p145) target = $region92
      $region91: #{reverse.1} parent=5 // pred_region
        %s148 = ssub.s32 %s6, 2
        %s149 = sand.u32 %s12, 1
        %s150 = sand.u32 %s12, 1
        %s151 = smul.addr %s150, 8
        %s152 = scalar_lea.vmem [#allocation1], %s151
      $region92: #{reverse.1} parent=5 // pred_fallthru
        _
    $region6: #{reverse.1} parent=1 // loop_footer
      %s10 = sadd.s32 1, %s6
    $region7: #{reverse.1} parent=1 // loop_footer_branch
      %5 = sbr.rel target = $region3
    $region8: #{reverse.1} parent=1 // loop_exit
      _

// kernel: forward.2
$region0: #{forward.2}
  #allocation0 [shape = 'u32[]', space=smem, size = 0x4, offset = 0x4, fixed_abs, tag = 'smem constant byte address 0x4 - core index']
  #allocation1 [shape = 'u32[72,128]{1,0:T(1,128)}', space=vmem, size = 0x9000, scoped, tag = 'internal scratch']
  %s0 = inlined_call_operand.vmem [shape: bf16[8,64,2304], index: 0, kind: input, shape index: {}]
  %s1 = inlined_call_operand.vmem [shape: bf16[2304,128], index: 1, kind: input, shape index: {}]
  %s2 = inlined_call_operand.vmem [shape: f32[256,64], index: 2, kind: input, shape index: {}]
  %s3 = inlined_call_operand.vmem [shape: f32[64,256], index: 3, kind: input, shape index: {}]
  %s4 = inlined_call_operand.vmem [shape: f32[8,256,256], index: 4, kind: output, shape index: {}]
  %s5 = sld [smem:[#allocation0]]
  $region49: #{forward.2} parent=0
    _
  %s7 = ssub.s32 1, %s5
  %s8 = scalar_select 0, %s7, %s5
  loop: start=0, step=1, limit=10
  $region2: #{forward.2} parent=0 // loop_pre_header
    _
  $region3: #{forward.2} parent=0 // loop_header
    %s10 = sphi 0, %s14
    %p11 = scmp.ge.s32.totalorder %s10, 10
    %s20 = sphi 0, %s22
    %s23 = sphi 0, %s20
    %s24 = sphi 0, %s23
    %s40 = sphi 0, %s24
    %s44 = sphi 0, %s44
    %s46 = sphi 0, %s44
    %s47 = sphi 0, %s46
    %s61 = sphi 0, %s47
    %s65 = sphi 0, %s65
    %s67 = sphi 0, %s65
    %s68 = sphi 0, %s67
    %s82 = sphi 0, %s68
    %s86 = sphi 0, %s86
    %s88 = sphi 0, %s86
    %s89 = sphi 0, %s88
    %s103 = sphi 0, %s89
    %s109 = sphi 0, %s111
    %s112 = sphi 0, %s109
    %s113 = sphi 0, %s112
    %s129 = sphi 0, %s113
  $region4: #{forward.2} parent=0 // loop_header_branch
    %13 = sbr.rel (%p11) target = $region8
  $region5: #{forward.2} parent=0 // loop_body
    %s15 = ssub.s32 %s10, 1
    %s16 = ssub.s32 %s10, 2
    %s17 = sadd.s32 %s10, 1
    %s18 = ssub.s32 %s10, %s17
    %p19 = scmp.eq.s32.totalorder %s18, 0
    %s21 = sadd.s32 %s20, 1
    %s22 = scalar_select %p19, %s20, %s21
    %p25 = pneg %p19
    %p26 = scmp.eq.s32.totalorder %s10, 7
    %p27 = por %p25, %p26
    %p28 = scmp.ne.s32.totalorder %s20, %s23
    %p29 = scmp.eq.s32.totalorder %s10, 0
    %p30 = por %p28, %p29
    %p31 = scmp.ne.s32.totalorder %s20, %s23
    %p32 = scmp.eq.s32.totalorder %s15, 7
    %p33 = por %p31, %p32
    %p34 = scmp.ne.s32.totalorder %s23, %s24
    %p35 = scmp.eq.s32.totalorder %s15, 0
    %p36 = por %p34, %p35
    %p37 = scmp.ne.s32.totalorder %s23, %s24
    %p38 = scmp.eq.s32.totalorder %s16, 7
    %p39 = por %p37, %p38
    %p41 = scmp.ne.s32.totalorder %s24, %s40
    %p42 = scmp.eq.s32.totalorder %s16, 0
    %p43 = por %p41, %p42
    %s45 = sadd.s32 %s44, 1
    %p48 = scmp.eq.s32.totalorder %s10, 7
    %p49 = scmp.ne.s32.totalorder %s44, %s46
    %p50 = scmp.eq.s32.totalorder %s10, 0
    %p51 = por %p49, %p50
    %p52 = scmp.ne.s32.totalorder %s44, %s46
    %p53 = scmp.eq.s32.totalorder %s15, 7
    %p54 = por %p52, %p53
    %p55 = scmp.ne.s32.totalorder %s46, %s47
    %p56 = scmp.eq.s32.totalorder %s15, 0
    %p57 = por %p55, %p56
    %p58 = scmp.ne.s32.totalorder %s46, %s47
    %p59 = scmp.eq.s32.totalorder %s16, 7
    %p60 = por %p58, %p59
    %p62 = scmp.ne.s32.totalorder %s47, %s61
    %p63 = scmp.eq.s32.totalorder %s16, 0
    %p64 = por %p62, %p63
    %s66 = sadd.s32 %s65, 1
    %p69 = scmp.eq.s32.totalorder %s10, 7
    %p70 = scmp.ne.s32.totalorder %s65, %s67
    %p71 = scmp.eq.s32.totalorder %s10, 0
    %p72 = por %p70, %p71
    %p73 = scmp.ne.s32.totalorder %s65, %s67
    %p74 = scmp.eq.s32.totalorder %s15, 7
    %p75 = por %p73, %p74
    %p76 = scmp.ne.s32.totalorder %s67, %s68
    %p77 = scmp.eq.s32.totalorder %s15, 0
    %p78 = por %p76, %p77
    %p79 = scmp.ne.s32.totalorder %s67, %s68
    %p80 = scmp.eq.s32.totalorder %s16, 7
    %p81 = por %p79, %p80
    %p83 = scmp.ne.s32.totalorder %s68, %s82
    %p84 = scmp.eq.s32.totalorder %s16, 0
    %p85 = por %p83, %p84
    %s87 = sadd.s32 %s86, 1
    %p90 = scmp.eq.s32.totalorder %s10, 7
    %p91 = scmp.ne.s32.totalorder %s86, %s88
    %p92 = scmp.eq.s32.totalorder %s10, 0
    %p93 = por %p91, %p92
    %p94 = scmp.ne.s32.totalorder %s86, %s88
    %p95 = scmp.eq.s32.totalorder %s15, 7
    %p96 = por %p94, %p95
    %p97 = scmp.ne.s32.totalorder %s88, %s89
    %p98 = scmp.eq.s32.totalorder %s15, 0
    %p99 = por %p97, %p98
    %p100 = scmp.ne.s32.totalorder %s88, %s89
    %p101 = scmp.eq.s32.totalorder %s16, 7
    %p102 = por %p100, %p101
    %p104 = scmp.ne.s32.totalorder %s89, %s103
    %p105 = scmp.eq.s32.totalorder %s16, 0
    %p106 = por %p104, %p105
    %s107 = ssub.s32 %s10, %s17
    %p108 = scmp.eq.s32.totalorder %s107, 0
    %s110 = sadd.s32 %s109, 1
    %s111 = scalar_select %p108, %s109, %s110
    %p114 = pneg %p108
    %p115 = scmp.eq.s32.totalorder %s10, 7
    %p116 = por %p114, %p115
    %p117 = scmp.ne.s32.totalorder %s109, %s112
    %p118 = scmp.eq.s32.totalorder %s10, 0
    %p119 = por %p117, %p118
    %p120 = scmp.ne.s32.totalorder %s109, %s112
    %p121 = scmp.eq.s32.totalorder %s15, 7
    %p122 = por %p120, %p121
    %p123 = scmp.ne.s32.totalorder %s112, %s113
    %p124 = scmp.eq.s32.totalorder %s15, 0
    %p125 = por %p123, %p124
    %p126 = scmp.ne.s32.totalorder %s112, %s113
    %p127 = scmp.eq.s32.totalorder %s16, 7
    %p128 = por %p126, %p127
    %p130 = scmp.ne.s32.totalorder %s113, %s129
    %p131 = scmp.eq.s32.totalorder %s16, 0
    %p132 = por %p130, %p131
    %p133 = scmp.le.s32.totalorder 1, %s10
    %p134 = scmp.lt.s32.totalorder %s10, 9
    %p135 = pnand %p133, %p134
    %p136 = pneg %p135
    // Predicated region
    $region9: #{forward.2} parent=5 // pred_check
      _
    $region10: #{forward.2} parent=5 // pred_check_branch
      %138 = sbr.rel (%p135) target = $region12
    $region11: #{forward.2} parent=5 // pred_region
      %s139 = ssub.s32 %s10, 1
      // Predicated region
      $region13: #{forward.2} parent=11 // pred_check
        %p140 = pneg %p57
      $region14: #{forward.2} parent=11 // pred_check_branch
        %142 = sbr.rel (%p140) target = $region16
      $region15: #{forward.2} parent=11 // pred_region
        _
      $region16: #{forward.2} parent=11 // pred_fallthru
        _
      // Predicated region
      $region17: #{forward.2} parent=11 // pred_check
        %p143 = pneg %p78
      $region18: #{forward.2} parent=11 // pred_check_branch
        %145 = sbr.rel (%p143) target = $region20
      $region19: #{forward.2} parent=11 // pred_region
        _
      $region20: #{forward.2} parent=11 // pred_fallthru
        _
      // Predicated region
      $region21: #{forward.2} parent=11 // pred_check
        %p146 = pneg %p99
      $region22: #{forward.2} parent=11 // pred_check_branch
        %148 = sbr.rel (%p146) target = $region24
      $region23: #{forward.2} parent=11 // pred_region
        _
      $region24: #{forward.2} parent=11 // pred_fallthru
        _
    $region12: #{forward.2} parent=5 // pred_fallthru
      _
    %p149 = scmp.lt.s32.totalorder %s10, 8
    // Predicated region
    $region25: #{forward.2} parent=5 // pred_check
      %p150 = pneg %p149
    $region26: #{forward.2} parent=5 // pred_check_branch
      %152 = sbr.rel (%p150) target = $region28
    $region27: #{forward.2} parent=5 // pred_region
      // Predicated region
      $region29: #{forward.2} parent=27 // pred_check
        %p153 = pneg %p30
      $region30: #{forward.2} parent=27 // pred_check_branch
        %155 = sbr.rel (%p153) target = $region32
      $region31: #{forward.2} parent=27 // pred_region
        %p156 = scmp.lt.s32.totalorder %s10, 7
        %s157 = scalar_select %p156, %s10, 7
        %s158 = smul.addr %s157, 144
        %s159 = smul.addr %s158, 4
        %s160 = scalar_lea.vmem %s0, %s159
      $region32: #{forward.2} parent=27 // pred_fallthru
        _
    $region28: #{forward.2} parent=5 // pred_fallthru
      _
    %p161 = scmp.le.s32.totalorder 1, %s10
    %p162 = scmp.lt.s32.totalorder %s10, 9
    %p163 = pnand %p161, %p162
    %p164 = pneg %p163
    // Predicated region
    $region33: #{forward.2} parent=5 // pred_check
      _
    $region34: #{forward.2} parent=5 // pred_check_branch
      %166 = sbr.rel (%p163) target = $region36
    $region35: #{forward.2} parent=5 // pred_region
      %s167 = ssub.s32 %s10, 1
      %p168 = scmp.lt.s32.totalorder %s15, 7
      %s169 = scalar_select %p168, %s15, 7
      %s170 = smul.addr %s169, 144
      %s171 = smul.addr %s170, 4
      %s172 = scalar_lea.vmem %s0, %s171
      %p173 = pneg %p36
      %p174 = pneg %p33
      %p175 = pneg %p57
      %p176 = pneg %p54
      %p177 = pneg %p78
      %p178 = pneg %p75
      %p179 = pneg %p99
      %p180 = pneg %p96
      %p181 = pneg %p125
      %p182 = pneg %p122
      %p183 = scmp.lt.s32.totalorder %s15, 7
      %s184 = scalar_select %p183, %s15, 7
      %s185 = smul.addr %s184, 64
      %s186 = smul.addr %s185, 8
      %s187 = scalar_lea.vmem %s4, %s186
      %p188 = scmp.lt.s32.totalorder %s15, 7
      %s189 = scalar_select %p188, %s15, 7
      %s190 = smul.addr %s189, 144
      %s191 = smul.addr %s190, 4
      %s192 = scalar_lea.vmem %s0, %s191
      %p193 = scmp.lt.s32.totalorder %s15, 7
      %s194 = scalar_select %p193, %s15, 7
      %s195 = smul.addr %s194, 64
      %s196 = smul.addr %s195, 8
      %s197 = scalar_lea.vmem %s4, %s196
      %v198 = vld [vmem:[%s192] sm:$0xff]
      %v199 = vld [vmem:[%s192 + $0x8] sm:$0xff]
      %v200 = vld [vmem:[%s192 + $0x10] sm:$0xff]
      %v201 = vld [vmem:[%s192 + $0x18] sm:$0xff]
      %v202 = vld [vmem:[%s192 + $0x20] sm:$0xff]
      %v203 = vld [vmem:[%s192 + $0x28] sm:$0xff]
      %v204 = vld [vmem:[%s192 + $0x30] sm:$0xff]
      %v205 = vld [vmem:[%s192 + $0x38] sm:$0xff]
      %v206 = vld [vmem:[%s192 + $0x40] sm:$0xff]
      %v207 = vld [vmem:[%s192 + $0x48] sm:$0xff]
      %v208 = vld [vmem:[%s192 + $0x50] sm:$0xff]
      %v209 = vld [vmem:[%s192 + $0x58] sm:$0xff]
      %v210 = vld [vmem:[%s192 + $0x60] sm:$0xff]
      %v211 = vld [vmem:[%s192 + $0x68] sm:$0xff]
      %v212 = vld [vmem:[%s192 + $0x70] sm:$0xff]
      %v213 = vld [vmem:[%s192 + $0x78] sm:$0xff]
      %v214 = vld [vmem:[%s192 + $0x80] sm:$0xff]
      %v215 = vld [vmem:[%s192 + $0x88] sm:$0xff]
      %v216 = vld [vmem:[%s192 + $0x90] sm:$0xff]
      %v217 = vld [vmem:[%s192 + $0x98] sm:$0xff]
      %v218 = vld [vmem:[%s192 + $0xa0] sm:$0xff]
      %v219 = vld [vmem:[%s192 + $0xa8] sm:$0xff]
      %v220 = vld [vmem:[%s192 + $0xb0] sm:$0xff]
      %v221 = vld [vmem:[%s192 + $0xb8] sm:$0xff]
      %v222 = vld [vmem:[%s192 + $0xc0] sm:$0xff]
      %v223 = vld [vmem:[%s192 + $0xc8] sm:$0xff]
      %v224 = vld [vmem:[%s192 + $0xd0] sm:$0xff]
      %v225 = vld [vmem:[%s192 + $0xd8] sm:$0xff]
      %v226 = vld [vmem:[%s192 + $0xe0] sm:$0xff]
      %v227 = vld [vmem:[%s192 + $0xe8] sm:$0xff]
      %v228 = vld [vmem:[%s192 + $0xf0] sm:$0xff]
      %v229 = vld [vmem:[%s192 + $0xf8] sm:$0xff]
      %v230 = vld [vmem:[%s192 + $0x100] sm:$0xff]
      %v231 = vld [vmem:[%s192 + $0x108] sm:$0xff]
      %v232 = vld [vmem:[%s192 + $0x110] sm:$0xff]
      %v233 = vld [vmem:[%s192 + $0x118] sm:$0xff]
      %v234 = vld [vmem:[%s192 + $0x120] sm:$0xff]
      %v235 = vld [vmem:[%s192 + $0x128] sm:$0xff]
      %v236 = vld [vmem:[%s192 + $0x130] sm:$0xff]
      %v237 = vld [vmem:[%s192 + $0x138] sm:$0xff]
      %v238 = vld [vmem:[%s192 + $0x140] sm:$0xff]
      %v239 = vld [vmem:[%s192 + $0x148] sm:$0xff]
      %v240 = vld [vmem:[%s192 + $0x150] sm:$0xff]
      %v241 = vld [vmem:[%s192 + $0x158] sm:$0xff]
      %v242 = vld [vmem:[%s192 + $0x160] sm:$0xff]
      %v243 = vld [vmem:[%s192 + $0x168] sm:$0xff]
      %v244 = vld [vmem:[%s192 + $0x170] sm:$0xff]
      %v245 = vld [vmem:[%s192 + $0x178] sm:$0xff]
      %v246 = vld [vmem:[%s192 + $0x180] sm:$0xff]
      %v247 = vld [vmem:[%s192 + $0x188] sm:$0xff]
      %v248 = vld [vmem:[%s192 + $0x190] sm:$0xff]
      %v249 = vld [vmem:[%s192 + $0x198] sm:$0xff]
      %v250 = vld [vmem:[%s192 + $0x1a0] sm:$0xff]
      %v251 = vld [vmem:[%s192 + $0x1a8] sm:$0xff]
      %v252 = vld [vmem:[%s192 + $0x1b0] sm:$0xff]
      %v253 = vld [vmem:[%s192 + $0x1b8] sm:$0xff]
      %v254 = vld [vmem:[%s192 + $0x1c0] sm:$0xff]
      %v255 = vld [vmem:[%s192 + $0x1c8] sm:$0xff]
      %v256 = vld [vmem:[%s192 + $0x1d0] sm:$0xff]
      %v257 = vld [vmem:[%s192 + $0x1d8] sm:$0xff]
      %v258 = vld [vmem:[%s192 + $0x1e0] sm:$0xff]
      %v259 = vld [vmem:[%s192 + $0x1e8] sm:$0xff]
      %v260 = vld [vmem:[%s192 + $0x1f0] sm:$0xff]
      %v261 = vld [vmem:[%s192 + $0x1f8] sm:$0xff]
      %v262 = vld [vmem:[%s192 + $0x200] sm:$0xff]
      %v263 = vld [vmem:[%s192 + $0x208] sm:$0xff]
      %v264 = vld [vmem:[%s192 + $0x210] sm:$0xff]
      %v265 = vld [vmem:[%s192 + $0x218] sm:$0xff]
      %v266 = vld [vmem:[%s192 + $0x220] sm:$0xff]
      %v267 = vld [vmem:[%s192 + $0x228] sm:$0xff]
      %v268 = vld [vmem:[%s192 + $0x230] sm:$0xff]
      %v269 = vld [vmem:[%s192 + $0x238] sm:$0xff]
      %v270 = vld [vmem:[%s1] sm:$0xf]
      %v271 = vld [vmem:[%s1 + $0x4] sm:$0xf]
      %v272 = vld [vmem:[%s1 + $0x8] sm:$0xf]
      %v273 = vld [vmem:[%s1 + $0xc] sm:$0xf]
      %v274 = vld [vmem:[%s1 + $0x10] sm:$0xf]
      %v275 = vld [vmem:[%s1 + $0x14] sm:$0xf]
      %v276 = vld [vmem:[%s1 + $0x18] sm:$0xf]
      %v277 = vld [vmem:[%s1 + $0x1c] sm:$0xf]
      %v278 = vld [vmem:[%s1 + $0x20] sm:$0xf]
      %v279 = vld [vmem:[%s1 + $0x24] sm:$0xf]
      %v280 = vld [vmem:[%s1 + $0x28] sm:$0xf]
      %v281 = vld [vmem:[%s1 + $0x2c] sm:$0xf]
      %v282 = vld [vmem:[%s1 + $0x30] sm:$0xf]
      %v283 = vld [vmem:[%s1 + $0x34] sm:$0xf]
      %v284 = vld [vmem:[%s1 + $0x38] sm:$0xf]
      %v285 = vld [vmem:[%s1 + $0x3c] sm:$0xf]
      %v286 = vld [vmem:[%s1 + $0x40] sm:$0xf]
      %v287 = vld [vmem:[%s1 + $0x44] sm:$0xf]
      %v288 = vld [vmem:[%s1 + $0x48] sm:$0xf]
      %v289 = vld [vmem:[%s1 + $0x4c] sm:$0xf]
      %v290 = vld [vmem:[%s1 + $0x50] sm:$0xf]
      %v291 = vld [vmem:[%s1 + $0x54] sm:$0xf]
      %v292 = vld [vmem:[%s1 + $0x58] sm:$0xf]
      %v293 = vld [vmem:[%s1 + $0x5c] sm:$0xf]
      %v294 = vld [vmem:[%s1 + $0x60] sm:$0xf]
      %v295 = vld [vmem:[%s1 + $0x64] sm:$0xf]
      %v296 = vld [vmem:[%s1 + $0x68] sm:$0xf]
      %v297 = vld [vmem:[%s1 + $0x6c] sm:$0xf]
      %v298 = vld [vmem:[%s1 + $0x70] sm:$0xf]
      %v299 = vld [vmem:[%s1 + $0x74] sm:$0xf]
      %v300 = vld [vmem:[%s1 + $0x78] sm:$0xf]
      %v301 = vld [vmem:[%s1 + $0x7c] sm:$0xf]
      %v302 = vld [vmem:[%s1 + $0x80] sm:$0xf]
      %v303 = vld [vmem:[%s1 + $0x84] sm:$0xf]
      %v304 = vld [vmem:[%s1 + $0x88] sm:$0xf]
      %v305 = vld [vmem:[%s1 + $0x8c] sm:$0xf]
      %v306 = vld [vmem:[%s1 + $0x90] sm:$0xf]
      %v307 = vld [vmem:[%s1 + $0x94] sm:$0xf]
      %v308 = vld [vmem:[%s1 + $0x98] sm:$0xf]
      %v309 = vld [vmem:[%s1 + $0x9c] sm:$0xf]
      %v310 = vld [vmem:[%s1 + $0xa0] sm:$0xf]
      %v311 = vld [vmem:[%s1 + $0xa4] sm:$0xf]
      %v312 = vld [vmem:[%s1 + $0xa8] sm:$0xf]
      %v313 = vld [vmem:[%s1 + $0xac] sm:$0xf]
      %v314 = vld [vmem:[%s1 + $0xb0] sm:$0xf]
      %v315 = vld [vmem:[%s1 + $0xb4] sm:$0xf]
      %v316 = vld [vmem:[%s1 + $0xb8] sm:$0xf]
      %v317 = vld [vmem:[%s1 + $0xbc] sm:$0xf]
      %v318 = vld [vmem:[%s1 + $0xc0] sm:$0xf]
      %v319 = vld [vmem:[%s1 + $0xc4] sm:$0xf]
      %v320 = vld [vmem:[%s1 + $0xc8] sm:$0xf]
      %v321 = vld [vmem:[%s1 + $0xcc] sm:$0xf]
      %v322 = vld [vmem:[%s1 + $0xd0] sm:$0xf]
      %v323 = vld [vmem:[%s1 + $0xd4] sm:$0xf]
      %v324 = vld [vmem:[%s1 + $0xd8] sm:$0xf]
      %v325 = vld [vmem:[%s1 + $0xdc] sm:$0xf]
      %v326 = vld [vmem:[%s1 + $0xe0] sm:$0xf]
      %v327 = vld [vmem:[%s1 + $0xe4] sm:$0xf]
      %v328 = vld [vmem:[%s1 + $0xe8] sm:$0xf]
      %v329 = vld [vmem:[%s1 + $0xec] sm:$0xf]
      %v330 = vld [vmem:[%s1 + $0xf0] sm:$0xf]
      %v331 = vld [vmem:[%s1 + $0xf4] sm:$0xf]
      %v332 = vld [vmem:[%s1 + $0xf8] sm:$0xf]
      %v333 = vld [vmem:[%s1 + $0xfc] sm:$0xf]
      %v334 = vld [vmem:[%s1 + $0x100] sm:$0xf]
      %v335 = vld [vmem:[%s1 + $0x104] sm:$0xf]
      %v336 = vld [vmem:[%s1 + $0x108] sm:$0xf]
      %v337 = vld [vmem:[%s1 + $0x10c] sm:$0xf]
      %v338 = vld [vmem:[%s1 + $0x110] sm:$0xf]
      %v339 = vld [vmem:[%s1 + $0x114] sm:$0xf]
      %v340 = vld [vmem:[%s1 + $0x118] sm:$0xf]
      %v341 = vld [vmem:[%s1 + $0x11c] sm:$0xf]
      %v342 = vld [vmem:[%s1 + $0x120] sm:$0xf]
      %v343 = vld [vmem:[%s1 + $0x124] sm:$0xf]
      %v344 = vld [vmem:[%s1 + $0x128] sm:$0xf]
      %v345 = vld [vmem:[%s1 + $0x12c] sm:$0xf]
      %v346 = vld [vmem:[%s1 + $0x130] sm:$0xf]
      %v347 = vld [vmem:[%s1 + $0x134] sm:$0xf]
      %v348 = vld [vmem:[%s1 + $0x138] sm:$0xf]
      %v349 = vld [vmem:[%s1 + $0x13c] sm:$0xf]
      %v350 = vld [vmem:[%s1 + $0x140] sm:$0xf]
      %v351 = vld [vmem:[%s1 + $0x144] sm:$0xf]
      %v352 = vld [vmem:[%s1 + $0x148] sm:$0xf]
      %v353 = vld [vmem:[%s1 + $0x14c] sm:$0xf]
      %v354 = vld [vmem:[%s1 + $0x150] sm:$0xf]
      %v355 = vld [vmem:[%s1 + $0x154] sm:$0xf]
      %v356 = vld [vmem:[%s1 + $0x158] sm:$0xf]
      %v357 = vld [vmem:[%s1 + $0x15c] sm:$0xf]
      %v358 = vld [vmem:[%s1 + $0x160] sm:$0xf]
      %v359 = vld [vmem:[%s1 + $0x164] sm:$0xf]
      %v360 = vld [vmem:[%s1 + $0x168] sm:$0xf]
      %v361 = vld [vmem:[%s1 + $0x16c] sm:$0xf]
      %v362 = vld [vmem:[%s1 + $0x170] sm:$0xf]
      %v363 = vld [vmem:[%s1 + $0x174] sm:$0xf]
      %v364 = vld [vmem:[%s1 + $0x178] sm:$0xf]
      %v365 = vld [vmem:[%s1 + $0x17c] sm:$0xf]
      %v366 = vld [vmem:[%s1 + $0x180] sm:$0xf]
      %v367 = vld [vmem:[%s1 + $0x184] sm:$0xf]
      %v368 = vld [vmem:[%s1 + $0x188] sm:$0xf]
      %v369 = vld [vmem:[%s1 + $0x18c] sm:$0xf]
      %v370 = vld [vmem:[%s1 + $0x190] sm:$0xf]
      %v371 = vld [vmem:[%s1 + $0x194] sm:$0xf]
      %v372 = vld [vmem:[%s1 + $0x198] sm:$0xf]
      %v373 = vld [vmem:[%s1 + $0x19c] sm:$0xf]
      %v374 = vld [vmem:[%s1 + $0x1a0] sm:$0xf]
      %v375 = vld [vmem:[%s1 + $0x1a4] sm:$0xf]
      %v376 = vld [vmem:[%s1 + $0x1a8] sm:$0xf]
      %v377 = vld [vmem:[%s1 + $0x1ac] sm:$0xf]
      %v378 = vld [vmem:[%s1 + $0x1b0] sm:$0xf]
      %v379 = vld [vmem:[%s1 + $0x1b4] sm:$0xf]
      %v380 = vld [vmem:[%s1 + $0x1b8] sm:$0xf]
      %v381 = vld [vmem:[%s1 + $0x1bc] sm:$0xf]
      %v382 = vld [vmem:[%s1 + $0x1c0] sm:$0xf]
      %v383 = vld [vmem:[%s1 + $0x1c4] sm:$0xf]
      %v384 = vld [vmem:[%s1 + $0x1c8] sm:$0xf]
      %v385 = vld [vmem:[%s1 + $0x1cc] sm:$0xf]
      %v386 = vld [vmem:[%s1 + $0x1d0] sm:$0xf]
      %v387 = vld [vmem:[%s1 + $0x1d4] sm:$0xf]
      %v388 = vld [vmem:[%s1 + $0x1d8] sm:$0xf]
      %v389 = vld [vmem:[%s1 + $0x1dc] sm:$0xf]
      %v390 = vld [vmem:[%s1 + $0x1e0] sm:$0xf]
      %v391 = vld [vmem:[%s1 + $0x1e4] sm:$0xf]
      %v392 = vld [vmem:[%s1 + $0x1e8] sm:$0xf]
      %v393 = vld [vmem:[%s1 + $0x1ec] sm:$0xf]
      %v394 = vld [vmem:[%s1 + $0x1f0] sm:$0xf]
      %v395 = vld [vmem:[%s1 + $0x1f4] sm:$0xf]
      %v396 = vld [vmem:[%s1 + $0x1f8] sm:$0xf]
      %v397 = vld [vmem:[%s1 + $0x1fc] sm:$0xf]
      %v398 = vld [vmem:[%s1 + $0x200] sm:$0xf]
      %v399 = vld [vmem:[%s1 + $0x204] sm:$0xf]
      %v400 = vld [vmem:[%s1 + $0x208] sm:$0xf]
      %v401 = vld [vmem:[%s1 + $0x20c] sm:$0xf]
      %v402 = vld [vmem:[%s1 + $0x210] sm:$0xf]
      %v403 = vld [vmem:[%s1 + $0x214] sm:$0xf]
      %v404 = vld [vmem:[%s1 + $0x218] sm:$0xf]
      %v405 = vld [vmem:[%s1 + $0x21c] sm:$0xf]
      %v406 = vld [vmem:[%s1 + $0x220] sm:$0xf]
      %v407 = vld [vmem:[%s1 + $0x224] sm:$0xf]
      %v408 = vld [vmem:[%s1 + $0x228] sm:$0xf]
      %v409 = vld [vmem:[%s1 + $0x22c] sm:$0xf]
      %v410 = vld [vmem:[%s1 + $0x230] sm:$0xf]
      %v411 = vld [vmem:[%s1 + $0x234] sm:$0xf]
      %v412 = vld [vmem:[%s1 + $0x238] sm:$0xf]
      %v413 = vld [vmem:[%s1 + $0x23c] sm:$0xf]
      %v414 = vld [vmem:[%s1 + $0x240] sm:$0xf]
      %v415 = vld [vmem:[%s1 + $0x244] sm:$0xf]
      %v416 = vld [vmem:[%s1 + $0x248] sm:$0xf]
      %v417 = vld [vmem:[%s1 + $0x24c] sm:$0xf]
      %v418 = vld [vmem:[%s1 + $0x250] sm:$0xf]
      %v419 = vld [vmem:[%s1 + $0x254] sm:$0xf]
      %v420 = vld [vmem:[%s1 + $0x258] sm:$0xf]
      %v421 = vld [vmem:[%s1 + $0x25c] sm:$0xf]
      %v422 = vld [vmem:[%s1 + $0x260] sm:$0xf]
      %v423 = vld [vmem:[%s1 + $0x264] sm:$0xf]
      %v424 = vld [vmem:[%s1 + $0x268] sm:$0xf]
      %v425 = vld [vmem:[%s1 + $0x26c] sm:$0xf]
      %v426 = vld [vmem:[%s1 + $0x270] sm:$0xf]
      %v427 = vld [vmem:[%s1 + $0x274] sm:$0xf]
      %v428 = vld [vmem:[%s1 + $0x278] sm:$0xf]
      %v429 = vld [vmem:[%s1 + $0x27c] sm:$0xf]
      %v430 = vld [vmem:[%s1 + $0x280] sm:$0xf]
      %v431 = vld [vmem:[%s1 + $0x284] sm:$0xf]
      %v432 = vld [vmem:[%s1 + $0x288] sm:$0xf]
      %v433 = vld [vmem:[%s1 + $0x28c] sm:$0xf]
      %v434 = vld [vmem:[%s1 + $0x290] sm:$0xf]
      %v435 = vld [vmem:[%s1 + $0x294] sm:$0xf]
      %v436 = vld [vmem:[%s1 + $0x298] sm:$0xf]
      %v437 = vld [vmem:[%s1 + $0x29c] sm:$0xf]
      %v438 = vld [vmem:[%s1 + $0x2a0] sm:$0xf]
      %v439 = vld [vmem:[%s1 + $0x2a4] sm:$0xf]
      %v440 = vld [vmem:[%s1 + $0x2a8] sm:$0xf]
      %v441 = vld [vmem:[%s1 + $0x2ac] sm:$0xf]
      %v442 = vld [vmem:[%s1 + $0x2b0] sm:$0xf]
      %v443 = vld [vmem:[%s1 + $0x2b4] sm:$0xf]
      %v444 = vld [vmem:[%s1 + $0x2b8] sm:$0xf]
      %v445 = vld [vmem:[%s1 + $0x2bc] sm:$0xf]
      %v446 = vld [vmem:[%s1 + $0x2c0] sm:$0xf]
      %v447 = vld [vmem:[%s1 + $0x2c4] sm:$0xf]
      %v448 = vld [vmem:[%s1 + $0x2c8] sm:$0xf]
      %v449 = vld [vmem:[%s1 + $0x2cc] sm:$0xf]
      %v450 = vld [vmem:[%s1 + $0x2d0] sm:$0xf]
      %v451 = vld [vmem:[%s1 + $0x2d4] sm:$0xf]
      %v452 = vld [vmem:[%s1 + $0x2d8] sm:$0xf]
      %v453 = vld [vmem:[%s1 + $0x2dc] sm:$0xf]
      %v454 = vld [vmem:[%s1 + $0x2e0] sm:$0xf]
      %v455 = vld [vmem:[%s1 + $0x2e4] sm:$0xf]
      %v456 = vld [vmem:[%s1 + $0x2e8] sm:$0xf]
      %v457 = vld [vmem:[%s1 + $0x2ec] sm:$0xf]
      %v458 = vld [vmem:[%s1 + $0x2f0] sm:$0xf]
      %v459 = vld [vmem:[%s1 + $0x2f4] sm:$0xf]
      %v460 = vld [vmem:[%s1 + $0x2f8] sm:$0xf]
      %v461 = vld [vmem:[%s1 + $0x2fc] sm:$0xf]
      %v462 = vld [vmem:[%s1 + $0x300] sm:$0xf]
      %v463 = vld [vmem:[%s1 + $0x304] sm:$0xf]
      %v464 = vld [vmem:[%s1 + $0x308] sm:$0xf]
      %v465 = vld [vmem:[%s1 + $0x30c] sm:$0xf]
      %v466 = vld [vmem:[%s1 + $0x310] sm:$0xf]
      %v467 = vld [vmem:[%s1 + $0x314] sm:$0xf]
      %v468 = vld [vmem:[%s1 + $0x318] sm:$0xf]
      %v469 = vld [vmem:[%s1 + $0x31c] sm:$0xf]
      %v470 = vld [vmem:[%s1 + $0x320] sm:$0xf]
      %v471 = vld [vmem:[%s1 + $0x324] sm:$0xf]
      %v472 = vld [vmem:[%s1 + $0x328] sm:$0xf]
      %v473 = vld [vmem:[%s1 + $0x32c] sm:$0xf]
      %v474 = vld [vmem:[%s1 + $0x330] sm:$0xf]
      %v475 = vld [vmem:[%s1 + $0x334] sm:$0xf]
      %v476 = vld [vmem:[%s1 + $0x338] sm:$0xf]
      %v477 = vld [vmem:[%s1 + $0x33c] sm:$0xf]
      %v478 = vld [vmem:[%s1 + $0x340] sm:$0xf]
      %v479 = vld [vmem:[%s1 + $0x344] sm:$0xf]
      %v480 = vld [vmem:[%s1 + $0x348] sm:$0xf]
      %v481 = vld [vmem:[%s1 + $0x34c] sm:$0xf]
      %v482 = vld [vmem:[%s1 + $0x350] sm:$0xf]
      %v483 = vld [vmem:[%s1 + $0x354] sm:$0xf]
      %v484 = vld [vmem:[%s1 + $0x358] sm:$0xf]
      %v485 = vld [vmem:[%s1 + $0x35c] sm:$0xf]
      %v486 = vld [vmem:[%s1 + $0x360] sm:$0xf]
      %v487 = vld [vmem:[%s1 + $0x364] sm:$0xf]
      %v488 = vld [vmem:[%s1 + $0x368] sm:$0xf]
      %v489 = vld [vmem:[%s1 + $0x36c] sm:$0xf]
      %v490 = vld [vmem:[%s1 + $0x370] sm:$0xf]
      %v491 = vld [vmem:[%s1 + $0x374] sm:$0xf]
      %v492 = vld [vmem:[%s1 + $0x378] sm:$0xf]
      %v493 = vld [vmem:[%s1 + $0x37c] sm:$0xf]
      %v494 = vld [vmem:[%s1 + $0x380] sm:$0xf]
      %v495 = vld [vmem:[%s1 + $0x384] sm:$0xf]
      %v496 = vld [vmem:[%s1 + $0x388] sm:$0xf]
      %v497 = vld [vmem:[%s1 + $0x38c] sm:$0xf]
      %v498 = vld [vmem:[%s1 + $0x390] sm:$0xf]
      %v499 = vld [vmem:[%s1 + $0x394] sm:$0xf]
      %v500 = vld [vmem:[%s1 + $0x398] sm:$0xf]
      %v501 = vld [vmem:[%s1 + $0x39c] sm:$0xf]
      %v502 = vld [vmem:[%s1 + $0x3a0] sm:$0xf]
      %v503 = vld [vmem:[%s1 + $0x3a4] sm:$0xf]
      %v504 = vld [vmem:[%s1 + $0x3a8] sm:$0xf]
      %v505 = vld [vmem:[%s1 + $0x3ac] sm:$0xf]
      %v506 = vld [vmem:[%s1 + $0x3b0] sm:$0xf]
      %v507 = vld [vmem:[%s1 + $0x3b4] sm:$0xf]
      %v508 = vld [vmem:[%s1 + $0x3b8] sm:$0xf]
      %v509 = vld [vmem:[%s1 + $0x3bc] sm:$0xf]
      %v510 = vld [vmem:[%s1 + $0x3c0] sm:$0xf]
      %v511 = vld [vmem:[%s1 + $0x3c4] sm:$0xf]
      %v512 = vld [vmem:[%s1 + $0x3c8] sm:$0xf]
      %v513 = vld [vmem:[%s1 + $0x3cc] sm:$0xf]
      %v514 = vld [vmem:[%s1 + $0x3d0] sm:$0xf]
      %v515 = vld [vmem:[%s1 + $0x3d4] sm:$0xf]
      %v516 = vld [vmem:[%s1 + $0x3d8] sm:$0xf]
      %v517 = vld [vmem:[%s1 + $0x3dc] sm:$0xf]
      %v518 = vld [vmem:[%s1 + $0x3e0] sm:$0xf]
      %v519 = vld [vmem:[%s1 + $0x3e4] sm:$0xf]
      %v520 = vld [vmem:[%s1 + $0x3e8] sm:$0xf]
      %v521 = vld [vmem:[%s1 + $0x3ec] sm:$0xf]
      %v522 = vld [vmem:[%s1 + $0x3f0] sm:$0xf]
      %v523 = vld [vmem:[%s1 + $0x3f4] sm:$0xf]
      %v524 = vld [vmem:[%s1 + $0x3f8] sm:$0xf]
      %v525 = vld [vmem:[%s1 + $0x3fc] sm:$0xf]
      %v526 = vld [vmem:[%s1 + $0x400] sm:$0xf]
      %v527 = vld [vmem:[%s1 + $0x404] sm:$0xf]
      %v528 = vld [vmem:[%s1 + $0x408] sm:$0xf]
      %v529 = vld [vmem:[%s1 + $0x40c] sm:$0xf]
      %v530 = vld [vmem:[%s1 + $0x410] sm:$0xf]
      %v531 = vld [vmem:[%s1 + $0x414] sm:$0xf]
      %v532 = vld [vmem:[%s1 + $0x418] sm:$0xf]
      %v533 = vld [vmem:[%s1 + $0x41c] sm:$0xf]
      %v534 = vld [vmem:[%s1 + $0x420] sm:$0xf]
      %v535 = vld [vmem:[%s1 + $0x424] sm:$0xf]
      %v536 = vld [vmem:[%s1 + $0x428] sm:$0xf]
      %v537 = vld [vmem:[%s1 + $0x42c] sm:$0xf]
      %v538 = vld [vmem:[%s1 + $0x430] sm:$0xf]
      %v539 = vld [vmem:[%s1 + $0x434] sm:$0xf]
      %v540 = vld [vmem:[%s1 + $0x438] sm:$0xf]
      %v541 = vld [vmem:[%s1 + $0x43c] sm:$0xf]
      %v542 = vld [vmem:[%s1 + $0x440] sm:$0xf]
      %v543 = vld [vmem:[%s1 + $0x444] sm:$0xf]
      %v544 = vld [vmem:[%s1 + $0x448] sm:$0xf]
      %v545 = vld [vmem:[%s1 + $0x44c] sm:$0xf]
      %v546 = vld [vmem:[%s1 + $0x450] sm:$0xf]
      %v547 = vld [vmem:[%s1 + $0x454] sm:$0xf]
      %v548 = vld [vmem:[%s1 + $0x458] sm:$0xf]
      %v549 = vld [vmem:[%s1 + $0x45c] sm:$0xf]
      %v550 = vld [vmem:[%s1 + $0x460] sm:$0xf]
      %v551 = vld [vmem:[%s1 + $0x464] sm:$0xf]
      %v552 = vld [vmem:[%s1 + $0x468] sm:$0xf]
      %v553 = vld [vmem:[%s1 + $0x46c] sm:$0xf]
      %v554 = vld [vmem:[%s1 + $0x470] sm:$0xf]
      %v555 = vld [vmem:[%s1 + $0x474] sm:$0xf]
      %v556 = vld [vmem:[%s1 + $0x478] sm:$0xf]
      %v557 = vld [vmem:[%s1 + $0x47c] sm:$0xf]
      %v630 = vunpack.c.l.b16 %v198
      %v631 = vunpack.c.h.b16 %v198
      %v632 = vunpack.c.l.b16 %v199
      %v633 = vunpack.c.h.b16 %v199
      %v634 = vunpack.c.l.b16 %v200
      %v635 = vunpack.c.h.b16 %v200
      %v636 = vunpack.c.l.b16 %v201
      %v637 = vunpack.c.h.b16 %v201
      %v638 = vunpack.c.l.b16 %v202
      %v639 = vunpack.c.h.b16 %v202
      %v640 = vunpack.c.l.b16 %v203
      %v641 = vunpack.c.h.b16 %v203
      %v642 = vunpack.c.l.b16 %v204
      %v643 = vunpack.c.h.b16 %v204
      %v644 = vunpack.c.l.b16 %v205
      %v645 = vunpack.c.h.b16 %v205
      %v646 = vunpack.c.l.b16 %v206
      %v647 = vunpack.c.h.b16 %v206
      %v648 = vunpack.c.l.b16 %v207
      %v649 = vunpack.c.h.b16 %v207
      %v650 = vunpack.c.l.b16 %v208
      %v651 = vunpack.c.h.b16 %v208
      %v652 = vunpack.c.l.b16 %v209
      %v653 = vunpack.c.h.b16 %v209
      %v654 = vunpack.c.l.b16 %v210
      %v655 = vunpack.c.h.b16 %v210
      %v656 = vunpack.c.l.b16 %v211
      %v657 = vunpack.c.h.b16 %v211
      %v658 = vunpack.c.l.b16 %v212
      %v659 = vunpack.c.h.b16 %v212
      %v660 = vunpack.c.l.b16 %v213
      %v661 = vunpack.c.h.b16 %v213
      %v662 = vunpack.c.l.b16 %v214
      %v663 = vunpack.c.h.b16 %v214
      %v664 = vunpack.c.l.b16 %v215
      %v665 = vunpack.c.h.b16 %v215
      %v666 = vunpack.c.l.b16 %v216
      %v667 = vunpack.c.h.b16 %v216
      %v668 = vunpack.c.l.b16 %v217
      %v669 = vunpack.c.h.b16 %v217
      %v670 = vunpack.c.l.b16 %v218
      %v671 = vunpack.c.h.b16 %v218
      %v672 = vunpack.c.l.b16 %v219
      %v673 = vunpack.c.h.b16 %v219
      %v674 = vunpack.c.l.b16 %v220
      %v675 = vunpack.c.h.b16 %v220
      %v676 = vunpack.c.l.b16 %v221
      %v677 = vunpack.c.h.b16 %v221
      %v678 = vunpack.c.l.b16 %v222
      %v679 = vunpack.c.h.b16 %v222
      %v680 = vunpack.c.l.b16 %v223
      %v681 = vunpack.c.h.b16 %v223
      %v682 = vunpack.c.l.b16 %v224
      %v683 = vunpack.c.h.b16 %v224
      %v684 = vunpack.c.l.b16 %v225
      %v685 = vunpack.c.h.b16 %v225
      %v686 = vunpack.c.l.b16 %v226
      %v687 = vunpack.c.h.b16 %v226
      %v688 = vunpack.c.l.b16 %v227
      %v689 = vunpack.c.h.b16 %v227
      %v690 = vunpack.c.l.b16 %v228
      %v691 = vunpack.c.h.b16 %v228
      %v692 = vunpack.c.l.b16 %v229
      %v693 = vunpack.c.h.b16 %v229
      %v694 = vunpack.c.l.b16 %v230
      %v695 = vunpack.c.h.b16 %v230
      %v696 = vunpack.c.l.b16 %v231
      %v697 = vunpack.c.h.b16 %v231
      %v698 = vunpack.c.l.b16 %v232
      %v699 = vunpack.c.h.b16 %v232
      %v700 = vunpack.c.l.b16 %v233
      %v701 = vunpack.c.h.b16 %v233
      %v702 = vunpack.c.l.b16 %v234
      %v703 = vunpack.c.h.b16 %v234
      %v704 = vunpack.c.l.b16 %v235
      %v705 = vunpack.c.h.b16 %v235
      %v706 = vunpack.c.l.b16 %v236
      %v707 = vunpack.c.h.b16 %v236
      %v708 = vunpack.c.l.b16 %v237
      %v709 = vunpack.c.h.b16 %v237
      %v710 = vunpack.c.l.b16 %v238
      %v711 = vunpack.c.h.b16 %v238
      %v712 = vunpack.c.l.b16 %v239
      %v713 = vunpack.c.h.b16 %v239
      %v714 = vunpack.c.l.b16 %v240
      %v715 = vunpack.c.h.b16 %v240
      %v716 = vunpack.c.l.b16 %v241
      %v717 = vunpack.c.h.b16 %v241
      %v718 = vunpack.c.l.b16 %v242
      %v719 = vunpack.c.h.b16 %v242
      %v720 = vunpack.c.l.b16 %v243
      %v721 = vunpack.c.h.b16 %v243
      %v722 = vunpack.c.l.b16 %v244
      %v723 = vunpack.c.h.b16 %v244
      %v724 = vunpack.c.l.b16 %v245
      %v725 = vunpack.c.h.b16 %v245
      %v726 = vunpack.c.l.b16 %v246
      %v727 = vunpack.c.h.b16 %v246
      %v728 = vunpack.c.l.b16 %v247
      %v729 = vunpack.c.h.b16 %v247
      %v730 = vunpack.c.l.b16 %v248
      %v731 = vunpack.c.h.b16 %v248
      %v732 = vunpack.c.l.b16 %v249
      %v733 = vunpack.c.h.b16 %v249
      %v734 = vunpack.c.l.b16 %v250
      %v735 = vunpack.c.h.b16 %v250
      %v736 = vunpack.c.l.b16 %v251
      %v737 = vunpack.c.h.b16 %v251
      %v738 = vunpack.c.l.b16 %v252
      %v739 = vunpack.c.h.b16 %v252
      %v740 = vunpack.c.l.b16 %v253
      %v741 = vunpack.c.h.b16 %v253
      %v742 = vunpack.c.l.b16 %v254
      %v743 = vunpack.c.h.b16 %v254
      %v744 = vunpack.c.l.b16 %v255
      %v745 = vunpack.c.h.b16 %v255
      %v746 = vunpack.c.l.b16 %v256
      %v747 = vunpack.c.h.b16 %v256
      %v748 = vunpack.c.l.b16 %v257
      %v749 = vunpack.c.h.b16 %v257
      %v750 = vunpack.c.l.b16 %v258
      %v751 = vunpack.c.h.b16 %v258
      %v752 = vunpack.c.l.b16 %v259
      %v753 = vunpack.c.h.b16 %v259
      %v754 = vunpack.c.l.b16 %v260
      %v755 = vunpack.c.h.b16 %v260
      %v756 = vunpack.c.l.b16 %v261
      %v757 = vunpack.c.h.b16 %v261
      %v758 = vunpack.c.l.b16 %v262
      %v759 = vunpack.c.h.b16 %v262
      %v760 = vunpack.c.l.b16 %v263
      %v761 = vunpack.c.h.b16 %v263
      %v762 = vunpack.c.l.b16 %v264
      %v763 = vunpack.c.h.b16 %v264
      %v764 = vunpack.c.l.b16 %v265
      %v765 = vunpack.c.h.b16 %v265
      %v766 = vunpack.c.l.b16 %v266
      %v767 = vunpack.c.h.b16 %v266
      %v768 = vunpack.c.l.b16 %v267
      %v769 = vunpack.c.h.b16 %v267
      %v770 = vunpack.c.l.b16 %v268
      %v771 = vunpack.c.h.b16 %v268
      %v772 = vunpack.c.l.b16 %v269
      %v773 = vunpack.c.h.b16 %v269
      %v774 = vpack.c.b16 %v648, %v630
      %v775 = vpack.c.b16 %v649, %v631
      %v776 = vpack.c.b16 %v650, %v632
      %v777 = vpack.c.b16 %v651, %v633
      %v778 = vpack.c.b16 %v652, %v634
      %v779 = vpack.c.b16 %v653, %v635
      %v780 = vpack.c.b16 %v654, %v636
      %v781 = vpack.c.b16 %v655, %v637
      %v782 = vpack.c.b16 %v656, %v638
      %v783 = vpack.c.b16 %v657, %v639
      %v784 = vpack.c.b16 %v658, %v640
      %v785 = vpack.c.b16 %v659, %v641
      %v786 = vpack.c.b16 %v660, %v642
      %v787 = vpack.c.b16 %v661, %v643
      %v788 = vpack.c.b16 %v662, %v644
      %v789 = vpack.c.b16 %v663, %v645
      %v790 = vpack.c.b16 %v664, %v646
      %v791 = vpack.c.b16 %v665, %v647
      %v792 = vpack.c.b16 %v684, %v666
      %v793 = vpack.c.b16 %v685, %v667
      %v794 = vpack.c.b16 %v686, %v668
      %v795 = vpack.c.b16 %v687, %v669
      %v796 = vpack.c.b16 %v688, %v670
      %v797 = vpack.c.b16 %v689, %v671
      %v798 = vpack.c.b16 %v690, %v672
      %v799 = vpack.c.b16 %v691, %v673
      %v800 = vpack.c.b16 %v692, %v674
      %v801 = vpack.c.b16 %v693, %v675
      %v802 = vpack.c.b16 %v694, %v676
      %v803 = vpack.c.b16 %v695, %v677
      %v804 = vpack.c.b16 %v696, %v678
      %v805 = vpack.c.b16 %v697, %v679
      %v806 = vpack.c.b16 %v698, %v680
      %v807 = vpack.c.b16 %v699, %v681
      %v808 = vpack.c.b16 %v700, %v682
      %v809 = vpack.c.b16 %v701, %v683
      %v810 = vpack.c.b16 %v720, %v702
      %v811 = vpack.c.b16 %v721, %v703
      %v812 = vpack.c.b16 %v722, %v704
      %v813 = vpack.c.b16 %v723, %v705
      %v814 = vpack.c.b16 %v724, %v706
      %v815 = vpack.c.b16 %v725, %v707
      %v816 = vpack.c.b16 %v726, %v708
      %v817 = vpack.c.b16 %v727, %v709
      %v818 = vpack.c.b16 %v728, %v710
      %v819 = vpack.c.b16 %v729, %v711
      %v820 = vpack.c.b16 %v730, %v712
      %v821 = vpack.c.b16 %v731, %v713
      %v822 = vpack.c.b16 %v732, %v714
      %v823 = vpack.c.b16 %v733, %v715
      %v824 = vpack.c.b16 %v734, %v716
      %v825 = vpack.c.b16 %v735, %v717
      %v826 = vpack.c.b16 %v736, %v718
      %v827 = vpack.c.b16 %v737, %v719
      %v828 = vpack.c.b16 %v756, %v738
      %v829 = vpack.c.b16 %v757, %v739
      %v830 = vpack.c.b16 %v758, %v740
      %v831 = vpack.c.b16 %v759, %v741
      %v832 = vpack.c.b16 %v760, %v742
      %v833 = vpack.c.b16 %v761, %v743
      %v834 = vpack.c.b16 %v762, %v744
      %v835 = vpack.c.b16 %v763, %v745
      %v836 = vpack.c.b16 %v764, %v746
      %v837 = vpack.c.b16 %v765, %v747
      %v838 = vpack.c.b16 %v766, %v748
      %v839 = vpack.c.b16 %v767, %v749
      %v840 = vpack.c.b16 %v768, %v750
      %v841 = vpack.c.b16 %v769, %v751
      %v842 = vpack.c.b16 %v770, %v752
      %v843 = vpack.c.b16 %v771, %v753
      %v844 = vpack.c.b16 %v772, %v754
      %v845 = vpack.c.b16 %v773, %v755
      %v1206 = vunpack.c.l.b16 %v270
      %v1207 = vunpack.c.l.b16 %v271
      %v1208 = vunpack.c.l.b16 %v272
      %v1209 = vunpack.c.l.b16 %v273
      %v1210 = vunpack.c.l.b16 %v274
      %v1211 = vunpack.c.l.b16 %v275
      %v1212 = vunpack.c.l.b16 %v276
      %v1213 = vunpack.c.l.b16 %v277
      %v1214 = vunpack.c.l.b16 %v278
      %v1215 = vunpack.c.l.b16 %v279
      %v1216 = vunpack.c.l.b16 %v280
      %v1217 = vunpack.c.l.b16 %v281
      %v1218 = vunpack.c.l.b16 %v282
      %v1219 = vunpack.c.l.b16 %v283
      %v1220 = vunpack.c.l.b16 %v284
      %v1221 = vunpack.c.l.b16 %v285
      %v1222 = vunpack.c.l.b16 %v286
      %v1223 = vunpack.c.l.b16 %v287
      %v1224 = vunpack.c.l.b16 %v288
      %v1225 = vunpack.c.l.b16 %v289
      %v1226 = vunpack.c.l.b16 %v290
      %v1227 = vunpack.c.l.b16 %v291
      %v1228 = vunpack.c.l.b16 %v292
      %v1229 = vunpack.c.l.b16 %v293
      %v1230 = vunpack.c.l.b16 %v294
      %v1231 = vunpack.c.l.b16 %v295
      %v1232 = vunpack.c.l.b16 %v296
      %v1233 = vunpack.c.l.b16 %v297
      %v1234 = vunpack.c.l.b16 %v298
      %v1235 = vunpack.c.l.b16 %v299
      %v1236 = vunpack.c.l.b16 %v300
      %v1237 = vunpack.c.l.b16 %v301
      %v1238 = vunpack.c.l.b16 %v302
      %v1239 = vunpack.c.l.b16 %v303
      %v1240 = vunpack.c.l.b16 %v304
      %v1241 = vunpack.c.l.b16 %v305
      %v1242 = vunpack.c.l.b16 %v306
      %v1243 = vunpack.c.l.b16 %v307
      %v1244 = vunpack.c.l.b16 %v308
      %v1245 = vunpack.c.l.b16 %v309
      %v1246 = vunpack.c.l.b16 %v310
      %v1247 = vunpack.c.l.b16 %v311
      %v1248 = vunpack.c.l.b16 %v312
      %v1249 = vunpack.c.l.b16 %v313
      %v1250 = vunpack.c.l.b16 %v314
      %v1251 = vunpack.c.l.b16 %v315
      %v1252 = vunpack.c.l.b16 %v316
      %v1253 = vunpack.c.l.b16 %v317
      %v1254 = vunpack.c.l.b16 %v318
      %v1255 = vunpack.c.l.b16 %v319
      %v1256 = vunpack.c.l.b16 %v320
      %v1257 = vunpack.c.l.b16 %v321
      %v1258 = vunpack.c.l.b16 %v322
      %v1259 = vunpack.c.l.b16 %v323
      %v1260 = vunpack.c.l.b16 %v324
      %v1261 = vunpack.c.l.b16 %v325
      %v1262 = vunpack.c.l.b16 %v326
      %v1263 = vunpack.c.l.b16 %v327
      %v1264 = vunpack.c.l.b16 %v328
      %v1265 = vunpack.c.l.b16 %v329
      %v1266 = vunpack.c.l.b16 %v330
      %v1267 = vunpack.c.l.b16 %v331
      %v1268 = vunpack.c.l.b16 %v332
      %v1269 = vunpack.c.l.b16 %v333
      %v1270 = vunpack.c.l.b16 %v334
      %v1271 = vunpack.c.l.b16 %v335
      %v1272 = vunpack.c.l.b16 %v336
      %v1273 = vunpack.c.l.b16 %v337
      %v1274 = vunpack.c.l.b16 %v338
      %v1275 = vunpack.c.l.b16 %v339
      %v1276 = vunpack.c.l.b16 %v340
      %v1277 = vunpack.c.l.b16 %v341
      %v1278 = vunpack.c.l.b16 %v342
      %v1279 = vunpack.c.l.b16 %v343
      %v1280 = vunpack.c.l.b16 %v344
      %v1281 = vunpack.c.l.b16 %v345
      %v1282 = vunpack.c.l.b16 %v346
      %v1283 = vunpack.c.l.b16 %v347
      %v1284 = vunpack.c.l.b16 %v348
      %v1285 = vunpack.c.l.b16 %v349
      %v1286 = vunpack.c.l.b16 %v350
      %v1287 = vunpack.c.l.b16 %v351
      %v1288 = vunpack.c.l.b16 %v352
      %v1289 = vunpack.c.l.b16 %v353
      %v1290 = vunpack.c.l.b16 %v354
      %v1291 = vunpack.c.l.b16 %v355
      %v1292 = vunpack.c.l.b16 %v356
      %v1293 = vunpack.c.l.b16 %v357
      %v1294 = vunpack.c.l.b16 %v358
      %v1295 = vunpack.c.l.b16 %v359
      %v1296 = vunpack.c.l.b16 %v360
      %v1297 = vunpack.c.l.b16 %v361
      %v1298 = vunpack.c.l.b16 %v362
      %v1299 = vunpack.c.l.b16 %v363
      %v1300 = vunpack.c.l.b16 %v364
      %v1301 = vunpack.c.l.b16 %v365
      %v1302 = vunpack.c.l.b16 %v366
      %v1303 = vunpack.c.l.b16 %v367
      %v1304 = vunpack.c.l.b16 %v368
      %v1305 = vunpack.c.l.b16 %v369
      %v1306 = vunpack.c.l.b16 %v370
      %v1307 = vunpack.c.l.b16 %v371
      %v1308 = vunpack.c.l.b16 %v372
      %v1309 = vunpack.c.l.b16 %v373
      %v1310 = vunpack.c.l.b16 %v374
      %v1311 = vunpack.c.l.b16 %v375
      %v1312 = vunpack.c.l.b16 %v376
      %v1313 = vunpack.c.l.b16 %v377
      %v1314 = vunpack.c.l.b16 %v378
      %v1315 = vunpack.c.l.b16 %v379
      %v1316 = vunpack.c.l.b16 %v380
      %v1317 = vunpack.c.l.b16 %v381
      %v1318 = vunpack.c.l.b16 %v382
      %v1319 = vunpack.c.l.b16 %v383
      %v1320 = vunpack.c.l.b16 %v384
      %v1321 = vunpack.c.l.b16 %v385
      %v1322 = vunpack.c.l.b16 %v386
      %v1323 = vunpack.c.l.b16 %v387
      %v1324 = vunpack.c.l.b16 %v388
      %v1325 = vunpack.c.l.b16 %v389
      %v1326 = vunpack.c.l.b16 %v390
      %v1327 = vunpack.c.l.b16 %v391
      %v1328 = vunpack.c.l.b16 %v392
      %v1329 = vunpack.c.l.b16 %v393
      %v1330 = vunpack.c.l.b16 %v394
      %v1331 = vunpack.c.l.b16 %v395
      %v1332 = vunpack.c.l.b16 %v396
      %v1333 = vunpack.c.l.b16 %v397
      %v1334 = vunpack.c.l.b16 %v398
      %v1335 = vunpack.c.l.b16 %v399
      %v1336 = vunpack.c.l.b16 %v400
      %v1337 = vunpack.c.l.b16 %v401
      %v1338 = vunpack.c.l.b16 %v402
      %v1339 = vunpack.c.l.b16 %v403
      %v1340 = vunpack.c.l.b16 %v404
      %v1341 = vunpack.c.l.b16 %v405
      %v1342 = vunpack.c.l.b16 %v406
      %v1343 = vunpack.c.l.b16 %v407
      %v1344 = vunpack.c.l.b16 %v408
      %v1345 = vunpack.c.l.b16 %v409
      %v1346 = vunpack.c.l.b16 %v410
      %v1347 = vunpack.c.l.b16 %v411
      %v1348 = vunpack.c.l.b16 %v412
      %v1349 = vunpack.c.l.b16 %v413
      %v1350 = vunpack.c.l.b16 %v414
      %v1351 = vunpack.c.l.b16 %v415
      %v1352 = vunpack.c.l.b16 %v416
      %v1353 = vunpack.c.l.b16 %v417
      %v1354 = vunpack.c.l.b16 %v418
      %v1355 = vunpack.c.l.b16 %v419
      %v1356 = vunpack.c.l.b16 %v420
      %v1357 = vunpack.c.l.b16 %v421
      %v1358 = vunpack.c.l.b16 %v422
      %v1359 = vunpack.c.l.b16 %v423
      %v1360 = vunpack.c.l.b16 %v424
      %v1361 = vunpack.c.l.b16 %v425
      %v1362 = vunpack.c.l.b16 %v426
      %v1363 = vunpack.c.l.b16 %v427
      %v1364 = vunpack.c.l.b16 %v428
      %v1365 = vunpack.c.l.b16 %v429
      %v1366 = vunpack.c.l.b16 %v430
      %v1367 = vunpack.c.l.b16 %v431
      %v1368 = vunpack.c.l.b16 %v432
      %v1369 = vunpack.c.l.b16 %v433
      %v1370 = vunpack.c.l.b16 %v434
      %v1371 = vunpack.c.l.b16 %v435
      %v1372 = vunpack.c.l.b16 %v436
      %v1373 = vunpack.c.l.b16 %v437
      %v1374 = vunpack.c.l.b16 %v438
      %v1375 = vunpack.c.l.b16 %v439
      %v1376 = vunpack.c.l.b16 %v440
      %v1377 = vunpack.c.l.b16 %v441
      %v1378 = vunpack.c.l.b16 %v442
      %v1379 = vunpack.c.l.b16 %v443
      %v1380 = vunpack.c.l.b16 %v444
      %v1381 = vunpack.c.l.b16 %v445
      %v1382 = vunpack.c.l.b16 %v446
      %v1383 = vunpack.c.l.b16 %v447
      %v1384 = vunpack.c.l.b16 %v448
      %v1385 = vunpack.c.l.b16 %v449
      %v1386 = vunpack.c.l.b16 %v450
      %v1387 = vunpack.c.l.b16 %v451
      %v1388 = vunpack.c.l.b16 %v452
      %v1389 = vunpack.c.l.b16 %v453
      %v1390 = vunpack.c.l.b16 %v454
      %v1391 = vunpack.c.l.b16 %v455
      %v1392 = vunpack.c.l.b16 %v456
      %v1393 = vunpack.c.l.b16 %v457
      %v1394 = vunpack.c.l.b16 %v458
      %v1395 = vunpack.c.l.b16 %v459
      %v1396 = vunpack.c.l.b16 %v460
      %v1397 = vunpack.c.l.b16 %v461
      %v1398 = vunpack.c.l.b16 %v462
      %v1399 = vunpack.c.l.b16 %v463
      %v1400 = vunpack.c.l.b16 %v464
      %v1401 = vunpack.c.l.b16 %v465
      %v1402 = vunpack.c.l.b16 %v466
      %v1403 = vunpack.c.l.b16 %v467
      %v1404 = vunpack.c.l.b16 %v468
      %v1405 = vunpack.c.l.b16 %v469
      %v1406 = vunpack.c.l.b16 %v470
      %v1407 = vunpack.c.l.b16 %v471
      %v1408 = vunpack.c.l.b16 %v472
      %v1409 = vunpack.c.l.b16 %v473
      %v1410 = vunpack.c.l.b16 %v474
      %v1411 = vunpack.c.l.b16 %v475
      %v1412 = vunpack.c.l.b16 %v476
      %v1413 = vunpack.c.l.b16 %v477
      %v1414 = vunpack.c.l.b16 %v478
      %v1415 = vunpack.c.l.b16 %v479
      %v1416 = vunpack.c.l.b16 %v480
      %v1417 = vunpack.c.l.b16 %v481
      %v1418 = vunpack.c.l.b16 %v482
      %v1419 = vunpack.c.l.b16 %v483
      %v1420 = vunpack.c.l.b16 %v484
      %v1421 = vunpack.c.l.b16 %v485
      %v1422 = vunpack.c.l.b16 %v486
      %v1423 = vunpack.c.l.b16 %v487
      %v1424 = vunpack.c.l.b16 %v488
      %v1425 = vunpack.c.l.b16 %v489
      %v1426 = vunpack.c.l.b16 %v490
      %v1427 = vunpack.c.l.b16 %v491
      %v1428 = vunpack.c.l.b16 %v492
      %v1429 = vunpack.c.l.b16 %v493
      %v1430 = vunpack.c.l.b16 %v494
      %v1431 = vunpack.c.l.b16 %v495
      %v1432 = vunpack.c.l.b16 %v496
      %v1433 = vunpack.c.l.b16 %v497
      %v1434 = vunpack.c.l.b16 %v498
      %v1435 = vunpack.c.l.b16 %v499
      %v1436 = vunpack.c.l.b16 %v500
      %v1437 = vunpack.c.l.b16 %v501
      %v1438 = vunpack.c.l.b16 %v502
      %v1439 = vunpack.c.l.b16 %v503
      %v1440 = vunpack.c.l.b16 %v504
      %v1441 = vunpack.c.l.b16 %v505
      %v1442 = vunpack.c.l.b16 %v506
      %v1443 = vunpack.c.l.b16 %v507
      %v1444 = vunpack.c.l.b16 %v508
      %v1445 = vunpack.c.l.b16 %v509
      %v1446 = vunpack.c.l.b16 %v510
      %v1447 = vunpack.c.l.b16 %v511
      %v1448 = vunpack.c.l.b16 %v512
      %v1449 = vunpack.c.l.b16 %v513
      %v1450 = vunpack.c.l.b16 %v514
      %v1451 = vunpack.c.l.b16 %v515
      %v1452 = vunpack.c.l.b16 %v516
      %v1453 = vunpack.c.l.b16 %v517
      %v1454 = vunpack.c.l.b16 %v518
      %v1455 = vunpack.c.l.b16 %v519
      %v1456 = vunpack.c.l.b16 %v520
      %v1457 = vunpack.c.l.b16 %v521
      %v1458 = vunpack.c.l.b16 %v522
      %v1459 = vunpack.c.l.b16 %v523
      %v1460 = vunpack.c.l.b16 %v524
      %v1461 = vunpack.c.l.b16 %v525
      %v1462 = vunpack.c.l.b16 %v526
      %v1463 = vunpack.c.l.b16 %v527
      %v1464 = vunpack.c.l.b16 %v528
      %v1465 = vunpack.c.l.b16 %v529
      %v1466 = vunpack.c.l.b16 %v530
      %v1467 = vunpack.c.l.b16 %v531
      %v1468 = vunpack.c.l.b16 %v532
      %v1469 = vunpack.c.l.b16 %v533
      %v1470 = vunpack.c.l.b16 %v534
      %v1471 = vunpack.c.l.b16 %v535
      %v1472 = vunpack.c.l.b16 %v536
      %v1473 = vunpack.c.l.b16 %v537
      %v1474 = vunpack.c.l.b16 %v538
      %v1475 = vunpack.c.l.b16 %v539
      %v1476 = vunpack.c.l.b16 %v540
      %v1477 = vunpack.c.l.b16 %v541
      %v1478 = vunpack.c.l.b16 %v542
      %v1479 = vunpack.c.l.b16 %v543
      %v1480 = vunpack.c.l.b16 %v544
      %v1481 = vunpack.c.l.b16 %v545
      %v1482 = vunpack.c.l.b16 %v546
      %v1483 = vunpack.c.l.b16 %v547
      %v1484 = vunpack.c.l.b16 %v548
      %v1485 = vunpack.c.l.b16 %v549
      %v1486 = vunpack.c.l.b16 %v550
      %v1487 = vunpack.c.l.b16 %v551
      %v1488 = vunpack.c.l.b16 %v552
      %v1489 = vunpack.c.l.b16 %v553
      %v1490 = vunpack.c.l.b16 %v554
      %v1491 = vunpack.c.l.b16 %v555
      %v1492 = vunpack.c.l.b16 %v556
      %v1493 = vunpack.c.l.b16 %v557
      %v1494 = vpack.c.b16 %v1207, %v1206
      %v1495 = vpack.c.b16 %v1209, %v1208
      %v1496 = vpack.c.b16 %v1211, %v1210
      %v1497 = vpack.c.b16 %v1213, %v1212
      %v1498 = vpack.c.b16 %v1215, %v1214
      %v1499 = vpack.c.b16 %v1217, %v1216
      %v1500 = vpack.c.b16 %v1219, %v1218
      %v1501 = vpack.c.b16 %v1221, %v1220
      %v1502 = vpack.c.b16 %v1223, %v1222
      %v1503 = vpack.c.b16 %v1225, %v1224
      %v1504 = vpack.c.b16 %v1227, %v1226
      %v1505 = vpack.c.b16 %v1229, %v1228
      %v1506 = vpack.c.b16 %v1231, %v1230
      %v1507 = vpack.c.b16 %v1233, %v1232
      %v1508 = vpack.c.b16 %v1235, %v1234
      %v1509 = vpack.c.b16 %v1237, %v1236
      %v1510 = vpack.c.b16 %v1239, %v1238
      %v1511 = vpack.c.b16 %v1241, %v1240
      %v1512 = vpack.c.b16 %v1243, %v1242
      %v1513 = vpack.c.b16 %v1245, %v1244
      %v1514 = vpack.c.b16 %v1247, %v1246
      %v1515 = vpack.c.b16 %v1249, %v1248
      %v1516 = vpack.c.b16 %v1251, %v1250
      %v1517 = vpack.c.b16 %v1253, %v1252
      %v1518 = vpack.c.b16 %v1255, %v1254
      %v1519 = vpack.c.b16 %v1257, %v1256
      %v1520 = vpack.c.b16 %v1259, %v1258
      %v1521 = vpack.c.b16 %v1261, %v1260
      %v1522 = vpack.c.b16 %v1263, %v1262
      %v1523 = vpack.c.b16 %v1265, %v1264
      %v1524 = vpack.c.b16 %v1267, %v1266
      %v1525 = vpack.c.b16 %v1269, %v1268
      %v1526 = vpack.c.b16 %v1271, %v1270
      %v1527 = vpack.c.b16 %v1273, %v1272
      %v1528 = vpack.c.b16 %v1275, %v1274
      %v1529 = vpack.c.b16 %v1277, %v1276
      %v1530 = vpack.c.b16 %v1279, %v1278
      %v1531 = vpack.c.b16 %v1281, %v1280
      %v1532 = vpack.c.b16 %v1283, %v1282
      %v1533 = vpack.c.b16 %v1285, %v1284
      %v1534 = vpack.c.b16 %v1287, %v1286
      %v1535 = vpack.c.b16 %v1289, %v1288
      %v1536 = vpack.c.b16 %v1291, %v1290
      %v1537 = vpack.c.b16 %v1293, %v1292
      %v1538 = vpack.c.b16 %v1295, %v1294
      %v1539 = vpack.c.b16 %v1297, %v1296
      %v1540 = vpack.c.b16 %v1299, %v1298
      %v1541 = vpack.c.b16 %v1301, %v1300
      %v1542 = vpack.c.b16 %v1303, %v1302
      %v1543 = vpack.c.b16 %v1305, %v1304
      %v1544 = vpack.c.b16 %v1307, %v1306
      %v1545 = vpack.c.b16 %v1309, %v1308
      %v1546 = vpack.c.b16 %v1311, %v1310
      %v1547 = vpack.c.b16 %v1313, %v1312
      %v1548 = vpack.c.b16 %v1315, %v1314
      %v1549 = vpack.c.b16 %v1317, %v1316
      %v1550 = vpack.c.b16 %v1319, %v1318
      %v1551 = vpack.c.b16 %v1321, %v1320
      %v1552 = vpack.c.b16 %v1323, %v1322
      %v1553 = vpack.c.b16 %v1325, %v1324
      %v1554 = vpack.c.b16 %v1327, %v1326
      %v1555 = vpack.c.b16 %v1329, %v1328
      %v1556 = vpack.c.b16 %v1331, %v1330
      %v1557 = vpack.c.b16 %v1333, %v1332
      %v1558 = vpack.c.b16 %v1335, %v1334
      %v1559 = vpack.c.b16 %v1337, %v1336
      %v1560 = vpack.c.b16 %v1339, %v1338
      %v1561 = vpack.c.b16 %v1341, %v1340
      %v1562 = vpack.c.b16 %v1343, %v1342
      %v1563 = vpack.c.b16 %v1345, %v1344
      %v1564 = vpack.c.b16 %v1347, %v1346
      %v1565 = vpack.c.b16 %v1349, %v1348
      %v1566 = vpack.c.b16 %v1351, %v1350
      %v1567 = vpack.c.b16 %v1353, %v1352
      %v1568 = vpack.c.b16 %v1355, %v1354
      %v1569 = vpack.c.b16 %v1357, %v1356
      %v1570 = vpack.c.b16 %v1359, %v1358
      %v1571 = vpack.c.b16 %v1361, %v1360
      %v1572 = vpack.c.b16 %v1363, %v1362
      %v1573 = vpack.c.b16 %v1365, %v1364
      %v1574 = vpack.c.b16 %v1367, %v1366
      %v1575 = vpack.c.b16 %v1369, %v1368
      %v1576 = vpack.c.b16 %v1371, %v1370
      %v1577 = vpack.c.b16 %v1373, %v1372
      %v1578 = vpack.c.b16 %v1375, %v1374
      %v1579 = vpack.c.b16 %v1377, %v1376
      %v1580 = vpack.c.b16 %v1379, %v1378
      %v1581 = vpack.c.b16 %v1381, %v1380
      %v1582 = vpack.c.b16 %v1383, %v1382
      %v1583 = vpack.c.b16 %v1385, %v1384
      %v1584 = vpack.c.b16 %v1387, %v1386
      %v1585 = vpack.c.b16 %v1389, %v1388
      %v1586 = vpack.c.b16 %v1391, %v1390
      %v1587 = vpack.c.b16 %v1393, %v1392
      %v1588 = vpack.c.b16 %v1395, %v1394
      %v1589 = vpack.c.b16 %v1397, %v1396
      %v1590 = vpack.c.b16 %v1399, %v1398
      %v1591 = vpack.c.b16 %v1401, %v1400
      %v1592 = vpack.c.b16 %v1403, %v1402
      %v1593 = vpack.c.b16 %v1405, %v1404
      %v1594 = vpack.c.b16 %v1407, %v1406
      %v1595 = vpack.c.b16 %v1409, %v1408
      %v1596 = vpack.c.b16 %v1411, %v1410
      %v1597 = vpack.c.b16 %v1413, %v1412
      %v1598 = vpack.c.b16 %v1415, %v1414
      %v1599 = vpack.c.b16 %v1417, %v1416
      %v1600 = vpack.c.b16 %v1419, %v1418
      %v1601 = vpack.c.b16 %v1421, %v1420
      %v1602 = vpack.c.b16 %v1423, %v1422
      %v1603 = vpack.c.b16 %v1425, %v1424
      %v1604 = vpack.c.b16 %v1427, %v1426
      %v1605 = vpack.c.b16 %v1429, %v1428
      %v1606 = vpack.c.b16 %v1431, %v1430
      %v1607 = vpack.c.b16 %v1433, %v1432
      %v1608 = vpack.c.b16 %v1435, %v1434
      %v1609 = vpack.c.b16 %v1437, %v1436
      %v1610 = vpack.c.b16 %v1439, %v1438
      %v1611 = vpack.c.b16 %v1441, %v1440
      %v1612 = vpack.c.b16 %v1443, %v1442
      %v1613 = vpack.c.b16 %v1445, %v1444
      %v1614 = vpack.c.b16 %v1447, %v1446
      %v1615 = vpack.c.b16 %v1449, %v1448
      %v1616 = vpack.c.b16 %v1451, %v1450
      %v1617 = vpack.c.b16 %v1453, %v1452
      %v1618 = vpack.c.b16 %v1455, %v1454
      %v1619 = vpack.c.b16 %v1457, %v1456
      %v1620 = vpack.c.b16 %v1459, %v1458
      %v1621 = vpack.c.b16 %v1461, %v1460
      %v1622 = vpack.c.b16 %v1463, %v1462
      %v1623 = vpack.c.b16 %v1465, %v1464
      %v1624 = vpack.c.b16 %v1467, %v1466
      %v1625 = vpack.c.b16 %v1469, %v1468
      %v1626 = vpack.c.b16 %v1471, %v1470
      %v1627 = vpack.c.b16 %v1473, %v1472
      %v1628 = vpack.c.b16 %v1475, %v1474
      %v1629 = vpack.c.b16 %v1477, %v1476
      %v1630 = vpack.c.b16 %v1479, %v1478
      %v1631 = vpack.c.b16 %v1481, %v1480
      %v1632 = vpack.c.b16 %v1483, %v1482
      %v1633 = vpack.c.b16 %v1485, %v1484
      %v1634 = vpack.c.b16 %v1487, %v1486
      %v1635 = vpack.c.b16 %v1489, %v1488
      %v1636 = vpack.c.b16 %v1491, %v1490
      %v1637 = vpack.c.b16 %v1493, %v1492
      %1782 = vmatpush.bf16.msra.mxu0 %v1501
      %1783 = vmatpush.bf16.msra.mxu0 %v1500
      %1784 = vmatpush.bf16.msra.mxu0 %v1499
      %1785 = vmatpush.bf16.msra.mxu0 %v1498
      %1786 = vmatpush.bf16.msra.mxu0 %v1497
      %1787 = vmatpush.bf16.msra.mxu0 %v1496
      %1788 = vmatpush.bf16.msra.mxu0 %v1495
      %1789 = vmatpush.bf16.msra.mxu0 %v1494
      %1790 = vmatmul.bf16.gmra.mxu0 %v774
      %v1791 = vpop.f32.mrf.mxu0
      %v1792 = vadd.f32 0.0, %v1791
      %v1793 = vpop.f32.mrf.mxu0
      %v1794 = vadd.f32 0.0, %v1793
      %1795 = vmatmul.bf16.gmra.mxu0 %v792
      %v1796 = vpop.f32.mrf.mxu0
      %v1797 = vadd.f32 0.0, %v1796
      %v1798 = vpop.f32.mrf.mxu0
      %v1799 = vadd.f32 0.0, %v1798
      %1800 = vmatmul.bf16.gmra.mxu0 %v810
      %v1801 = vpop.f32.mrf.mxu0
      %v1802 = vadd.f32 0.0, %v1801
      %v1803 = vpop.f32.mrf.mxu0
      %v1804 = vadd.f32 0.0, %v1803
      %1805 = vmatmul.bf16.gmra.mxu0 %v828
      %v1806 = vpop.f32.mrf.mxu0
      %v1807 = vadd.f32 0.0, %v1806
      %v1808 = vpop.f32.mrf.mxu0
      %v1809 = vadd.f32 0.0, %v1808
      %1810 = vdwg.mxu0
      %1811 = vmatpush.bf16.msra.mxu0 %v1509
      %1812 = vmatpush.bf16.msra.mxu0 %v1508
      %1813 = vmatpush.bf16.msra.mxu0 %v1507
      %1814 = vmatpush.bf16.msra.mxu0 %v1506
      %1815 = vmatpush.bf16.msra.mxu0 %v1505
      %1816 = vmatpush.bf16.msra.mxu0 %v1504
      %1817 = vmatpush.bf16.msra.mxu0 %v1503
      %1818 = vmatpush.bf16.msra.mxu0 %v1502
      %1819 = vmatmul.bf16.gmra.mxu0 %v775
      %v1820 = vpop.f32.mrf.mxu0
      %v1821 = vadd.f32 %v1792, %v1820
      %v1822 = vpop.f32.mrf.mxu0
      %v1823 = vadd.f32 %v1794, %v1822
      %1824 = vmatmul.bf16.gmra.mxu0 %v793
      %v1825 = vpop.f32.mrf.mxu0
      %v1826 = vadd.f32 %v1797, %v1825
      %v1827 = vpop.f32.mrf.mxu0
      %v1828 = vadd.f32 %v1799, %v1827
      %1829 = vmatmul.bf16.gmra.mxu0 %v811
      %v1830 = vpop.f32.mrf.mxu0
      %v1831 = vadd.f32 %v1802, %v1830
      %v1832 = vpop.f32.mrf.mxu0
      %v1833 = vadd.f32 %v1804, %v1832
      %1834 = vmatmul.bf16.gmra.mxu0 %v829
      %v1835 = vpop.f32.mrf.mxu0
      %v1836 = vadd.f32 %v1807, %v1835
      %v1837 = vpop.f32.mrf.mxu0
      %v1838 = vadd.f32 %v1809, %v1837
      %1839 = vdwg.mxu0
      %1840 = vmatpush.bf16.msra.mxu0 %v1517
      %1841 = vmatpush.bf16.msra.mxu0 %v1516
      %1842 = vmatpush.bf16.msra.mxu0 %v1515
      %1843 = vmatpush.bf16.msra.mxu0 %v1514
      %1844 = vmatpush.bf16.msra.mxu0 %v1513
      %1845 = vmatpush.bf16.msra.mxu0 %v1512
      %1846 = vmatpush.bf16.msra.mxu0 %v1511
      %1847 = vmatpush.bf16.msra.mxu0 %v1510
      %1848 = vmatmul.bf16.gmra.mxu0 %v776
      %v1849 = vpop.f32.mrf.mxu0
      %v1850 = vadd.f32 %v1821, %v1849
      %v1851 = vpop.f32.mrf.mxu0
      %v1852 = vadd.f32 %v1823, %v1851
      %1853 = vmatmul.bf16.gmra.mxu0 %v794
      %v1854 = vpop.f32.mrf.mxu0
      %v1855 = vadd.f32 %v1826, %v1854
      %v1856 = vpop.f32.mrf.mxu0
      %v1857 = vadd.f32 %v1828, %v1856
      %1858 = vmatmul.bf16.gmra.mxu0 %v812
      %v1859 = vpop.f32.mrf.mxu0
      %v1860 = vadd.f32 %v1831, %v1859
      %v1861 = vpop.f32.mrf.mxu0
      %v1862 = vadd.f32 %v1833, %v1861
      %1863 = vmatmul.bf16.gmra.mxu0 %v830
      %v1864 = vpop.f32.mrf.mxu0
      %v1865 = vadd.f32 %v1836, %v1864
      %v1866 = vpop.f32.mrf.mxu0
      %v1867 = vadd.f32 %v1838, %v1866
      %1868 = vdwg.mxu0
      %1869 = vmatpush.bf16.msra.mxu0 %v1525
      %1870 = vmatpush.bf16.msra.mxu0 %v1524
      %1871 = vmatpush.bf16.msra.mxu0 %v1523
      %1872 = vmatpush.bf16.msra.mxu0 %v1522
      %1873 = vmatpush.bf16.msra.mxu0 %v1521
      %1874 = vmatpush.bf16.msra.mxu0 %v1520
      %1875 = vmatpush.bf16.msra.mxu0 %v1519
      %1876 = vmatpush.bf16.msra.mxu0 %v1518
      %1877 = vmatmul.bf16.gmra.mxu0 %v777
      %v1878 = vpop.f32.mrf.mxu0
      %v1879 = vadd.f32 %v1850, %v1878
      %v1880 = vpop.f32.mrf.mxu0
      %v1881 = vadd.f32 %v1852, %v1880
      %1882 = vmatmul.bf16.gmra.mxu0 %v795
      %v1883 = vpop.f32.mrf.mxu0
      %v1884 = vadd.f32 %v1855, %v1883
      %v1885 = vpop.f32.mrf.mxu0
      %v1886 = vadd.f32 %v1857, %v1885
      %1887 = vmatmul.bf16.gmra.mxu0 %v813
      %v1888 = vpop.f32.mrf.mxu0
      %v1889 = vadd.f32 %v1860, %v1888
      %v1890 = vpop.f32.mrf.mxu0
      %v1891 = vadd.f32 %v1862, %v1890
      %1892 = vmatmul.bf16.gmra.mxu0 %v831
      %v1893 = vpop.f32.mrf.mxu0
      %v1894 = vadd.f32 %v1865, %v1893
      %v1895 = vpop.f32.mrf.mxu0
      %v1896 = vadd.f32 %v1867, %v1895
      %1897 = vdwg.mxu0
      %1898 = vmatpush.bf16.msra.mxu0 %v1533
      %1899 = vmatpush.bf16.msra.mxu0 %v1532
      %1900 = vmatpush.bf16.msra.mxu0 %v1531
      %1901 = vmatpush.bf16.msra.mxu0 %v1530
      %1902 = vmatpush.bf16.msra.mxu0 %v1529
      %1903 = vmatpush.bf16.msra.mxu0 %v1528
      %1904 = vmatpush.bf16.msra.mxu0 %v1527
      %1905 = vmatpush.bf16.msra.mxu0 %v1526
      %1906 = vmatmul.bf16.gmra.mxu0 %v778
      %v1907 = vpop.f32.mrf.mxu0
      %v1908 = vadd.f32 %v1879, %v1907
      %v1909 = vpop.f32.mrf.mxu0
      %v1910 = vadd.f32 %v1881, %v1909
      %1911 = vmatmul.bf16.gmra.mxu0 %v796
      %v1912 = vpop.f32.mrf.mxu0
      %v1913 = vadd.f32 %v1884, %v1912
      %v1914 = vpop.f32.mrf.mxu0
      %v1915 = vadd.f32 %v1886, %v1914
      %1916 = vmatmul.bf16.gmra.mxu0 %v814
      %v1917 = vpop.f32.mrf.mxu0
      %v1918 = vadd.f32 %v1889, %v1917
      %v1919 = vpop.f32.mrf.mxu0
      %v1920 = vadd.f32 %v1891, %v1919
      %1921 = vmatmul.bf16.gmra.mxu0 %v832
      %v1922 = vpop.f32.mrf.mxu0
      %v1923 = vadd.f32 %v1894, %v1922
      %v1924 = vpop.f32.mrf.mxu0
      %v1925 = vadd.f32 %v1896, %v1924
      %1926 = vdwg.mxu0
      %1927 = vmatpush.bf16.msra.mxu0 %v1541
      %1928 = vmatpush.bf16.msra.mxu0 %v1540
      %1929 = vmatpush.bf16.msra.mxu0 %v1539
      %1930 = vmatpush.bf16.msra.mxu0 %v1538
      %1931 = vmatpush.bf16.msra.mxu0 %v1537
      %1932 = vmatpush.bf16.msra.mxu0 %v1536
      %1933 = vmatpush.bf16.msra.mxu0 %v1535
      %1934 = vmatpush.bf16.msra.mxu0 %v1534
      %1935 = vmatmul.bf16.gmra.mxu0 %v779
      %v1936 = vpop.f32.mrf.mxu0
      %v1937 = vadd.f32 %v1908, %v1936
      %v1938 = vpop.f32.mrf.mxu0
      %v1939 = vadd.f32 %v1910, %v1938
      %1940 = vmatmul.bf16.gmra.mxu0 %v797
      %v1941 = vpop.f32.mrf.mxu0
      %v1942 = vadd.f32 %v1913, %v1941
      %v1943 = vpop.f32.mrf.mxu0
      %v1944 = vadd.f32 %v1915, %v1943
      %1945 = vmatmul.bf16.gmra.mxu0 %v815
      %v1946 = vpop.f32.mrf.mxu0
      %v1947 = vadd.f32 %v1918, %v1946
      %v1948 = vpop.f32.mrf.mxu0
      %v1949 = vadd.f32 %v1920, %v1948
      %1950 = vmatmul.bf16.gmra.mxu0 %v833
      %v1951 = vpop.f32.mrf.mxu0
      %v1952 = vadd.f32 %v1923, %v1951
      %v1953 = vpop.f32.mrf.mxu0
      %v1954 = vadd.f32 %v1925, %v1953
      %1955 = vdwg.mxu0
      %1956 = vmatpush.bf16.msra.mxu0 %v1549
      %1957 = vmatpush.bf16.msra.mxu0 %v1548
      %1958 = vmatpush.bf16.msra.mxu0 %v1547
      %1959 = vmatpush.bf16.msra.mxu0 %v1546
      %1960 = vmatpush.bf16.msra.mxu0 %v1545
      %1961 = vmatpush.bf16.msra.mxu0 %v1544
      %1962 = vmatpush.bf16.msra.mxu0 %v1543
      %1963 = vmatpush.bf16.msra.mxu0 %v1542
      %1964 = vmatmul.bf16.gmra.mxu0 %v780
      %v1965 = vpop.f32.mrf.mxu0
      %v1966 = vadd.f32 %v1937, %v1965
      %v1967 = vpop.f32.mrf.mxu0
      %v1968 = vadd.f32 %v1939, %v1967
      %1969 = vmatmul.bf16.gmra.mxu0 %v798
      %v1970 = vpop.f32.mrf.mxu0
      %v1971 = vadd.f32 %v1942, %v1970
      %v1972 = vpop.f32.mrf.mxu0
      %v1973 = vadd.f32 %v1944, %v1972
      %1974 = vmatmul.bf16.gmra.mxu0 %v816
      %v1975 = vpop.f32.mrf.mxu0
      %v1976 = vadd.f32 %v1947, %v1975
      %v1977 = vpop.f32.mrf.mxu0
      %v1978 = vadd.f32 %v1949, %v1977
      %1979 = vmatmul.bf16.gmra.mxu0 %v834
      %v1980 = vpop.f32.mrf.mxu0
      %v1981 = vadd.f32 %v1952, %v1980
      %v1982 = vpop.f32.mrf.mxu0
      %v1983 = vadd.f32 %v1954, %v1982
      %1984 = vdwg.mxu0
      %1985 = vmatpush.bf16.msra.mxu0 %v1557
      %1986 = vmatpush.bf16.msra.mxu0 %v1556
      %1987 = vmatpush.bf16.msra.mxu0 %v1555
      %1988 = vmatpush.bf16.msra.mxu0 %v1554
      %1989 = vmatpush.bf16.msra.mxu0 %v1553
      %1990 = vmatpush.bf16.msra.mxu0 %v1552
      %1991 = vmatpush.bf16.msra.mxu0 %v1551
      %1992 = vmatpush.bf16.msra.mxu0 %v1550
      %1993 = vmatmul.bf16.gmra.mxu0 %v781
      %v1994 = vpop.f32.mrf.mxu0
      %v1995 = vadd.f32 %v1966, %v1994
      %v1996 = vpop.f32.mrf.mxu0
      %v1997 = vadd.f32 %v1968, %v1996
      %1998 = vmatmul.bf16.gmra.mxu0 %v799
      %v1999 = vpop.f32.mrf.mxu0
      %v2000 = vadd.f32 %v1971, %v1999
      %v2001 = vpop.f32.mrf.mxu0
      %v2002 = vadd.f32 %v1973, %v2001
      %2003 = vmatmul.bf16.gmra.mxu0 %v817
      %v2004 = vpop.f32.mrf.mxu0
      %v2005 = vadd.f32 %v1976, %v2004
      %v2006 = vpop.f32.mrf.mxu0
      %v2007 = vadd.f32 %v1978, %v2006
      %2008 = vmatmul.bf16.gmra.mxu0 %v835
      %v2009 = vpop.f32.mrf.mxu0
      %v2010 = vadd.f32 %v1981, %v2009
      %v2011 = vpop.f32.mrf.mxu0
      %v2012 = vadd.f32 %v1983, %v2011
      %2013 = vdwg.mxu0
      %2014 = vmatpush.bf16.msra.mxu0 %v1565
      %2015 = vmatpush.bf16.msra.mxu0 %v1564
      %2016 = vmatpush.bf16.msra.mxu0 %v1563
      %2017 = vmatpush.bf16.msra.mxu0 %v1562
      %2018 = vmatpush.bf16.msra.mxu0 %v1561
      %2019 = vmatpush.bf16.msra.mxu0 %v1560
      %2020 = vmatpush.bf16.msra.mxu0 %v1559
      %2021 = vmatpush.bf16.msra.mxu0 %v1558
      %2022 = vmatmul.bf16.gmra.mxu0 %v782
      %v2023 = vpop.f32.mrf.mxu0
      %v2024 = vadd.f32 %v1995, %v2023
      %v2025 = vpop.f32.mrf.mxu0
      %v2026 = vadd.f32 %v1997, %v2025
      %2027 = vmatmul.bf16.gmra.mxu0 %v800
      %v2028 = vpop.f32.mrf.mxu0
      %v2029 = vadd.f32 %v2000, %v2028
      %v2030 = vpop.f32.mrf.mxu0
      %v2031 = vadd.f32 %v2002, %v2030
      %2032 = vmatmul.bf16.gmra.mxu0 %v818
      %v2033 = vpop.f32.mrf.mxu0
      %v2034 = vadd.f32 %v2005, %v2033
      %v2035 = vpop.f32.mrf.mxu0
      %v2036 = vadd.f32 %v2007, %v2035
      %2037 = vmatmul.bf16.gmra.mxu0 %v836
      %v2038 = vpop.f32.mrf.mxu0
      %v2039 = vadd.f32 %v2010, %v2038
      %v2040 = vpop.f32.mrf.mxu0
      %v2041 = vadd.f32 %v2012, %v2040
      %2042 = vdwg.mxu0
      %2043 = vmatpush.bf16.msra.mxu0 %v1573
      %2044 = vmatpush.bf16.msra.mxu0 %v1572
      %2045 = vmatpush.bf16.msra.mxu0 %v1571
      %2046 = vmatpush.bf16.msra.mxu0 %v1570
      %2047 = vmatpush.bf16.msra.mxu0 %v1569
      %2048 = vmatpush.bf16.msra.mxu0 %v1568
      %2049 = vmatpush.bf16.msra.mxu0 %v1567
      %2050 = vmatpush.bf16.msra.mxu0 %v1566
      %2051 = vmatmul.bf16.gmra.mxu0 %v783
      %v2052 = vpop.f32.mrf.mxu0
      %v2053 = vadd.f32 %v2024, %v2052
      %v2054 = vpop.f32.mrf.mxu0
      %v2055 = vadd.f32 %v2026, %v2054
      %2056 = vmatmul.bf16.gmra.mxu0 %v801
      %v2057 = vpop.f32.mrf.mxu0
      %v2058 = vadd.f32 %v2029, %v2057
      %v2059 = vpop.f32.mrf.mxu0
      %v2060 = vadd.f32 %v2031, %v2059
      %2061 = vmatmul.bf16.gmra.mxu0 %v819
      %v2062 = vpop.f32.mrf.mxu0
      %v2063 = vadd.f32 %v2034, %v2062
      %v2064 = vpop.f32.mrf.mxu0
      %v2065 = vadd.f32 %v2036, %v2064
      %2066 = vmatmul.bf16.gmra.mxu0 %v837
      %v2067 = vpop.f32.mrf.mxu0
      %v2068 = vadd.f32 %v2039, %v2067
      %v2069 = vpop.f32.mrf.mxu0
      %v2070 = vadd.f32 %v2041, %v2069
      %2071 = vdwg.mxu0
      %2072 = vmatpush.bf16.msra.mxu0 %v1581
      %2073 = vmatpush.bf16.msra.mxu0 %v1580
      %2074 = vmatpush.bf16.msra.mxu0 %v1579
      %2075 = vmatpush.bf16.msra.mxu0 %v1578
      %2076 = vmatpush.bf16.msra.mxu0 %v1577
      %2077 = vmatpush.bf16.msra.mxu0 %v1576
      %2078 = vmatpush.bf16.msra.mxu0 %v1575
      %2079 = vmatpush.bf16.msra.mxu0 %v1574
      %2080 = vmatmul.bf16.gmra.mxu0 %v784
      %v2081 = vpop.f32.mrf.mxu0
      %v2082 = vadd.f32 %v2053, %v2081
      %v2083 = vpop.f32.mrf.mxu0
      %v2084 = vadd.f32 %v2055, %v2083
      %2085 = vmatmul.bf16.gmra.mxu0 %v802
      %v2086 = vpop.f32.mrf.mxu0
      %v2087 = vadd.f32 %v2058, %v2086
      %v2088 = vpop.f32.mrf.mxu0
      %v2089 = vadd.f32 %v2060, %v2088
      %2090 = vmatmul.bf16.gmra.mxu0 %v820
      %v2091 = vpop.f32.mrf.mxu0
      %v2092 = vadd.f32 %v2063, %v2091
      %v2093 = vpop.f32.mrf.mxu0
      %v2094 = vadd.f32 %v2065, %v2093
      %2095 = vmatmul.bf16.gmra.mxu0 %v838
      %v2096 = vpop.f32.mrf.mxu0
      %v2097 = vadd.f32 %v2068, %v2096
      %v2098 = vpop.f32.mrf.mxu0
      %v2099 = vadd.f32 %v2070, %v2098
      %2100 = vdwg.mxu0
      %2101 = vmatpush.bf16.msra.mxu0 %v1589
      %2102 = vmatpush.bf16.msra.mxu0 %v1588
      %2103 = vmatpush.bf16.msra.mxu0 %v1587
      %2104 = vmatpush.bf16.msra.mxu0 %v1586
      %2105 = vmatpush.bf16.msra.mxu0 %v1585
      %2106 = vmatpush.bf16.msra.mxu0 %v1584
      %2107 = vmatpush.bf16.msra.mxu0 %v1583
      %2108 = vmatpush.bf16.msra.mxu0 %v1582
      %2109 = vmatmul.bf16.gmra.mxu0 %v785
      %v2110 = vpop.f32.mrf.mxu0
      %v2111 = vadd.f32 %v2082, %v2110
      %v2112 = vpop.f32.mrf.mxu0
      %v2113 = vadd.f32 %v2084, %v2112
      %2114 = vmatmul.bf16.gmra.mxu0 %v803
      %v2115 = vpop.f32.mrf.mxu0
      %v2116 = vadd.f32 %v2087, %v2115
      %v2117 = vpop.f32.mrf.mxu0
      %v2118 = vadd.f32 %v2089, %v2117
      %2119 = vmatmul.bf16.gmra.mxu0 %v821
      %v2120 = vpop.f32.mrf.mxu0
      %v2121 = vadd.f32 %v2092, %v2120
      %v2122 = vpop.f32.mrf.mxu0
      %v2123 = vadd.f32 %v2094, %v2122
      %2124 = vmatmul.bf16.gmra.mxu0 %v839
      %v2125 = vpop.f32.mrf.mxu0
      %v2126 = vadd.f32 %v2097, %v2125
      %v2127 = vpop.f32.mrf.mxu0
      %v2128 = vadd.f32 %v2099, %v2127
      %2129 = vdwg.mxu0
      %2130 = vmatpush.bf16.msra.mxu0 %v1597
      %2131 = vmatpush.bf16.msra.mxu0 %v1596
      %2132 = vmatpush.bf16.msra.mxu0 %v1595
      %2133 = vmatpush.bf16.msra.mxu0 %v1594
      %2134 = vmatpush.bf16.msra.mxu0 %v1593
      %2135 = vmatpush.bf16.msra.mxu0 %v1592
      %2136 = vmatpush.bf16.msra.mxu0 %v1591
      %2137 = vmatpush.bf16.msra.mxu0 %v1590
      %2138 = vmatmul.bf16.gmra.mxu0 %v786
      %v2139 = vpop.f32.mrf.mxu0
      %v2140 = vadd.f32 %v2111, %v2139
      %v2141 = vpop.f32.mrf.mxu0
      %v2142 = vadd.f32 %v2113, %v2141
      %2143 = vmatmul.bf16.gmra.mxu0 %v804
      %v2144 = vpop.f32.mrf.mxu0
      %v2145 = vadd.f32 %v2116, %v2144
      %v2146 = vpop.f32.mrf.mxu0
      %v2147 = vadd.f32 %v2118, %v2146
      %2148 = vmatmul.bf16.gmra.mxu0 %v822
      %v2149 = vpop.f32.mrf.mxu0
      %v2150 = vadd.f32 %v2121, %v2149
      %v2151 = vpop.f32.mrf.mxu0
      %v2152 = vadd.f32 %v2123, %v2151
      %2153 = vmatmul.bf16.gmra.mxu0 %v840
      %v2154 = vpop.f32.mrf.mxu0
      %v2155 = vadd.f32 %v2126, %v2154
      %v2156 = vpop.f32.mrf.mxu0
      %v2157 = vadd.f32 %v2128, %v2156
      %2158 = vdwg.mxu0
      %2159 = vmatpush.bf16.msra.mxu0 %v1605
      %2160 = vmatpush.bf16.msra.mxu0 %v1604
      %2161 = vmatpush.bf16.msra.mxu0 %v1603
      %2162 = vmatpush.bf16.msra.mxu0 %v1602
      %2163 = vmatpush.bf16.msra.mxu0 %v1601
      %2164 = vmatpush.bf16.msra.mxu0 %v1600
      %2165 = vmatpush.bf16.msra.mxu0 %v1599
      %2166 = vmatpush.bf16.msra.mxu0 %v1598
      %2167 = vmatmul.bf16.gmra.mxu0 %v787
      %v2168 = vpop.f32.mrf.mxu0
      %v2169 = vadd.f32 %v2140, %v2168
      %v2170 = vpop.f32.mrf.mxu0
      %v2171 = vadd.f32 %v2142, %v2170
      %2172 = vmatmul.bf16.gmra.mxu0 %v805
      %v2173 = vpop.f32.mrf.mxu0
      %v2174 = vadd.f32 %v2145, %v2173
      %v2175 = vpop.f32.mrf.mxu0
      %v2176 = vadd.f32 %v2147, %v2175
      %2177 = vmatmul.bf16.gmra.mxu0 %v823
      %v2178 = vpop.f32.mrf.mxu0
      %v2179 = vadd.f32 %v2150, %v2178
      %v2180 = vpop.f32.mrf.mxu0
      %v2181 = vadd.f32 %v2152, %v2180
      %2182 = vmatmul.bf16.gmra.mxu0 %v841
      %v2183 = vpop.f32.mrf.mxu0
      %v2184 = vadd.f32 %v2155, %v2183
      %v2185 = vpop.f32.mrf.mxu0
      %v2186 = vadd.f32 %v2157, %v2185
      %2187 = vdwg.mxu0
      %2188 = vmatpush.bf16.msra.mxu0 %v1613
      %2189 = vmatpush.bf16.msra.mxu0 %v1612
      %2190 = vmatpush.bf16.msra.mxu0 %v1611
      %2191 = vmatpush.bf16.msra.mxu0 %v1610
      %2192 = vmatpush.bf16.msra.mxu0 %v1609
      %2193 = vmatpush.bf16.msra.mxu0 %v1608
      %2194 = vmatpush.bf16.msra.mxu0 %v1607
      %2195 = vmatpush.bf16.msra.mxu0 %v1606
      %2196 = vmatmul.bf16.gmra.mxu0 %v788
      %v2197 = vpop.f32.mrf.mxu0
      %v2198 = vadd.f32 %v2169, %v2197
      %v2199 = vpop.f32.mrf.mxu0
      %v2200 = vadd.f32 %v2171, %v2199
      %2201 = vmatmul.bf16.gmra.mxu0 %v806
      %v2202 = vpop.f32.mrf.mxu0
      %v2203 = vadd.f32 %v2174, %v2202
      %v2204 = vpop.f32.mrf.mxu0
      %v2205 = vadd.f32 %v2176, %v2204
      %2206 = vmatmul.bf16.gmra.mxu0 %v824
      %v2207 = vpop.f32.mrf.mxu0
      %v2208 = vadd.f32 %v2179, %v2207
      %v2209 = vpop.f32.mrf.mxu0
      %v2210 = vadd.f32 %v2181, %v2209
      %2211 = vmatmul.bf16.gmra.mxu0 %v842
      %v2212 = vpop.f32.mrf.mxu0
      %v2213 = vadd.f32 %v2184, %v2212
      %v2214 = vpop.f32.mrf.mxu0
      %v2215 = vadd.f32 %v2186, %v2214
      %2216 = vdwg.mxu0
      %2217 = vmatpush.bf16.msra.mxu0 %v1621
      %2218 = vmatpush.bf16.msra.mxu0 %v1620
      %2219 = vmatpush.bf16.msra.mxu0 %v1619
      %2220 = vmatpush.bf16.msra.mxu0 %v1618
      %2221 = vmatpush.bf16.msra.mxu0 %v1617
      %2222 = vmatpush.bf16.msra.mxu0 %v1616
      %2223 = vmatpush.bf16.msra.mxu0 %v1615
      %2224 = vmatpush.bf16.msra.mxu0 %v1614
      %2225 = vmatmul.bf16.gmra.mxu0 %v789
      %v2226 = vpop.f32.mrf.mxu0
      %v2227 = vadd.f32 %v2198, %v2226
      %v2228 = vpop.f32.mrf.mxu0
      %v2229 = vadd.f32 %v2200, %v2228
      %2230 = vmatmul.bf16.gmra.mxu0 %v807
      %v2231 = vpop.f32.mrf.mxu0
      %v2232 = vadd.f32 %v2203, %v2231
      %v2233 = vpop.f32.mrf.mxu0
      %v2234 = vadd.f32 %v2205, %v2233
      %2235 = vmatmul.bf16.gmra.mxu0 %v825
      %v2236 = vpop.f32.mrf.mxu0
      %v2237 = vadd.f32 %v2208, %v2236
      %v2238 = vpop.f32.mrf.mxu0
      %v2239 = vadd.f32 %v2210, %v2238
      %2240 = vmatmul.bf16.gmra.mxu0 %v843
      %v2241 = vpop.f32.mrf.mxu0
      %v2242 = vadd.f32 %v2213, %v2241
      %v2243 = vpop.f32.mrf.mxu0
      %v2244 = vadd.f32 %v2215, %v2243
      %2245 = vdwg.mxu0
      %2246 = vmatpush.bf16.msra.mxu0 %v1629
      %2247 = vmatpush.bf16.msra.mxu0 %v1628
      %2248 = vmatpush.bf16.msra.mxu0 %v1627
      %2249 = vmatpush.bf16.msra.mxu0 %v1626
      %2250 = vmatpush.bf16.msra.mxu0 %v1625
      %2251 = vmatpush.bf16.msra.mxu0 %v1624
      %2252 = vmatpush.bf16.msra.mxu0 %v1623
      %2253 = vmatpush.bf16.msra.mxu0 %v1622
      %2254 = vmatmul.bf16.gmra.mxu0 %v790
      %v2255 = vpop.f32.mrf.mxu0
      %v2256 = vadd.f32 %v2227, %v2255
      %v2257 = vpop.f32.mrf.mxu0
      %v2258 = vadd.f32 %v2229, %v2257
      %2259 = vmatmul.bf16.gmra.mxu0 %v808
      %v2260 = vpop.f32.mrf.mxu0
      %v2261 = vadd.f32 %v2232, %v2260
      %v2262 = vpop.f32.mrf.mxu0
      %v2263 = vadd.f32 %v2234, %v2262
      %2264 = vmatmul.bf16.gmra.mxu0 %v826
      %v2265 = vpop.f32.mrf.mxu0
      %v2266 = vadd.f32 %v2237, %v2265
      %v2267 = vpop.f32.mrf.mxu0
      %v2268 = vadd.f32 %v2239, %v2267
      %2269 = vmatmul.bf16.gmra.mxu0 %v844
      %v2270 = vpop.f32.mrf.mxu0
      %v2271 = vadd.f32 %v2242, %v2270
      %v2272 = vpop.f32.mrf.mxu0
      %v2273 = vadd.f32 %v2244, %v2272
      %2274 = vdwg.mxu0
      %2275 = vmatpush.bf16.msra.mxu0 %v1637
      %2276 = vmatpush.bf16.msra.mxu0 %v1636
      %2277 = vmatpush.bf16.msra.mxu0 %v1635
      %2278 = vmatpush.bf16.msra.mxu0 %v1634
      %2279 = vmatpush.bf16.msra.mxu0 %v1633
      %2280 = vmatpush.bf16.msra.mxu0 %v1632
      %2281 = vmatpush.bf16.msra.mxu0 %v1631
      %2282 = vmatpush.bf16.msra.mxu0 %v1630
      %2283 = vmatmul.bf16.gmra.mxu0 %v791
      %v2284 = vpop.f32.mrf.mxu0
      %v2285 = vadd.f32 %v2256, %v2284
      %v2286 = vpop.f32.mrf.mxu0
      %v2287 = vadd.f32 %v2258, %v2286
      %2288 = vmatmul.bf16.gmra.mxu0 %v809
      %v2289 = vpop.f32.mrf.mxu0
      %v2290 = vadd.f32 %v2261, %v2289
      %v2291 = vpop.f32.mrf.mxu0
      %v2292 = vadd.f32 %v2263, %v2291
      %2293 = vmatmul.bf16.gmra.mxu0 %v827
      %v2294 = vpop.f32.mrf.mxu0
      %v2295 = vadd.f32 %v2266, %v2294
      %v2296 = vpop.f32.mrf.mxu0
      %v2297 = vadd.f32 %v2268, %v2296
      %2298 = vmatmul.bf16.gmra.mxu0 %v845
      %v2299 = vpop.f32.mrf.mxu0
      %v2300 = vadd.f32 %v2271, %v2299
      %v2301 = vpop.f32.mrf.mxu0
      %v2302 = vadd.f32 %v2273, %v2301
      %2303 = vdwg.mxu0
      %v2304 = vmul.f32 %v2285, %v2285
      %v2305 = vmul.f32 %v2287, %v2287
      %v2306 = vmul.f32 %v2290, %v2290
      %v2307 = vmul.f32 %v2292, %v2292
      %v2308 = vmul.f32 %v2295, %v2295
      %v2309 = vmul.f32 %v2297, %v2297
      %v2310 = vmul.f32 %v2300, %v2300
      %v2311 = vmul.f32 %v2302, %v2302
      %2320 = vrot.lane.b32.xlu0 %v2304, 64
      %v2321 = vpop.permute.xlu0 %2320
      %2322 = vrot.lane.b32.xlu0 %v2305, 64
      %v2323 = vpop.permute.xlu0 %2322
      %2324 = vrot.lane.b32.xlu0 %v2306, 64
      %v2325 = vpop.permute.xlu0 %2324
      %2326 = vrot.lane.b32.xlu0 %v2307, 64
      %v2327 = vpop.permute.xlu0 %2326
      %2328 = vrot.lane.b32.xlu0 %v2308, 64
      %v2329 = vpop.permute.xlu0 %2328
      %2330 = vrot.lane.b32.xlu0 %v2309, 64
      %v2331 = vpop.permute.xlu0 %2330
      %2332 = vrot.lane.b32.xlu0 %v2310, 64
      %v2333 = vpop.permute.xlu0 %2332
      %2334 = vrot.lane.b32.xlu0 %v2311, 64
      %v2335 = vpop.permute.xlu0 %2334
      %v2344 = vadd.f32 %v2304, %v2321
      %v2345 = vadd.f32 %v2305, %v2323
      %v2346 = vadd.f32 %v2306, %v2325
      %v2347 = vadd.f32 %v2307, %v2327
      %v2348 = vadd.f32 %v2308, %v2329
      %v2349 = vadd.f32 %v2309, %v2331
      %v2350 = vadd.f32 %v2310, %v2333
      %v2351 = vadd.f32 %v2311, %v2335
      %v2352 = vrsqrt.pop %v2344
      %v2353 = vmul.f32 %v2352, %v2344
      %v2354 = vmul.f32 %v2353, %v2352
      %v2355 = vmul.f32 0.5, %v2354
      %v2356 = vsub.f32 1.5, %v2355
      %v2357 = vmul.f32 %v2352, %v2356
      %v2358 = vmul.f32 %v2344, %v2357
      %vm2359 = vcmp.eq.f32.partialorder %v2344, inf
      %v2360 = vsel %vm2359, %v2344, %v2358
      %vm2361 = vcmp.eq.f32.partialorder %v2344, 0.0
      %v2362 = vand.u32 %v2344, 2147483648
      %v2363 = vsel %vm2361, %v2362, %v2360
      %v2364 = vrsqrt.pop %v2345
      %v2365 = vmul.f32 %v2364, %v2345
      %v2366 = vmul.f32 %v2365, %v2364
      %v2367 = vmul.f32 0.5, %v2366
      %v2368 = vsub.f32 1.5, %v2367
      %v2369 = vmul.f32 %v2364, %v2368
      %v2370 = vmul.f32 %v2345, %v2369
      %vm2371 = vcmp.eq.f32.partialorder %v2345, inf
      %v2372 = vsel %vm2371, %v2345, %v2370
      %vm2373 = vcmp.eq.f32.partialorder %v2345, 0.0
      %v2374 = vand.u32 %v2345, 2147483648
      %v2375 = vsel %vm2373, %v2374, %v2372
      %v2376 = vrsqrt.pop %v2346
      %v2377 = vmul.f32 %v2376, %v2346
      %v2378 = vmul.f32 %v2377, %v2376
      %v2379 = vmul.f32 0.5, %v2378
      %v2380 = vsub.f32 1.5, %v2379
      %v2381 = vmul.f32 %v2376, %v2380
      %v2382 = vmul.f32 %v2346, %v2381
      %vm2383 = vcmp.eq.f32.partialorder %v2346, inf
      %v2384 = vsel %vm2383, %v2346, %v2382
      %vm2385 = vcmp.eq.f32.partialorder %v2346, 0.0
      %v2386 = vand.u32 %v2346, 2147483648
      %v2387 = vsel %vm2385, %v2386, %v2384
      %v2388 = vrsqrt.pop %v2347
      %v2389 = vmul.f32 %v2388, %v2347
      %v2390 = vmul.f32 %v2389, %v2388
      %v2391 = vmul.f32 0.5, %v2390
      %v2392 = vsub.f32 1.5, %v2391
      %v2393 = vmul.f32 %v2388, %v2392
      %v2394 = vmul.f32 %v2347, %v2393
      %vm2395 = vcmp.eq.f32.partialorder %v2347, inf
      %v2396 = vsel %vm2395, %v2347, %v2394
      %vm2397 = vcmp.eq.f32.partialorder %v2347, 0.0
      %v2398 = vand.u32 %v2347, 2147483648
      %v2399 = vsel %vm2397, %v2398, %v2396
      %v2400 = vrsqrt.pop %v2348
      %v2401 = vmul.f32 %v2400, %v2348
      %v2402 = vmul.f32 %v2401, %v2400
      %v2403 = vmul.f32 0.5, %v2402
      %v2404 = vsub.f32 1.5, %v2403
      %v2405 = vmul.f32 %v2400, %v2404
      %v2406 = vmul.f32 %v2348, %v2405
      %vm2407 = vcmp.eq.f32.partialorder %v2348, inf
      %v2408 = vsel %vm2407, %v2348, %v2406
      %vm2409 = vcmp.eq.f32.partialorder %v2348, 0.0
      %v2410 = vand.u32 %v2348, 2147483648
      %v2411 = vsel %vm2409, %v2410, %v2408
      %v2412 = vrsqrt.pop %v2349
      %v2413 = vmul.f32 %v2412, %v2349
      %v2414 = vmul.f32 %v2413, %v2412
      %v2415 = vmul.f32 0.5, %v2414
      %v2416 = vsub.f32 1.5, %v2415
      %v2417 = vmul.f32 %v2412, %v2416
      %v2418 = vmul.f32 %v2349, %v2417
      %vm2419 = vcmp.eq.f32.partialorder %v2349, inf
      %v2420 = vsel %vm2419, %v2349, %v2418
      %vm2421 = vcmp.eq.f32.partialorder %v2349, 0.0
      %v2422 = vand.u32 %v2349, 2147483648
      %v2423 = vsel %vm2421, %v2422, %v2420
      %v2424 = vrsqrt.pop %v2350
      %v2425 = vmul.f32 %v2424, %v2350
      %v2426 = vmul.f32 %v2425, %v2424
      %v2427 = vmul.f32 0.5, %v2426
      %v2428 = vsub.f32 1.5, %v2427
      %v2429 = vmul.f32 %v2424, %v2428
      %v2430 = vmul.f32 %v2350, %v2429
      %vm2431 = vcmp.eq.f32.partialorder %v2350, inf
      %v2432 = vsel %vm2431, %v2350, %v2430
      %vm2433 = vcmp.eq.f32.partialorder %v2350, 0.0
      %v2434 = vand.u32 %v2350, 2147483648
      %v2435 = vsel %vm2433, %v2434, %v2432
      %v2436 = vrsqrt.pop %v2351
      %v2437 = vmul.f32 %v2436, %v2351
      %v2438 = vmul.f32 %v2437, %v2436
      %v2439 = vmul.f32 0.5, %v2438
      %v2440 = vsub.f32 1.5, %v2439
      %v2441 = vmul.f32 %v2436, %v2440
      %v2442 = vmul.f32 %v2351, %v2441
      %vm2443 = vcmp.eq.f32.partialorder %v2351, inf
      %v2444 = vsel %vm2443, %v2351, %v2442
      %vm2445 = vcmp.eq.f32.partialorder %v2351, 0.0
      %v2446 = vand.u32 %v2351, 2147483648
      %v2447 = vsel %vm2445, %v2446, %v2444
      %v2448 = vmul.f32 %v2363, 8.0
      %v2449 = vmul.f32 %v2375, 8.0
      %v2450 = vmul.f32 %v2387, 8.0
      %v2451 = vmul.f32 %v2399, 8.0
      %v2452 = vmul.f32 %v2411, 8.0
      %v2453 = vmul.f32 %v2423, 8.0
      %v2454 = vmul.f32 %v2435, 8.0
      %v2455 = vmul.f32 %v2447, 8.0
      %v2456 = vadd.f32 %v2448, 1.0
      %v2457 = vadd.f32 %v2449, 1.0
      %v2458 = vadd.f32 %v2450, 1.0
      %v2459 = vadd.f32 %v2451, 1.0
      %v2460 = vadd.f32 %v2452, 1.0
      %v2461 = vadd.f32 %v2453, 1.0
      %v2462 = vadd.f32 %v2454, 1.0
      %v2463 = vadd.f32 %v2455, 1.0
      %v2464 = vlog2.pop %v2456
      %v2465 = vmul.f32 %v2464, 0.6931472
      %v2466 = vlog2.pop %v2457
      %v2467 = vmul.f32 %v2466, 0.6931472
      %v2468 = vlog2.pop %v2458
      %v2469 = vmul.f32 %v2468, 0.6931472
      %v2470 = vlog2.pop %v2459
      %v2471 = vmul.f32 %v2470, 0.6931472
      %v2472 = vlog2.pop %v2460
      %v2473 = vmul.f32 %v2472, 0.6931472
      %v2474 = vlog2.pop %v2461
      %v2475 = vmul.f32 %v2474, 0.6931472
      %v2476 = vlog2.pop %v2462
      %v2477 = vmul.f32 %v2476, 0.6931472
      %v2478 = vlog2.pop %v2463
      %v2479 = vmul.f32 %v2478, 0.6931472
      %v2480 = vld [vmem:[%s2] sm:$0xff]
      %v2481 = vld [vmem:[%s2 + $0x8] sm:$0xff]
      %v2482 = vld [vmem:[%s2 + $0x10] sm:$0xff]
      %v2483 = vld [vmem:[%s2 + $0x18] sm:$0xff]
      %v2484 = vld [vmem:[%s2 + $0x20] sm:$0xff]
      %v2485 = vld [vmem:[%s2 + $0x28] sm:$0xff]
      %v2486 = vld [vmem:[%s2 + $0x30] sm:$0xff]
      %v2487 = vld [vmem:[%s2 + $0x38] sm:$0xff]
      %v2488 = vld [vmem:[%s2 + $0x40] sm:$0xff]
      %v2489 = vld [vmem:[%s2 + $0x48] sm:$0xff]
      %v2490 = vld [vmem:[%s2 + $0x50] sm:$0xff]
      %v2491 = vld [vmem:[%s2 + $0x58] sm:$0xff]
      %v2492 = vld [vmem:[%s2 + $0x60] sm:$0xff]
      %v2493 = vld [vmem:[%s2 + $0x68] sm:$0xff]
      %v2494 = vld [vmem:[%s2 + $0x70] sm:$0xff]
      %v2495 = vld [vmem:[%s2 + $0x78] sm:$0xff]
      %v2496 = vld [vmem:[%s2 + $0x80] sm:$0xff]
      %v2497 = vld [vmem:[%s2 + $0x88] sm:$0xff]
      %v2498 = vld [vmem:[%s2 + $0x90] sm:$0xff]
      %v2499 = vld [vmem:[%s2 + $0x98] sm:$0xff]
      %v2500 = vld [vmem:[%s2 + $0xa0] sm:$0xff]
      %v2501 = vld [vmem:[%s2 + $0xa8] sm:$0xff]
      %v2502 = vld [vmem:[%s2 + $0xb0] sm:$0xff]
      %v2503 = vld [vmem:[%s2 + $0xb8] sm:$0xff]
      %v2504 = vld [vmem:[%s2 + $0xc0] sm:$0xff]
      %v2505 = vld [vmem:[%s2 + $0xc8] sm:$0xff]
      %v2506 = vld [vmem:[%s2 + $0xd0] sm:$0xff]
      %v2507 = vld [vmem:[%s2 + $0xd8] sm:$0xff]
      %v2508 = vld [vmem:[%s2 + $0xe0] sm:$0xff]
      %v2509 = vld [vmem:[%s2 + $0xe8] sm:$0xff]
      %v2510 = vld [vmem:[%s2 + $0xf0] sm:$0xff]
      %v2511 = vld [vmem:[%s2 + $0xf8] sm:$0xff]
      %vm2512 = vcmask 523264
      %v2514 = vsel %vm2512, %v2480, 0
      %v2517 = vsel %vm2512, %v2481, 0
      %v2520 = vsel %vm2512, %v2482, 0
      %v2523 = vsel %vm2512, %v2483, 0
      %v2526 = vsel %vm2512, %v2484, 0
      %v2529 = vsel %vm2512, %v2485, 0
      %v2532 = vsel %vm2512, %v2486, 0
      %v2535 = vsel %vm2512, %v2487, 0
      %v2538 = vsel %vm2512, %v2488, 0
      %v2541 = vsel %vm2512, %v2489, 0
      %v2544 = vsel %vm2512, %v2490, 0
      %v2547 = vsel %vm2512, %v2491, 0
      %v2550 = vsel %vm2512, %v2492, 0
      %v2553 = vsel %vm2512, %v2493, 0
      %v2556 = vsel %vm2512, %v2494, 0
      %v2559 = vsel %vm2512, %v2495, 0
      %v2562 = vsel %vm2512, %v2496, 0
      %v2565 = vsel %vm2512, %v2497, 0
      %v2568 = vsel %vm2512, %v2498, 0
      %v2571 = vsel %vm2512, %v2499, 0
      %v2574 = vsel %vm2512, %v2500, 0
      %v2577 = vsel %vm2512, %v2501, 0
      %v2580 = vsel %vm2512, %v2502, 0
      %v2583 = vsel %vm2512, %v2503, 0
      %v2586 = vsel %vm2512, %v2504, 0
      %v2589 = vsel %vm2512, %v2505, 0
      %v2592 = vsel %vm2512, %v2506, 0
      %v2595 = vsel %vm2512, %v2507, 0
      %v2598 = vsel %vm2512, %v2508, 0
      %v2601 = vsel %vm2512, %v2509, 0
      %v2604 = vsel %vm2512, %v2510, 0
      %v2607 = vsel %vm2512, %v2511, 0
      %2609 = vmatpush.msra.mxu0 0.0
      %2610 = vmatpush.msra.mxu0 0.0
      %2611 = vmatpush.msra.mxu0 0.0
      %2612 = vmatpush.msra.mxu0 0.0
      %2613 = vmatpush.msra.mxu0 0.0
      %2614 = vmatpush.msra.mxu0 0.0
      %2615 = vmatpush.msra.mxu0 0.0
      %2616 = vmatpush.msra.mxu0 0.0
      %2617 = vmatpush.msra.mxu0 %v2479
      %2618 = vmatpush.msra.mxu0 %v2477
      %2619 = vmatpush.msra.mxu0 %v2475
      %2620 = vmatpush.msra.mxu0 %v2473
      %2621 = vmatpush.msra.mxu0 %v2471
      %2622 = vmatpush.msra.mxu0 %v2469
      %2623 = vmatpush.msra.mxu0 %v2467
      %2624 = vmatpush.msra.mxu0 %v2465
      %2625 = vmatmul.f32.gmra.mxu0 %v2514
      %v2626 = vpop.f32.mrf.mxu0
      %v2627 = vadd.f32 0.0, %v2626
      %2628 = vmatmul.f32.gmra.mxu0 %v2517
      %v2629 = vpop.f32.mrf.mxu0
      %v2630 = vadd.f32 0.0, %v2629
      %2631 = vmatmul.f32.gmra.mxu0 %v2520
      %v2632 = vpop.f32.mrf.mxu0
      %v2633 = vadd.f32 0.0, %v2632
      %2634 = vmatmul.f32.gmra.mxu0 %v2523
      %v2635 = vpop.f32.mrf.mxu0
      %v2636 = vadd.f32 0.0, %v2635
      %2637 = vmatmul.f32.gmra.mxu0 %v2526
      %v2638 = vpop.f32.mrf.mxu0
      %v2639 = vadd.f32 0.0, %v2638
      %2640 = vmatmul.f32.gmra.mxu0 %v2529
      %v2641 = vpop.f32.mrf.mxu0
      %v2642 = vadd.f32 0.0, %v2641
      %2643 = vmatmul.f32.gmra.mxu0 %v2532
      %v2644 = vpop.f32.mrf.mxu0
      %v2645 = vadd.f32 0.0, %v2644
      %2646 = vmatmul.f32.gmra.mxu0 %v2535
      %v2647 = vpop.f32.mrf.mxu0
      %v2648 = vadd.f32 0.0, %v2647
      %2649 = vmatmul.f32.gmra.mxu0 %v2538
      %v2650 = vpop.f32.mrf.mxu0
      %v2651 = vadd.f32 0.0, %v2650
      %2652 = vmatmul.f32.gmra.mxu0 %v2541
      %v2653 = vpop.f32.mrf.mxu0
      %v2654 = vadd.f32 0.0, %v2653
      %2655 = vmatmul.f32.gmra.mxu0 %v2544
      %v2656 = vpop.f32.mrf.mxu0
      %v2657 = vadd.f32 0.0, %v2656
      %2658 = vmatmul.f32.gmra.mxu0 %v2547
      %v2659 = vpop.f32.mrf.mxu0
      %v2660 = vadd.f32 0.0, %v2659
      %2661 = vmatmul.f32.gmra.mxu0 %v2550
      %v2662 = vpop.f32.mrf.mxu0
      %v2663 = vadd.f32 0.0, %v2662
      %2664 = vmatmul.f32.gmra.mxu0 %v2553
      %v2665 = vpop.f32.mrf.mxu0
      %v2666 = vadd.f32 0.0, %v2665
      %2667 = vmatmul.f32.gmra.mxu0 %v2556
      %v2668 = vpop.f32.mrf.mxu0
      %v2669 = vadd.f32 0.0, %v2668
      %2670 = vmatmul.f32.gmra.mxu0 %v2559
      %v2671 = vpop.f32.mrf.mxu0
      %v2672 = vadd.f32 0.0, %v2671
      %2673 = vmatmul.f32.gmra.mxu0 %v2562
      %v2674 = vpop.f32.mrf.mxu0
      %v2675 = vadd.f32 0.0, %v2674
      %2676 = vmatmul.f32.gmra.mxu0 %v2565
      %v2677 = vpop.f32.mrf.mxu0
      %v2678 = vadd.f32 0.0, %v2677
      %2679 = vmatmul.f32.gmra.mxu0 %v2568
      %v2680 = vpop.f32.mrf.mxu0
      %v2681 = vadd.f32 0.0, %v2680
      %2682 = vmatmul.f32.gmra.mxu0 %v2571
      %v2683 = vpop.f32.mrf.mxu0
      %v2684 = vadd.f32 0.0, %v2683
      %2685 = vmatmul.f32.gmra.mxu0 %v2574
      %v2686 = vpop.f32.mrf.mxu0
      %v2687 = vadd.f32 0.0, %v2686
      %2688 = vmatmul.f32.gmra.mxu0 %v2577
      %v2689 = vpop.f32.mrf.mxu0
      %v2690 = vadd.f32 0.0, %v2689
      %2691 = vmatmul.f32.gmra.mxu0 %v2580
      %v2692 = vpop.f32.mrf.mxu0
      %v2693 = vadd.f32 0.0, %v2692
      %2694 = vmatmul.f32.gmra.mxu0 %v2583
      %v2695 = vpop.f32.mrf.mxu0
      %v2696 = vadd.f32 0.0, %v2695
      %2697 = vmatmul.f32.gmra.mxu0 %v2586
      %v2698 = vpop.f32.mrf.mxu0
      %v2699 = vadd.f32 0.0, %v2698
      %2700 = vmatmul.f32.gmra.mxu0 %v2589
      %v2701 = vpop.f32.mrf.mxu0
      %v2702 = vadd.f32 0.0, %v2701
      %2703 = vmatmul.f32.gmra.mxu0 %v2592
      %v2704 = vpop.f32.mrf.mxu0
      %v2705 = vadd.f32 0.0, %v2704
      %2706 = vmatmul.f32.gmra.mxu0 %v2595
      %v2707 = vpop.f32.mrf.mxu0
      %v2708 = vadd.f32 0.0, %v2707
      %2709 = vmatmul.f32.gmra.mxu0 %v2598
      %v2710 = vpop.f32.mrf.mxu0
      %v2711 = vadd.f32 0.0, %v2710
      %2712 = vmatmul.f32.gmra.mxu0 %v2601
      %v2713 = vpop.f32.mrf.mxu0
      %v2714 = vadd.f32 0.0, %v2713
      %2715 = vmatmul.f32.gmra.mxu0 %v2604
      %v2716 = vpop.f32.mrf.mxu0
      %v2717 = vadd.f32 0.0, %v2716
      %2718 = vmatmul.f32.gmra.mxu0 %v2607
      %v2719 = vpop.f32.mrf.mxu0
      %v2720 = vadd.f32 0.0, %v2719
      %2721 = vdwg.mxu0
      %v2722 = vld [vmem:[%s3] sm:$0xff]
      %v2723 = vld [vmem:[%s3 + $0x8] sm:$0xff]
      %v2724 = vld [vmem:[%s3 + $0x10] sm:$0xff]
      %v2725 = vld [vmem:[%s3 + $0x18] sm:$0xff]
      %v2726 = vld [vmem:[%s3 + $0x20] sm:$0xff]
      %v2727 = vld [vmem:[%s3 + $0x28] sm:$0xff]
      %v2728 = vld [vmem:[%s3 + $0x30] sm:$0xff]
      %v2729 = vld [vmem:[%s3 + $0x38] sm:$0xff]
      %v2730 = vld [vmem:[%s3 + $0x40] sm:$0xff]
      %v2731 = vld [vmem:[%s3 + $0x48] sm:$0xff]
      %v2732 = vld [vmem:[%s3 + $0x50] sm:$0xff]
      %v2733 = vld [vmem:[%s3 + $0x58] sm:$0xff]
      %v2734 = vld [vmem:[%s3 + $0x60] sm:$0xff]
      %v2735 = vld [vmem:[%s3 + $0x68] sm:$0xff]
      %v2736 = vld [vmem:[%s3 + $0x70] sm:$0xff]
      %v2737 = vld [vmem:[%s3 + $0x78] sm:$0xff]
      %v2739 = vsel %vm2512, %v2627, 0
      %v2742 = vsel %vm2512, %v2630, 0
      %v2745 = vsel %vm2512, %v2633, 0
      %v2748 = vsel %vm2512, %v2636, 0
      %v2751 = vsel %vm2512, %v2639, 0
      %v2754 = vsel %vm2512, %v2642, 0
      %v2757 = vsel %vm2512, %v2645, 0
      %v2760 = vsel %vm2512, %v2648, 0
      %v2763 = vsel %vm2512, %v2651, 0
      %v2766 = vsel %vm2512, %v2654, 0
      %v2769 = vsel %vm2512, %v2657, 0
      %v2772 = vsel %vm2512, %v2660, 0
      %v2775 = vsel %vm2512, %v2663, 0
      %v2778 = vsel %vm2512, %v2666, 0
      %v2781 = vsel %vm2512, %v2669, 0
      %v2784 = vsel %vm2512, %v2672, 0
      %v2787 = vsel %vm2512, %v2675, 0
      %v2790 = vsel %vm2512, %v2678, 0
      %v2793 = vsel %vm2512, %v2681, 0
      %v2796 = vsel %vm2512, %v2684, 0
      %v2799 = vsel %vm2512, %v2687, 0
      %v2802 = vsel %vm2512, %v2690, 0
      %v2805 = vsel %vm2512, %v2693, 0
      %v2808 = vsel %vm2512, %v2696, 0
      %v2811 = vsel %vm2512, %v2699, 0
      %v2814 = vsel %vm2512, %v2702, 0
      %v2817 = vsel %vm2512, %v2705, 0
      %v2820 = vsel %vm2512, %v2708, 0
      %v2823 = vsel %vm2512, %v2711, 0
      %v2826 = vsel %vm2512, %v2714, 0
      %v2829 = vsel %vm2512, %v2717, 0
      %v2832 = vsel %vm2512, %v2720, 0
      %2834 = vmatpush.msra.mxu0 0.0
      %2835 = vmatpush.msra.mxu0 0.0
      %2836 = vmatpush.msra.mxu0 0.0
      %2837 = vmatpush.msra.mxu0 0.0
      %2838 = vmatpush.msra.mxu0 0.0
      %2839 = vmatpush.msra.mxu0 0.0
      %2840 = vmatpush.msra.mxu0 0.0
      %2841 = vmatpush.msra.mxu0 0.0
      %2842 = vmatpush.msra.mxu0 %v2736
      %2843 = vmatpush.msra.mxu0 %v2734
      %2844 = vmatpush.msra.mxu0 %v2732
      %2845 = vmatpush.msra.mxu0 %v2730
      %2846 = vmatpush.msra.mxu0 %v2728
      %2847 = vmatpush.msra.mxu0 %v2726
      %2848 = vmatpush.msra.mxu0 %v2724
      %2849 = vmatpush.msra.mxu0 %v2722
      %2850 = vmatmul.f32.gmra.mxu0 %v2739
      %v2851 = vpop.f32.mrf.mxu0
      %v2852 = vadd.f32 0.0, %v2851
      %2853 = vmatmul.f32.gmra.mxu0 %v2742
      %v2854 = vpop.f32.mrf.mxu0
      %v2855 = vadd.f32 0.0, %v2854
      %2856 = vmatmul.f32.gmra.mxu0 %v2745
      %v2857 = vpop.f32.mrf.mxu0
      %v2858 = vadd.f32 0.0, %v2857
      %2859 = vmatmul.f32.gmra.mxu0 %v2748
      %v2860 = vpop.f32.mrf.mxu0
      %v2861 = vadd.f32 0.0, %v2860
      %2862 = vmatmul.f32.gmra.mxu0 %v2751
      %v2863 = vpop.f32.mrf.mxu0
      %v2864 = vadd.f32 0.0, %v2863
      %2865 = vmatmul.f32.gmra.mxu0 %v2754
      %v2866 = vpop.f32.mrf.mxu0
      %v2867 = vadd.f32 0.0, %v2866
      %2868 = vmatmul.f32.gmra.mxu0 %v2757
      %v2869 = vpop.f32.mrf.mxu0
      %v2870 = vadd.f32 0.0, %v2869
      %2871 = vmatmul.f32.gmra.mxu0 %v2760
      %v2872 = vpop.f32.mrf.mxu0
      %v2873 = vadd.f32 0.0, %v2872
      %2874 = vmatmul.f32.gmra.mxu0 %v2763
      %v2875 = vpop.f32.mrf.mxu0
      %v2876 = vadd.f32 0.0, %v2875
      %2877 = vmatmul.f32.gmra.mxu0 %v2766
      %v2878 = vpop.f32.mrf.mxu0
      %v2879 = vadd.f32 0.0, %v2878
      %2880 = vmatmul.f32.gmra.mxu0 %v2769
      %v2881 = vpop.f32.mrf.mxu0
      %v2882 = vadd.f32 0.0, %v2881
      %2883 = vmatmul.f32.gmra.mxu0 %v2772
      %v2884 = vpop.f32.mrf.mxu0
      %v2885 = vadd.f32 0.0, %v2884
      %2886 = vmatmul.f32.gmra.mxu0 %v2775
      %v2887 = vpop.f32.mrf.mxu0
      %v2888 = vadd.f32 0.0, %v2887
      %2889 = vmatmul.f32.gmra.mxu0 %v2778
      %v2890 = vpop.f32.mrf.mxu0
      %v2891 = vadd.f32 0.0, %v2890
      %2892 = vmatmul.f32.gmra.mxu0 %v2781
      %v2893 = vpop.f32.mrf.mxu0
      %v2894 = vadd.f32 0.0, %v2893
      %2895 = vmatmul.f32.gmra.mxu0 %v2784
      %v2896 = vpop.f32.mrf.mxu0
      %v2897 = vadd.f32 0.0, %v2896
      %2898 = vmatmul.f32.gmra.mxu0 %v2787
      %v2899 = vpop.f32.mrf.mxu0
      %v2900 = vadd.f32 0.0, %v2899
      %2901 = vmatmul.f32.gmra.mxu0 %v2790
      %v2902 = vpop.f32.mrf.mxu0
      %v2903 = vadd.f32 0.0, %v2902
      %2904 = vmatmul.f32.gmra.mxu0 %v2793
      %v2905 = vpop.f32.mrf.mxu0
      %v2906 = vadd.f32 0.0, %v2905
      %2907 = vmatmul.f32.gmra.mxu0 %v2796
      %v2908 = vpop.f32.mrf.mxu0
      %v2909 = vadd.f32 0.0, %v2908
      %2910 = vmatmul.f32.gmra.mxu0 %v2799
      %v2911 = vpop.f32.mrf.mxu0
      %v2912 = vadd.f32 0.0, %v2911
      %2913 = vmatmul.f32.gmra.mxu0 %v2802
      %v2914 = vpop.f32.mrf.mxu0
      %v2915 = vadd.f32 0.0, %v2914
      %2916 = vmatmul.f32.gmra.mxu0 %v2805
      %v2917 = vpop.f32.mrf.mxu0
      %v2918 = vadd.f32 0.0, %v2917
      %2919 = vmatmul.f32.gmra.mxu0 %v2808
      %v2920 = vpop.f32.mrf.mxu0
      %v2921 = vadd.f32 0.0, %v2920
      %2922 = vmatmul.f32.gmra.mxu0 %v2811
      %v2923 = vpop.f32.mrf.mxu0
      %v2924 = vadd.f32 0.0, %v2923
      %2925 = vmatmul.f32.gmra.mxu0 %v2814
      %v2926 = vpop.f32.mrf.mxu0
      %v2927 = vadd.f32 0.0, %v2926
      %2928 = vmatmul.f32.gmra.mxu0 %v2817
      %v2929 = vpop.f32.mrf.mxu0
      %v2930 = vadd.f32 0.0, %v2929
      %2931 = vmatmul.f32.gmra.mxu0 %v2820
      %v2932 = vpop.f32.mrf.mxu0
      %v2933 = vadd.f32 0.0, %v2932
      %2934 = vmatmul.f32.gmra.mxu0 %v2823
      %v2935 = vpop.f32.mrf.mxu0
      %v2936 = vadd.f32 0.0, %v2935
      %2937 = vmatmul.f32.gmra.mxu0 %v2826
      %v2938 = vpop.f32.mrf.mxu0
      %v2939 = vadd.f32 0.0, %v2938
      %2940 = vmatmul.f32.gmra.mxu0 %v2829
      %v2941 = vpop.f32.mrf.mxu0
      %v2942 = vadd.f32 0.0, %v2941
      %2943 = vmatmul.f32.gmra.mxu0 %v2832
      %v2944 = vpop.f32.mrf.mxu0
      %v2945 = vadd.f32 0.0, %v2944
      %2946 = vdwg.mxu0
      %2947 = vmatpush.msra.mxu0 0.0
      %2948 = vmatpush.msra.mxu0 0.0
      %2949 = vmatpush.msra.mxu0 0.0
      %2950 = vmatpush.msra.mxu0 0.0
      %2951 = vmatpush.msra.mxu0 0.0
      %2952 = vmatpush.msra.mxu0 0.0
      %2953 = vmatpush.msra.mxu0 0.0
      %2954 = vmatpush.msra.mxu0 0.0
      %2955 = vmatpush.msra.mxu0 %v2737
      %2956 = vmatpush.msra.mxu0 %v2735
      %2957 = vmatpush.msra.mxu0 %v2733
      %2958 = vmatpush.msra.mxu0 %v2731
      %2959 = vmatpush.msra.mxu0 %v2729
      %2960 = vmatpush.msra.mxu0 %v2727
      %2961 = vmatpush.msra.mxu0 %v2725
      %2962 = vmatpush.msra.mxu0 %v2723
      %2963 = vmatmul.f32.gmra.mxu0 %v2739
      %v2964 = vpop.f32.mrf.mxu0
      %v2965 = vadd.f32 0.0, %v2964
      %2966 = vmatmul.f32.gmra.mxu0 %v2742
      %v2967 = vpop.f32.mrf.mxu0
      %v2968 = vadd.f32 0.0, %v2967
      %2969 = vmatmul.f32.gmra.mxu0 %v2745
      %v2970 = vpop.f32.mrf.mxu0
      %v2971 = vadd.f32 0.0, %v2970
      %2972 = vmatmul.f32.gmra.mxu0 %v2748
      %v2973 = vpop.f32.mrf.mxu0
      %v2974 = vadd.f32 0.0, %v2973
      %2975 = vmatmul.f32.gmra.mxu0 %v2751
      %v2976 = vpop.f32.mrf.mxu0
      %v2977 = vadd.f32 0.0, %v2976
      %2978 = vmatmul.f32.gmra.mxu0 %v2754
      %v2979 = vpop.f32.mrf.mxu0
      %v2980 = vadd.f32 0.0, %v2979
      %2981 = vmatmul.f32.gmra.mxu0 %v2757
      %v2982 = vpop.f32.mrf.mxu0
      %v2983 = vadd.f32 0.0, %v2982
      %2984 = vmatmul.f32.gmra.mxu0 %v2760
      %v2985 = vpop.f32.mrf.mxu0
      %v2986 = vadd.f32 0.0, %v2985
      %2987 = vmatmul.f32.gmra.mxu0 %v2763
      %v2988 = vpop.f32.mrf.mxu0
      %v2989 = vadd.f32 0.0, %v2988
      %2990 = vmatmul.f32.gmra.mxu0 %v2766
      %v2991 = vpop.f32.mrf.mxu0
      %v2992 = vadd.f32 0.0, %v2991
      %2993 = vmatmul.f32.gmra.mxu0 %v2769
      %v2994 = vpop.f32.mrf.mxu0
      %v2995 = vadd.f32 0.0, %v2994
      %2996 = vmatmul.f32.gmra.mxu0 %v2772
      %v2997 = vpop.f32.mrf.mxu0
      %v2998 = vadd.f32 0.0, %v2997
      %2999 = vmatmul.f32.gmra.mxu0 %v2775
      %v3000 = vpop.f32.mrf.mxu0
      %v3001 = vadd.f32 0.0, %v3000
      %3002 = vmatmul.f32.gmra.mxu0 %v2778
      %v3003 = vpop.f32.mrf.mxu0
      %v3004 = vadd.f32 0.0, %v3003
      %3005 = vmatmul.f32.gmra.mxu0 %v2781
      %v3006 = vpop.f32.mrf.mxu0
      %v3007 = vadd.f32 0.0, %v3006
      %3008 = vmatmul.f32.gmra.mxu0 %v2784
      %v3009 = vpop.f32.mrf.mxu0
      %v3010 = vadd.f32 0.0, %v3009
      %3011 = vmatmul.f32.gmra.mxu0 %v2787
      %v3012 = vpop.f32.mrf.mxu0
      %v3013 = vadd.f32 0.0, %v3012
      %3014 = vmatmul.f32.gmra.mxu0 %v2790
      %v3015 = vpop.f32.mrf.mxu0
      %v3016 = vadd.f32 0.0, %v3015
      %3017 = vmatmul.f32.gmra.mxu0 %v2793
      %v3018 = vpop.f32.mrf.mxu0
      %v3019 = vadd.f32 0.0, %v3018
      %3020 = vmatmul.f32.gmra.mxu0 %v2796
      %v3021 = vpop.f32.mrf.mxu0
      %v3022 = vadd.f32 0.0, %v3021
      %3023 = vmatmul.f32.gmra.mxu0 %v2799
      %v3024 = vpop.f32.mrf.mxu0
      %v3025 = vadd.f32 0.0, %v3024
      %3026 = vmatmul.f32.gmra.mxu0 %v2802
      %v3027 = vpop.f32.mrf.mxu0
      %v3028 = vadd.f32 0.0, %v3027
      %3029 = vmatmul.f32.gmra.mxu0 %v2805
      %v3030 = vpop.f32.mrf.mxu0
      %v3031 = vadd.f32 0.0, %v3030
      %3032 = vmatmul.f32.gmra.mxu0 %v2808
      %v3033 = vpop.f32.mrf.mxu0
      %v3034 = vadd.f32 0.0, %v3033
      %3035 = vmatmul.f32.gmra.mxu0 %v2811
      %v3036 = vpop.f32.mrf.mxu0
      %v3037 = vadd.f32 0.0, %v3036
      %3038 = vmatmul.f32.gmra.mxu0 %v2814
      %v3039 = vpop.f32.mrf.mxu0
      %v3040 = vadd.f32 0.0, %v3039
      %3041 = vmatmul.f32.gmra.mxu0 %v2817
      %v3042 = vpop.f32.mrf.mxu0
      %v3043 = vadd.f32 0.0, %v3042
      %3044 = vmatmul.f32.gmra.mxu0 %v2820
      %v3045 = vpop.f32.mrf.mxu0
      %v3046 = vadd.f32 0.0, %v3045
      %3047 = vmatmul.f32.gmra.mxu0 %v2823
      %v3048 = vpop.f32.mrf.mxu0
      %v3049 = vadd.f32 0.0, %v3048
      %3050 = vmatmul.f32.gmra.mxu0 %v2826
      %v3051 = vpop.f32.mrf.mxu0
      %v3052 = vadd.f32 0.0, %v3051
      %3053 = vmatmul.f32.gmra.mxu0 %v2829
      %v3054 = vpop.f32.mrf.mxu0
      %v3055 = vadd.f32 0.0, %v3054
      %3056 = vmatmul.f32.gmra.mxu0 %v2832
      %v3057 = vpop.f32.mrf.mxu0
      %v3058 = vadd.f32 0.0, %v3057
      %3059 = vdwg.mxu0
      %3060 = vst [vmem:[%s197] sm:$0xff] %v2852
      %3061 = vst [vmem:[%s197 + $0x8] sm:$0xff] %v2965
      %3062 = vst [vmem:[%s197 + $0x10] sm:$0xff] %v2855
      %3063 = vst [vmem:[%s197 + $0x18] sm:$0xff] %v2968
      %3064 = vst [vmem:[%s197 + $0x20] sm:$0xff] %v2858
      %3065 = vst [vmem:[%s197 + $0x28] sm:$0xff] %v2971
      %3066 = vst [vmem:[%s197 + $0x30] sm:$0xff] %v2861
      %3067 = vst [vmem:[%s197 + $0x38] sm:$0xff] %v2974
      %3068 = vst [vmem:[%s197 + $0x40] sm:$0xff] %v2864
      %3069 = vst [vmem:[%s197 + $0x48] sm:$0xff] %v2977
      %3070 = vst [vmem:[%s197 + $0x50] sm:$0xff] %v2867
      %3071 = vst [vmem:[%s197 + $0x58] sm:$0xff] %v2980
      %3072 = vst [vmem:[%s197 + $0x60] sm:$0xff] %v2870
      %3073 = vst [vmem:[%s197 + $0x68] sm:$0xff] %v2983
      %3074 = vst [vmem:[%s197 + $0x70] sm:$0xff] %v2873
      %3075 = vst [vmem:[%s197 + $0x78] sm:$0xff] %v2986
      %3076 = vst [vmem:[%s197 + $0x80] sm:$0xff] %v2876
      %3077 = vst [vmem:[%s197 + $0x88] sm:$0xff] %v2989
      %3078 = vst [vmem:[%s197 + $0x90] sm:$0xff] %v2879
      %3079 = vst [vmem:[%s197 + $0x98] sm:$0xff] %v2992
      %3080 = vst [vmem:[%s197 + $0xa0] sm:$0xff] %v2882
      %3081 = vst [vmem:[%s197 + $0xa8] sm:$0xff] %v2995
      %3082 = vst [vmem:[%s197 + $0xb0] sm:$0xff] %v2885
      %3083 = vst [vmem:[%s197 + $0xb8] sm:$0xff] %v2998
      %3084 = vst [vmem:[%s197 + $0xc0] sm:$0xff] %v2888
      %3085 = vst [vmem:[%s197 + $0xc8] sm:$0xff] %v3001
      %3086 = vst [vmem:[%s197 + $0xd0] sm:$0xff] %v2891
      %3087 = vst [vmem:[%s197 + $0xd8] sm:$0xff] %v3004
      %3088 = vst [vmem:[%s197 + $0xe0] sm:$0xff] %v2894
      %3089 = vst [vmem:[%s197 + $0xe8] sm:$0xff] %v3007
      %3090 = vst [vmem:[%s197 + $0xf0] sm:$0xff] %v2897
      %3091 = vst [vmem:[%s197 + $0xf8] sm:$0xff] %v3010
      %3092 = vst [vmem:[%s197 + $0x100] sm:$0xff] %v2900
      %3093 = vst [vmem:[%s197 + $0x108] sm:$0xff] %v3013
      %3094 = vst [vmem:[%s197 + $0x110] sm:$0xff] %v2903
      %3095 = vst [vmem:[%s197 + $0x118] sm:$0xff] %v3016
      %3096 = vst [vmem:[%s197 + $0x120] sm:$0xff] %v2906
      %3097 = vst [vmem:[%s197 + $0x128] sm:$0xff] %v3019
      %3098 = vst [vmem:[%s197 + $0x130] sm:$0xff] %v2909
      %3099 = vst [vmem:[%s197 + $0x138] sm:$0xff] %v3022
      %3100 = vst [vmem:[%s197 + $0x140] sm:$0xff] %v2912
      %3101 = vst [vmem:[%s197 + $0x148] sm:$0xff] %v3025
      %3102 = vst [vmem:[%s197 + $0x150] sm:$0xff] %v2915
      %3103 = vst [vmem:[%s197 + $0x158] sm:$0xff] %v3028
      %3104 = vst [vmem:[%s197 + $0x160] sm:$0xff] %v2918
      %3105 = vst [vmem:[%s197 + $0x168] sm:$0xff] %v3031
      %3106 = vst [vmem:[%s197 + $0x170] sm:$0xff] %v2921
      %3107 = vst [vmem:[%s197 + $0x178] sm:$0xff] %v3034
      %3108 = vst [vmem:[%s197 + $0x180] sm:$0xff] %v2924
      %3109 = vst [vmem:[%s197 + $0x188] sm:$0xff] %v3037
      %3110 = vst [vmem:[%s197 + $0x190] sm:$0xff] %v2927
      %3111 = vst [vmem:[%s197 + $0x198] sm:$0xff] %v3040
      %3112 = vst [vmem:[%s197 + $0x1a0] sm:$0xff] %v2930
      %3113 = vst [vmem:[%s197 + $0x1a8] sm:$0xff] %v3043
      %3114 = vst [vmem:[%s197 + $0x1b0] sm:$0xff] %v2933
      %3115 = vst [vmem:[%s197 + $0x1b8] sm:$0xff] %v3046
      %3116 = vst [vmem:[%s197 + $0x1c0] sm:$0xff] %v2936
      %3117 = vst [vmem:[%s197 + $0x1c8] sm:$0xff] %v3049
      %3118 = vst [vmem:[%s197 + $0x1d0] sm:$0xff] %v2939
      %3119 = vst [vmem:[%s197 + $0x1d8] sm:$0xff] %v3052
      %3120 = vst [vmem:[%s197 + $0x1e0] sm:$0xff] %v2942
      %3121 = vst [vmem:[%s197 + $0x1e8] sm:$0xff] %v3055
      %3122 = vst [vmem:[%s197 + $0x1f0] sm:$0xff] %v2945
      %3123 = vst [vmem:[%s197 + $0x1f8] sm:$0xff] %v3058
      %p3124 = scmp.lt.s32.totalorder %s15, 7
      %s3125 = scalar_select %p3124, %s15, 7
      %s3126 = smul.addr %s3125, 64
      %s3127 = smul.addr %s3126, 8
      %s3128 = scalar_lea.vmem %s4, %s3127
      // Predicated region
      $region37: #{forward.2} parent=35 // pred_check
        %p3129 = pneg %p122
      $region38: #{forward.2} parent=35 // pred_check_branch
        %3131 = sbr.rel (%p3129) target = $region40
      $region39: #{forward.2} parent=35 // pred_region
        _
      $region40: #{forward.2} parent=35 // pred_fallthru
        _
    $region36: #{forward.2} parent=5 // pred_fallthru
      _
    %p3132 = scmp.le.s32.totalorder 2, %s10
    // Predicated region
    $region41: #{forward.2} parent=5 // pred_check
      %p3133 = pneg %p3132
    $region42: #{forward.2} parent=5 // pred_check_branch
      %3135 = sbr.rel (%p3133) target = $region44
    $region43: #{forward.2} parent=5 // pred_region
      %s3136 = ssub.s32 %s10, 2
      // Predicated region
      $region45: #{forward.2} parent=43 // pred_check
        %p3137 = pneg %p128
      $region46: #{forward.2} parent=43 // pred_check_branch
        %3139 = sbr.rel (%p3137) target = $region48
      $region47: #{forward.2} parent=43 // pred_region
        %p3140 = scmp.lt.s32.totalorder %s16, 7
        %s3141 = scalar_select %p3140, %s16, 7
        %s3142 = smul.addr %s3141, 64
        %s3143 = smul.addr %s3142, 8
        %s3144 = scalar_lea.vmem %s4, %s3143
      $region48: #{forward.2} parent=43 // pred_fallthru
        _
    $region44: #{forward.2} parent=5 // pred_fallthru
      _
  $region6: #{forward.2} parent=0 // loop_footer
    %s14 = sadd.s32 1, %s10
  $region7: #{forward.2} parent=0 // loop_footer_branch
    %9 = sbr.rel target = $region3
  $region8: #{forward.2} parent=0 // loop_exit
    _

// kernel: forward.3
$region0: #{forward.3}
  #allocation0 [shape = 'u32[]', space=smem, size = 0x4, offset = 0x4, fixed_abs, tag = 'smem constant byte address 0x4 - core index']
  #allocation1 [shape = 'u32[72,128]{1,0:T(1,128)}', space=vmem, size = 0x9000, scoped, tag = 'internal scratch']
  #allocation2 [shape = 'f32[1,1]{1,0:T(1,128)S(1)}', space=vmem, size = 0x200, scoped, tag = 'scoped memory for forward.3']
  %s0 = inlined_call_operand.vmem [shape: f32[2,128,4096], index: 0, kind: input, shape index: {}]
  %s1 = inlined_call_operand.vmem [shape: f32[1,4096], index: 1, kind: input, shape index: {}]
  %s2 = inlined_call_operand.vmem [shape: f32[1,4096], index: 2, kind: input, shape index: {}]
  %s3 = inlined_call_operand.<no memory space> [shape: f32[1,1], index: 3, kind: input, shape index: {}]
  %s4 = inlined_call_operand.vmem [shape: f32[2,1,1], index: 4, kind: output, shape index: {}]
  %s5 = sld [smem:[#allocation0]]
  $region49: #{forward.3} parent=0
    _
  %s7 = ssub.s32 1, %s5
  %s8 = scalar_select 0, %s7, %s5
  %v9 = vstv %s3
  %10 = vst [vmem:[#allocation2] sm:$0x1] %v9
  loop: start=0, step=1, limit=4
  $region2: #{forward.3} parent=0 // loop_pre_header
    _
  $region3: #{forward.3} parent=0 // loop_header
    %s12 = sphi 0, %s16
    %p13 = scmp.ge.s32.totalorder %s12, 4
    %s22 = sphi 0, %s24
    %s25 = sphi 0, %s22
    %s26 = sphi 0, %s25
    %s42 = sphi 0, %s26
    %s46 = sphi 0, %s46
    %s48 = sphi 0, %s46
    %s49 = sphi 0, %s48
    %s63 = sphi 0, %s49
    %s67 = sphi 0, %s67
    %s69 = sphi 0, %s67
    %s70 = sphi 0, %s69
    %s84 = sphi 0, %s70
    %s88 = sphi 0, %s88
    %s90 = sphi 0, %s88
    %s91 = sphi 0, %s90
    %s105 = sphi 0, %s91
    %s111 = sphi 0, %s113
    %s114 = sphi 0, %s111
    %s115 = sphi 0, %s114
    %s131 = sphi 0, %s115
  $region4: #{forward.3} parent=0 // loop_header_branch
    %15 = sbr.rel (%p13) target = $region8
  $region5: #{forward.3} parent=0 // loop_body
    %s17 = ssub.s32 %s12, 1
    %s18 = ssub.s32 %s12, 2
    %s19 = sadd.s32 %s12, 1
    %s20 = ssub.s32 %s12, %s19
    %p21 = scmp.eq.s32.totalorder %s20, 0
    %s23 = sadd.s32 %s22, 1
    %s24 = scalar_select %p21, %s22, %s23
    %p27 = pneg %p21
    %p28 = scmp.eq.s32.totalorder %s12, 1
    %p29 = por %p27, %p28
    %p30 = scmp.ne.s32.totalorder %s22, %s25
    %p31 = scmp.eq.s32.totalorder %s12, 0
    %p32 = por %p30, %p31
    %p33 = scmp.ne.s32.totalorder %s22, %s25
    %p34 = scmp.eq.s32.totalorder %s17, 1
    %p35 = por %p33, %p34
    %p36 = scmp.ne.s32.totalorder %s25, %s26
    %p37 = scmp.eq.s32.totalorder %s17, 0
    %p38 = por %p36, %p37
    %p39 = scmp.ne.s32.totalorder %s25, %s26
    %p40 = scmp.eq.s32.totalorder %s18, 1
    %p41 = por %p39, %p40
    %p43 = scmp.ne.s32.totalorder %s26, %s42
    %p44 = scmp.eq.s32.totalorder %s18, 0
    %p45 = por %p43, %p44
    %s47 = sadd.s32 %s46, 1
    %p50 = scmp.eq.s32.totalorder %s12, 1
    %p51 = scmp.ne.s32.totalorder %s46, %s48
    %p52 = scmp.eq.s32.totalorder %s12, 0
    %p53 = por %p51, %p52
    %p54 = scmp.ne.s32.totalorder %s46, %s48
    %p55 = scmp.eq.s32.totalorder %s17, 1
    %p56 = por %p54, %p55
    %p57 = scmp.ne.s32.totalorder %s48, %s49
    %p58 = scmp.eq.s32.totalorder %s17, 0
    %p59 = por %p57, %p58
    %p60 = scmp.ne.s32.totalorder %s48, %s49
    %p61 = scmp.eq.s32.totalorder %s18, 1
    %p62 = por %p60, %p61
    %p64 = scmp.ne.s32.totalorder %s49, %s63
    %p65 = scmp.eq.s32.totalorder %s18, 0
    %p66 = por %p64, %p65
    %s68 = sadd.s32 %s67, 1
    %p71 = scmp.eq.s32.totalorder %s12, 1
    %p72 = scmp.ne.s32.totalorder %s67, %s69
    %p73 = scmp.eq.s32.totalorder %s12, 0
    %p74 = por %p72, %p73
    %p75 = scmp.ne.s32.totalorder %s67, %s69
    %p76 = scmp.eq.s32.totalorder %s17, 1
    %p77 = por %p75, %p76
    %p78 = scmp.ne.s32.totalorder %s69, %s70
    %p79 = scmp.eq.s32.totalorder %s17, 0
    %p80 = por %p78, %p79
    %p81 = scmp.ne.s32.totalorder %s69, %s70
    %p82 = scmp.eq.s32.totalorder %s18, 1
    %p83 = por %p81, %p82
    %p85 = scmp.ne.s32.totalorder %s70, %s84
    %p86 = scmp.eq.s32.totalorder %s18, 0
    %p87 = por %p85, %p86
    %s89 = sadd.s32 %s88, 1
    %p92 = scmp.eq.s32.totalorder %s12, 1
    %p93 = scmp.ne.s32.totalorder %s88, %s90
    %p94 = scmp.eq.s32.totalorder %s12, 0
    %p95 = por %p93, %p94
    %p96 = scmp.ne.s32.totalorder %s88, %s90
    %p97 = scmp.eq.s32.totalorder %s17, 1
    %p98 = por %p96, %p97
    %p99 = scmp.ne.s32.totalorder %s90, %s91
    %p100 = scmp.eq.s32.totalorder %s17, 0
    %p101 = por %p99, %p100
    %p102 = scmp.ne.s32.totalorder %s90, %s91
    %p103 = scmp.eq.s32.totalorder %s18, 1
    %p104 = por %p102, %p103
    %p106 = scmp.ne.s32.totalorder %s91, %s105
    %p107 = scmp.eq.s32.totalorder %s18, 0
    %p108 = por %p106, %p107
    %s109 = ssub.s32 %s12, %s19
    %p110 = scmp.eq.s32.totalorder %s109, 0
    %s112 = sadd.s32 %s111, 1
    %s113 = scalar_select %p110, %s111, %s112
    %p116 = pneg %p110
    %p117 = scmp.eq.s32.totalorder %s12, 1
    %p118 = por %p116, %p117
    %p119 = scmp.ne.s32.totalorder %s111, %s114
    %p120 = scmp.eq.s32.totalorder %s12, 0
    %p121 = por %p119, %p120
    %p122 = scmp.ne.s32.totalorder %s111, %s114
    %p123 = scmp.eq.s32.totalorder %s17, 1
    %p124 = por %p122, %p123
    %p125 = scmp.ne.s32.totalorder %s114, %s115
    %p126 = scmp.eq.s32.totalorder %s17, 0
    %p127 = por %p125, %p126
    %p128 = scmp.ne.s32.totalorder %s114, %s115
    %p129 = scmp.eq.s32.totalorder %s18, 1
    %p130 = por %p128, %p129
    %p132 = scmp.ne.s32.totalorder %s115, %s131
    %p133 = scmp.eq.s32.totalorder %s18, 0
    %p134 = por %p132, %p133
    %p135 = scmp.le.s32.totalorder 1, %s12
    %p136 = scmp.lt.s32.totalorder %s12, 3
    %p137 = pnand %p135, %p136
    %p138 = pneg %p137
    // Predicated region
    $region9: #{forward.3} parent=5 // pred_check
      _
    $region10: #{forward.3} parent=5 // pred_check_branch
      %140 = sbr.rel (%p137) target = $region12
    $region11: #{forward.3} parent=5 // pred_region
      %s141 = ssub.s32 %s12, 1
      // Predicated region
      $region13: #{forward.3} parent=11 // pred_check
        %p142 = pneg %p59
      $region14: #{forward.3} parent=11 // pred_check_branch
        %144 = sbr.rel (%p142) target = $region16
      $region15: #{forward.3} parent=11 // pred_region
        _
      $region16: #{forward.3} parent=11 // pred_fallthru
        _
      // Predicated region
      $region17: #{forward.3} parent=11 // pred_check
        %p145 = pneg %p80
      $region18: #{forward.3} parent=11 // pred_check_branch
        %147 = sbr.rel (%p145) target = $region20
      $region19: #{forward.3} parent=11 // pred_region
        _
      $region20: #{forward.3} parent=11 // pred_fallthru
        _
      // Predicated region
      $region21: #{forward.3} parent=11 // pred_check
        %p148 = pneg %p101
      $region22: #{forward.3} parent=11 // pred_check_branch
        %150 = sbr.rel (%p148) target = $region24
      $region23: #{forward.3} parent=11 // pred_region
        _
      $region24: #{forward.3} parent=11 // pred_fallthru
        _
    $region12: #{forward.3} parent=5 // pred_fallthru
      _
    %p151 = scmp.lt.s32.totalorder %s12, 2
    // Predicated region
    $region25: #{forward.3} parent=5 // pred_check
      %p152 = pneg %p151
    $region26: #{forward.3} parent=5 // pred_check_branch
      %154 = sbr.rel (%p152) target = $region28
    $region27: #{forward.3} parent=5 // pred_region
      // Predicated region
      $region29: #{forward.3} parent=27 // pred_check
        %p155 = pneg %p32
      $region30: #{forward.3} parent=27 // pred_check_branch
        %157 = sbr.rel (%p155) target = $region32
      $region31: #{forward.3} parent=27 // pred_region
        %p158 = scmp.lt.s32.totalorder %s12, 1
        %s159 = scalar_select %p158, %s12, 1
        %s160 = smul.addr %s159, 512
        %s161 = smul.addr %s160, 8
        %s162 = scalar_lea.vmem %s0, %s161
      $region32: #{forward.3} parent=27 // pred_fallthru
        _
    $region28: #{forward.3} parent=5 // pred_fallthru
      _
    %p163 = scmp.le.s32.totalorder 1, %s12
    %p164 = scmp.lt.s32.totalorder %s12, 3
    %p165 = pnand %p163, %p164
    %p166 = pneg %p165
    // Predicated region
    $region33: #{forward.3} parent=5 // pred_check
      _
    $region34: #{forward.3} parent=5 // pred_check_branch
      %168 = sbr.rel (%p165) target = $region36
    $region35: #{forward.3} parent=5 // pred_region
      %s169 = ssub.s32 %s12, 1
      %p170 = scmp.lt.s32.totalorder %s17, 1
      %s171 = scalar_select %p170, %s17, 1
      %s172 = smul.addr %s171, 512
      %s173 = smul.addr %s172, 8
      %s174 = scalar_lea.vmem %s0, %s173
      %p175 = pneg %p38
      %p176 = pneg %p35
      %p177 = pneg %p59
      %p178 = pneg %p56
      %p179 = pneg %p80
      %p180 = pneg %p77
      %p181 = pneg %p101
      %p182 = pneg %p98
      %p183 = pneg %p127
      %p184 = pneg %p124
      %p185 = scmp.lt.s32.totalorder %s17, 1
      %s186 = scalar_select %p185, %s17, 1
      %s187 = scalar_lea.vmem %s4, %s186
      %p188 = scmp.lt.s32.totalorder %s17, 1
      %s189 = scalar_select %p188, %s17, 1
      %s190 = smul.addr %s189, 512
      %s191 = smul.addr %s190, 8
      %s192 = scalar_lea.vmem %s0, %s191
      %p193 = scmp.lt.s32.totalorder %s17, 1
      %s194 = scalar_select %p193, %s17, 1
      %s195 = scalar_lea.vmem %s4, %s194
      %v196 = vld [vmem:[%s192] sm:$0xff]
      %v197 = vld [vmem:[%s192 + $0x8] sm:$0xff]
      %v198 = vld [vmem:[%s192 + $0x10] sm:$0xff]
      %v199 = vld [vmem:[%s192 + $0x18] sm:$0xff]
      %v200 = vld [vmem:[%s192 + $0x20] sm:$0xff]
      %v201 = vld [vmem:[%s192 + $0x28] sm:$0xff]
      %v202 = vld [vmem:[%s192 + $0x30] sm:$0xff]
      %v203 = vld [vmem:[%s192 + $0x38] sm:$0xff]
      %v204 = vld [vmem:[%s192 + $0x40] sm:$0xff]
      %v205 = vld [vmem:[%s192 + $0x48] sm:$0xff]
      %v206 = vld [vmem:[%s192 + $0x50] sm:$0xff]
      %v207 = vld [vmem:[%s192 + $0x58] sm:$0xff]
      %v208 = vld [vmem:[%s192 + $0x60] sm:$0xff]
      %v209 = vld [vmem:[%s192 + $0x68] sm:$0xff]
      %v210 = vld [vmem:[%s192 + $0x70] sm:$0xff]
      %v211 = vld [vmem:[%s192 + $0x78] sm:$0xff]
      %v212 = vld [vmem:[%s192 + $0x80] sm:$0xff]
      %v213 = vld [vmem:[%s192 + $0x88] sm:$0xff]
      %v214 = vld [vmem:[%s192 + $0x90] sm:$0xff]
      %v215 = vld [vmem:[%s192 + $0x98] sm:$0xff]
      %v216 = vld [vmem:[%s192 + $0xa0] sm:$0xff]
      %v217 = vld [vmem:[%s192 + $0xa8] sm:$0xff]
      %v218 = vld [vmem:[%s192 + $0xb0] sm:$0xff]
      %v219 = vld [vmem:[%s192 + $0xb8] sm:$0xff]
      %v220 = vld [vmem:[%s192 + $0xc0] sm:$0xff]
      %v221 = vld [vmem:[%s192 + $0xc8] sm:$0xff]
      %v222 = vld [vmem:[%s192 + $0xd0] sm:$0xff]
      %v223 = vld [vmem:[%s192 + $0xd8] sm:$0xff]
      %v224 = vld [vmem:[%s192 + $0xe0] sm:$0xff]
      %v225 = vld [vmem:[%s192 + $0xe8] sm:$0xff]
      %v226 = vld [vmem:[%s192 + $0xf0] sm:$0xff]
      %v227 = vld [vmem:[%s192 + $0xf8] sm:$0xff]
      %v228 = vld [vmem:[%s192 + $0x100] sm:$0xff]
      %v229 = vld [vmem:[%s192 + $0x108] sm:$0xff]
      %v230 = vld [vmem:[%s192 + $0x110] sm:$0xff]
      %v231 = vld [vmem:[%s192 + $0x118] sm:$0xff]
      %v232 = vld [vmem:[%s192 + $0x120] sm:$0xff]
      %v233 = vld [vmem:[%s192 + $0x128] sm:$0xff]
      %v234 = vld [vmem:[%s192 + $0x130] sm:$0xff]
      %v235 = vld [vmem:[%s192 + $0x138] sm:$0xff]
      %v236 = vld [vmem:[%s192 + $0x140] sm:$0xff]
      %v237 = vld [vmem:[%s192 + $0x148] sm:$0xff]
      %v238 = vld [vmem:[%s192 + $0x150] sm:$0xff]
      %v239 = vld [vmem:[%s192 + $0x158] sm:$0xff]
      %v240 = vld [vmem:[%s192 + $0x160] sm:$0xff]
      %v241 = vld [vmem:[%s192 + $0x168] sm:$0xff]
      %v242 = vld [vmem:[%s192 + $0x170] sm:$0xff]
      %v243 = vld [vmem:[%s192 + $0x178] sm:$0xff]
      %v244 = vld [vmem:[%s192 + $0x180] sm:$0xff]
      %v245 = vld [vmem:[%s192 + $0x188] sm:$0xff]
      %v246 = vld [vmem:[%s192 + $0x190] sm:$0xff]
      %v247 = vld [vmem:[%s192 + $0x198] sm:$0xff]
      %v248 = vld [vmem:[%s192 + $0x1a0] sm:$0xff]
      %v249 = vld [vmem:[%s192 + $0x1a8] sm:$0xff]
      %v250 = vld [vmem:[%s192 + $0x1b0] sm:$0xff]
      %v251 = vld [vmem:[%s192 + $0x1b8] sm:$0xff]
      %v252 = vld [vmem:[%s192 + $0x1c0] sm:$0xff]
      %v253 = vld [vmem:[%s192 + $0x1c8] sm:$0xff]
      %v254 = vld [vmem:[%s192 + $0x1d0] sm:$0xff]
      %v255 = vld [vmem:[%s192 + $0x1d8] sm:$0xff]
      %v256 = vld [vmem:[%s192 + $0x1e0] sm:$0xff]
      %v257 = vld [vmem:[%s192 + $0x1e8] sm:$0xff]
      %v258 = vld [vmem:[%s192 + $0x1f0] sm:$0xff]
      %v259 = vld [vmem:[%s192 + $0x1f8] sm:$0xff]
      %v260 = vld [vmem:[%s192 + $0x200] sm:$0xff]
      %v261 = vld [vmem:[%s192 + $0x208] sm:$0xff]
      %v262 = vld [vmem:[%s192 + $0x210] sm:$0xff]
      %v263 = vld [vmem:[%s192 + $0x218] sm:$0xff]
      %v264 = vld [vmem:[%s192 + $0x220] sm:$0xff]
      %v265 = vld [vmem:[%s192 + $0x228] sm:$0xff]
      %v266 = vld [vmem:[%s192 + $0x230] sm:$0xff]
      %v267 = vld [vmem:[%s192 + $0x238] sm:$0xff]
      %v268 = vld [vmem:[%s192 + $0x240] sm:$0xff]
      %v269 = vld [vmem:[%s192 + $0x248] sm:$0xff]
      %v270 = vld [vmem:[%s192 + $0x250] sm:$0xff]
      %v271 = vld [vmem:[%s192 + $0x258] sm:$0xff]
      %v272 = vld [vmem:[%s192 + $0x260] sm:$0xff]
      %v273 = vld [vmem:[%s192 + $0x268] sm:$0xff]
      %v274 = vld [vmem:[%s192 + $0x270] sm:$0xff]
      %v275 = vld [vmem:[%s192 + $0x278] sm:$0xff]
      %v276 = vld [vmem:[%s192 + $0x280] sm:$0xff]
      %v277 = vld [vmem:[%s192 + $0x288] sm:$0xff]
      %v278 = vld [vmem:[%s192 + $0x290] sm:$0xff]
      %v279 = vld [vmem:[%s192 + $0x298] sm:$0xff]
      %v280 = vld [vmem:[%s192 + $0x2a0] sm:$0xff]
      %v281 = vld [vmem:[%s192 + $0x2a8] sm:$0xff]
      %v282 = vld [vmem:[%s192 + $0x2b0] sm:$0xff]
      %v283 = vld [vmem:[%s192 + $0x2b8] sm:$0xff]
      %v284 = vld [vmem:[%s192 + $0x2c0] sm:$0xff]
      %v285 = vld [vmem:[%s192 + $0x2c8] sm:$0xff]
      %v286 = vld [vmem:[%s192 + $0x2d0] sm:$0xff]
      %v287 = vld [vmem:[%s192 + $0x2d8] sm:$0xff]
      %v288 = vld [vmem:[%s192 + $0x2e0] sm:$0xff]
      %v289 = vld [vmem:[%s192 + $0x2e8] sm:$0xff]
      %v290 = vld [vmem:[%s192 + $0x2f0] sm:$0xff]
      %v291 = vld [vmem:[%s192 + $0x2f8] sm:$0xff]
      %v292 = vld [vmem:[%s192 + $0x300] sm:$0xff]
      %v293 = vld [vmem:[%s192 + $0x308] sm:$0xff]
      %v294 = vld [vmem:[%s192 + $0x310] sm:$0xff]
      %v295 = vld [vmem:[%s192 + $0x318] sm:$0xff]
      %v296 = vld [vmem:[%s192 + $0x320] sm:$0xff]
      %v297 = vld [vmem:[%s192 + $0x328] sm:$0xff]
      %v298 = vld [vmem:[%s192 + $0x330] sm:$0xff]
      %v299 = vld [vmem:[%s192 + $0x338] sm:$0xff]
      %v300 = vld [vmem:[%s192 + $0x340] sm:$0xff]
      %v301 = vld [vmem:[%s192 + $0x348] sm:$0xff]
      %v302 = vld [vmem:[%s192 + $0x350] sm:$0xff]
      %v303 = vld [vmem:[%s192 + $0x358] sm:$0xff]
      %v304 = vld [vmem:[%s192 + $0x360] sm:$0xff]
      %v305 = vld [vmem:[%s192 + $0x368] sm:$0xff]
      %v306 = vld [vmem:[%s192 + $0x370] sm:$0xff]
      %v307 = vld [vmem:[%s192 + $0x378] sm:$0xff]
      %v308 = vld [vmem:[%s192 + $0x380] sm:$0xff]
      %v309 = vld [vmem:[%s192 + $0x388] sm:$0xff]
      %v310 = vld [vmem:[%s192 + $0x390] sm:$0xff]
      %v311 = vld [vmem:[%s192 + $0x398] sm:$0xff]
      %v312 = vld [vmem:[%s192 + $0x3a0] sm:$0xff]
      %v313 = vld [vmem:[%s192 + $0x3a8] sm:$0xff]
      %v314 = vld [vmem:[%s192 + $0x3b0] sm:$0xff]
      %v315 = vld [vmem:[%s192 + $0x3b8] sm:$0xff]
      %v316 = vld [vmem:[%s192 + $0x3c0] sm:$0xff]
      %v317 = vld [vmem:[%s192 + $0x3c8] sm:$0xff]
      %v318 = vld [vmem:[%s192 + $0x3d0] sm:$0xff]
      %v319 = vld [vmem:[%s192 + $0x3d8] sm:$0xff]
      %v320 = vld [vmem:[%s192 + $0x3e0] sm:$0xff]
      %v321 = vld [vmem:[%s192 + $0x3e8] sm:$0xff]
      %v322 = vld [vmem:[%s192 + $0x3f0] sm:$0xff]
      %v323 = vld [vmem:[%s192 + $0x3f8] sm:$0xff]
      %v324 = vld [vmem:[%s192 + $0x400] sm:$0xff]
      %v325 = vld [vmem:[%s192 + $0x408] sm:$0xff]
      %v326 = vld [vmem:[%s192 + $0x410] sm:$0xff]
      %v327 = vld [vmem:[%s192 + $0x418] sm:$0xff]
      %v328 = vld [vmem:[%s192 + $0x420] sm:$0xff]
      %v329 = vld [vmem:[%s192 + $0x428] sm:$0xff]
      %v330 = vld [vmem:[%s192 + $0x430] sm:$0xff]
      %v331 = vld [vmem:[%s192 + $0x438] sm:$0xff]
      %v332 = vld [vmem:[%s192 + $0x440] sm:$0xff]
      %v333 = vld [vmem:[%s192 + $0x448] sm:$0xff]
      %v334 = vld [vmem:[%s192 + $0x450] sm:$0xff]
      %v335 = vld [vmem:[%s192 + $0x458] sm:$0xff]
      %v336 = vld [vmem:[%s192 + $0x460] sm:$0xff]
      %v337 = vld [vmem:[%s192 + $0x468] sm:$0xff]
      %v338 = vld [vmem:[%s192 + $0x470] sm:$0xff]
      %v339 = vld [vmem:[%s192 + $0x478] sm:$0xff]
      %v340 = vld [vmem:[%s192 + $0x480] sm:$0xff]
      %v341 = vld [vmem:[%s192 + $0x488] sm:$0xff]
      %v342 = vld [vmem:[%s192 + $0x490] sm:$0xff]
      %v343 = vld [vmem:[%s192 + $0x498] sm:$0xff]
      %v344 = vld [vmem:[%s192 + $0x4a0] sm:$0xff]
      %v345 = vld [vmem:[%s192 + $0x4a8] sm:$0xff]
      %v346 = vld [vmem:[%s192 + $0x4b0] sm:$0xff]
      %v347 = vld [vmem:[%s192 + $0x4b8] sm:$0xff]
      %v348 = vld [vmem:[%s192 + $0x4c0] sm:$0xff]
      %v349 = vld [vmem:[%s192 + $0x4c8] sm:$0xff]
      %v350 = vld [vmem:[%s192 + $0x4d0] sm:$0xff]
      %v351 = vld [vmem:[%s192 + $0x4d8] sm:$0xff]
      %v352 = vld [vmem:[%s192 + $0x4e0] sm:$0xff]
      %v353 = vld [vmem:[%s192 + $0x4e8] sm:$0xff]
      %v354 = vld [vmem:[%s192 + $0x4f0] sm:$0xff]
      %v355 = vld [vmem:[%s192 + $0x4f8] sm:$0xff]
      %v356 = vld [vmem:[%s192 + $0x500] sm:$0xff]
      %v357 = vld [vmem:[%s192 + $0x508] sm:$0xff]
      %v358 = vld [vmem:[%s192 + $0x510] sm:$0xff]
      %v359 = vld [vmem:[%s192 + $0x518] sm:$0xff]
      %v360 = vld [vmem:[%s192 + $0x520] sm:$0xff]
      %v361 = vld [vmem:[%s192 + $0x528] sm:$0xff]
      %v362 = vld [vmem:[%s192 + $0x530] sm:$0xff]
      %v363 = vld [vmem:[%s192 + $0x538] sm:$0xff]
      %v364 = vld [vmem:[%s192 + $0x540] sm:$0xff]
      %v365 = vld [vmem:[%s192 + $0x548] sm:$0xff]
      %v366 = vld [vmem:[%s192 + $0x550] sm:$0xff]
      %v367 = vld [vmem:[%s192 + $0x558] sm:$0xff]
      %v368 = vld [vmem:[%s192 + $0x560] sm:$0xff]
      %v369 = vld [vmem:[%s192 + $0x568] sm:$0xff]
      %v370 = vld [vmem:[%s192 + $0x570] sm:$0xff]
      %v371 = vld [vmem:[%s192 + $0x578] sm:$0xff]
      %v372 = vld [vmem:[%s192 + $0x580] sm:$0xff]
      %v373 = vld [vmem:[%s192 + $0x588] sm:$0xff]
      %v374 = vld [vmem:[%s192 + $0x590] sm:$0xff]
      %v375 = vld [vmem:[%s192 + $0x598] sm:$0xff]
      %v376 = vld [vmem:[%s192 + $0x5a0] sm:$0xff]
      %v377 = vld [vmem:[%s192 + $0x5a8] sm:$0xff]
      %v378 = vld [vmem:[%s192 + $0x5b0] sm:$0xff]
      %v379 = vld [vmem:[%s192 + $0x5b8] sm:$0xff]
      %v380 = vld [vmem:[%s192 + $0x5c0] sm:$0xff]
      %v381 = vld [vmem:[%s192 + $0x5c8] sm:$0xff]
      %v382 = vld [vmem:[%s192 + $0x5d0] sm:$0xff]
      %v383 = vld [vmem:[%s192 + $0x5d8] sm:$0xff]
      %v384 = vld [vmem:[%s192 + $0x5e0] sm:$0xff]
      %v385 = vld [vmem:[%s192 + $0x5e8] sm:$0xff]
      %v386 = vld [vmem:[%s192 + $0x5f0] sm:$0xff]
      %v387 = vld [vmem:[%s192 + $0x5f8] sm:$0xff]
      %v388 = vld [vmem:[%s192 + $0x600] sm:$0xff]
      %v389 = vld [vmem:[%s192 + $0x608] sm:$0xff]
      %v390 = vld [vmem:[%s192 + $0x610] sm:$0xff]
      %v391 = vld [vmem:[%s192 + $0x618] sm:$0xff]
      %v392 = vld [vmem:[%s192 + $0x620] sm:$0xff]
      %v393 = vld [vmem:[%s192 + $0x628] sm:$0xff]
      %v394 = vld [vmem:[%s192 + $0x630] sm:$0xff]
      %v395 = vld [vmem:[%s192 + $0x638] sm:$0xff]
      %v396 = vld [vmem:[%s192 + $0x640] sm:$0xff]
      %v397 = vld [vmem:[%s192 + $0x648] sm:$0xff]
      %v398 = vld [vmem:[%s192 + $0x650] sm:$0xff]
      %v399 = vld [vmem:[%s192 + $0x658] sm:$0xff]
      %v400 = vld [vmem:[%s192 + $0x660] sm:$0xff]
      %v401 = vld [vmem:[%s192 + $0x668] sm:$0xff]
      %v402 = vld [vmem:[%s192 + $0x670] sm:$0xff]
      %v403 = vld [vmem:[%s192 + $0x678] sm:$0xff]
      %v404 = vld [vmem:[%s192 + $0x680] sm:$0xff]
      %v405 = vld [vmem:[%s192 + $0x688] sm:$0xff]
      %v406 = vld [vmem:[%s192 + $0x690] sm:$0xff]
      %v407 = vld [vmem:[%s192 + $0x698] sm:$0xff]
      %v408 = vld [vmem:[%s192 + $0x6a0] sm:$0xff]
      %v409 = vld [vmem:[%s192 + $0x6a8] sm:$0xff]
      %v410 = vld [vmem:[%s192 + $0x6b0] sm:$0xff]
      %v411 = vld [vmem:[%s192 + $0x6b8] sm:$0xff]
      %v412 = vld [vmem:[%s192 + $0x6c0] sm:$0xff]
      %v413 = vld [vmem:[%s192 + $0x6c8] sm:$0xff]
      %v414 = vld [vmem:[%s192 + $0x6d0] sm:$0xff]
      %v415 = vld [vmem:[%s192 + $0x6d8] sm:$0xff]
      %v416 = vld [vmem:[%s192 + $0x6e0] sm:$0xff]
      %v417 = vld [vmem:[%s192 + $0x6e8] sm:$0xff]
      %v418 = vld [vmem:[%s192 + $0x6f0] sm:$0xff]
      %v419 = vld [vmem:[%s192 + $0x6f8] sm:$0xff]
      %v420 = vld [vmem:[%s192 + $0x700] sm:$0xff]
      %v421 = vld [vmem:[%s192 + $0x708] sm:$0xff]
      %v422 = vld [vmem:[%s192 + $0x710] sm:$0xff]
      %v423 = vld [vmem:[%s192 + $0x718] sm:$0xff]
      %v424 = vld [vmem:[%s192 + $0x720] sm:$0xff]
      %v425 = vld [vmem:[%s192 + $0x728] sm:$0xff]
      %v426 = vld [vmem:[%s192 + $0x730] sm:$0xff]
      %v427 = vld [vmem:[%s192 + $0x738] sm:$0xff]
      %v428 = vld [vmem:[%s192 + $0x740] sm:$0xff]
      %v429 = vld [vmem:[%s192 + $0x748] sm:$0xff]
      %v430 = vld [vmem:[%s192 + $0x750] sm:$0xff]
      %v431 = vld [vmem:[%s192 + $0x758] sm:$0xff]
      %v432 = vld [vmem:[%s192 + $0x760] sm:$0xff]
      %v433 = vld [vmem:[%s192 + $0x768] sm:$0xff]
      %v434 = vld [vmem:[%s192 + $0x770] sm:$0xff]
      %v435 = vld [vmem:[%s192 + $0x778] sm:$0xff]
      %v436 = vld [vmem:[%s192 + $0x780] sm:$0xff]
      %v437 = vld [vmem:[%s192 + $0x788] sm:$0xff]
      %v438 = vld [vmem:[%s192 + $0x790] sm:$0xff]
      %v439 = vld [vmem:[%s192 + $0x798] sm:$0xff]
      %v440 = vld [vmem:[%s192 + $0x7a0] sm:$0xff]
      %v441 = vld [vmem:[%s192 + $0x7a8] sm:$0xff]
      %v442 = vld [vmem:[%s192 + $0x7b0] sm:$0xff]
      %v443 = vld [vmem:[%s192 + $0x7b8] sm:$0xff]
      %v444 = vld [vmem:[%s192 + $0x7c0] sm:$0xff]
      %v445 = vld [vmem:[%s192 + $0x7c8] sm:$0xff]
      %v446 = vld [vmem:[%s192 + $0x7d0] sm:$0xff]
      %v447 = vld [vmem:[%s192 + $0x7d8] sm:$0xff]
      %v448 = vld [vmem:[%s192 + $0x7e0] sm:$0xff]
      %v449 = vld [vmem:[%s192 + $0x7e8] sm:$0xff]
      %v450 = vld [vmem:[%s192 + $0x7f0] sm:$0xff]
      %v451 = vld [vmem:[%s192 + $0x7f8] sm:$0xff]
      %v452 = vld [vmem:[%s192 + $0x800] sm:$0xff]
      %v453 = vld [vmem:[%s192 + $0x808] sm:$0xff]
      %v454 = vld [vmem:[%s192 + $0x810] sm:$0xff]
      %v455 = vld [vmem:[%s192 + $0x818] sm:$0xff]
      %v456 = vld [vmem:[%s192 + $0x820] sm:$0xff]
      %v457 = vld [vmem:[%s192 + $0x828] sm:$0xff]
      %v458 = vld [vmem:[%s192 + $0x830] sm:$0xff]
      %v459 = vld [vmem:[%s192 + $0x838] sm:$0xff]
      %v460 = vld [vmem:[%s192 + $0x840] sm:$0xff]
      %v461 = vld [vmem:[%s192 + $0x848] sm:$0xff]
      %v462 = vld [vmem:[%s192 + $0x850] sm:$0xff]
      %v463 = vld [vmem:[%s192 + $0x858] sm:$0xff]
      %v464 = vld [vmem:[%s192 + $0x860] sm:$0xff]
      %v465 = vld [vmem:[%s192 + $0x868] sm:$0xff]
      %v466 = vld [vmem:[%s192 + $0x870] sm:$0xff]
      %v467 = vld [vmem:[%s192 + $0x878] sm:$0xff]
      %v468 = vld [vmem:[%s192 + $0x880] sm:$0xff]
      %v469 = vld [vmem:[%s192 + $0x888] sm:$0xff]
      %v470 = vld [vmem:[%s192 + $0x890] sm:$0xff]
      %v471 = vld [vmem:[%s192 + $0x898] sm:$0xff]
      %v472 = vld [vmem:[%s192 + $0x8a0] sm:$0xff]
      %v473 = vld [vmem:[%s192 + $0x8a8] sm:$0xff]
      %v474 = vld [vmem:[%s192 + $0x8b0] sm:$0xff]
      %v475 = vld [vmem:[%s192 + $0x8b8] sm:$0xff]
      %v476 = vld [vmem:[%s192 + $0x8c0] sm:$0xff]
      %v477 = vld [vmem:[%s192 + $0x8c8] sm:$0xff]
      %v478 = vld [vmem:[%s192 + $0x8d0] sm:$0xff]
      %v479 = vld [vmem:[%s192 + $0x8d8] sm:$0xff]
      %v480 = vld [vmem:[%s192 + $0x8e0] sm:$0xff]
      %v481 = vld [vmem:[%s192 + $0x8e8] sm:$0xff]
      %v482 = vld [vmem:[%s192 + $0x8f0] sm:$0xff]
      %v483 = vld [vmem:[%s192 + $0x8f8] sm:$0xff]
      %v484 = vld [vmem:[%s192 + $0x900] sm:$0xff]
      %v485 = vld [vmem:[%s192 + $0x908] sm:$0xff]
      %v486 = vld [vmem:[%s192 + $0x910] sm:$0xff]
      %v487 = vld [vmem:[%s192 + $0x918] sm:$0xff]
      %v488 = vld [vmem:[%s192 + $0x920] sm:$0xff]
      %v489 = vld [vmem:[%s192 + $0x928] sm:$0xff]
      %v490 = vld [vmem:[%s192 + $0x930] sm:$0xff]
      %v491 = vld [vmem:[%s192 + $0x938] sm:$0xff]
      %v492 = vld [vmem:[%s192 + $0x940] sm:$0xff]
      %v493 = vld [vmem:[%s192 + $0x948] sm:$0xff]
      %v494 = vld [vmem:[%s192 + $0x950] sm:$0xff]
      %v495 = vld [vmem:[%s192 + $0x958] sm:$0xff]
      %v496 = vld [vmem:[%s192 + $0x960] sm:$0xff]
      %v497 = vld [vmem:[%s192 + $0x968] sm:$0xff]
      %v498 = vld [vmem:[%s192 + $0x970] sm:$0xff]
      %v499 = vld [vmem:[%s192 + $0x978] sm:$0xff]
      %v500 = vld [vmem:[%s192 + $0x980] sm:$0xff]
      %v501 = vld [vmem:[%s192 + $0x988] sm:$0xff]
      %v502 = vld [vmem:[%s192 + $0x990] sm:$0xff]
      %v503 = vld [vmem:[%s192 + $0x998] sm:$0xff]
      %v504 = vld [vmem:[%s192 + $0x9a0] sm:$0xff]
      %v505 = vld [vmem:[%s192 + $0x9a8] sm:$0xff]
      %v506 = vld [vmem:[%s192 + $0x9b0] sm:$0xff]
      %v507 = vld [vmem:[%s192 + $0x9b8] sm:$0xff]
      %v508 = vld [vmem:[%s192 + $0x9c0] sm:$0xff]
      %v509 = vld [vmem:[%s192 + $0x9c8] sm:$0xff]
      %v510 = vld [vmem:[%s192 + $0x9d0] sm:$0xff]
      %v511 = vld [vmem:[%s192 + $0x9d8] sm:$0xff]
      %v512 = vld [vmem:[%s192 + $0x9e0] sm:$0xff]
      %v513 = vld [vmem:[%s192 + $0x9e8] sm:$0xff]
      %v514 = vld [vmem:[%s192 + $0x9f0] sm:$0xff]
      %v515 = vld [vmem:[%s192 + $0x9f8] sm:$0xff]
      %v516 = vld [vmem:[%s192 + $0xa00] sm:$0xff]
      %v517 = vld [vmem:[%s192 + $0xa08] sm:$0xff]
      %v518 = vld [vmem:[%s192 + $0xa10] sm:$0xff]
      %v519 = vld [vmem:[%s192 + $0xa18] sm:$0xff]
      %v520 = vld [vmem:[%s192 + $0xa20] sm:$0xff]
      %v521 = vld [vmem:[%s192 + $0xa28] sm:$0xff]
      %v522 = vld [vmem:[%s192 + $0xa30] sm:$0xff]
      %v523 = vld [vmem:[%s192 + $0xa38] sm:$0xff]
      %v524 = vld [vmem:[%s192 + $0xa40] sm:$0xff]
      %v525 = vld [vmem:[%s192 + $0xa48] sm:$0xff]
      %v526 = vld [vmem:[%s192 + $0xa50] sm:$0xff]
      %v527 = vld [vmem:[%s192 + $0xa58] sm:$0xff]
      %v528 = vld [vmem:[%s192 + $0xa60] sm:$0xff]
      %v529 = vld [vmem:[%s192 + $0xa68] sm:$0xff]
      %v530 = vld [vmem:[%s192 + $0xa70] sm:$0xff]
      %v531 = vld [vmem:[%s192 + $0xa78] sm:$0xff]
      %v532 = vld [vmem:[%s192 + $0xa80] sm:$0xff]
      %v533 = vld [vmem:[%s192 + $0xa88] sm:$0xff]
      %v534 = vld [vmem:[%s192 + $0xa90] sm:$0xff]
      %v535 = vld [vmem:[%s192 + $0xa98] sm:$0xff]
      %v536 = vld [vmem:[%s192 + $0xaa0] sm:$0xff]
      %v537 = vld [vmem:[%s192 + $0xaa8] sm:$0xff]
      %v538 = vld [vmem:[%s192 + $0xab0] sm:$0xff]
      %v539 = vld [vmem:[%s192 + $0xab8] sm:$0xff]
      %v540 = vld [vmem:[%s192 + $0xac0] sm:$0xff]
      %v541 = vld [vmem:[%s192 + $0xac8] sm:$0xff]
      %v542 = vld [vmem:[%s192 + $0xad0] sm:$0xff]
      %v543 = vld [vmem:[%s192 + $0xad8] sm:$0xff]
      %v544 = vld [vmem:[%s192 + $0xae0] sm:$0xff]
      %v545 = vld [vmem:[%s192 + $0xae8] sm:$0xff]
      %v546 = vld [vmem:[%s192 + $0xaf0] sm:$0xff]
      %v547 = vld [vmem:[%s192 + $0xaf8] sm:$0xff]
      %v548 = vld [vmem:[%s192 + $0xb00] sm:$0xff]
      %v549 = vld [vmem:[%s192 + $0xb08] sm:$0xff]
      %v550 = vld [vmem:[%s192 + $0xb10] sm:$0xff]
      %v551 = vld [vmem:[%s192 + $0xb18] sm:$0xff]
      %v552 = vld [vmem:[%s192 + $0xb20] sm:$0xff]
      %v553 = vld [vmem:[%s192 + $0xb28] sm:$0xff]
      %v554 = vld [vmem:[%s192 + $0xb30] sm:$0xff]
      %v555 = vld [vmem:[%s192 + $0xb38] sm:$0xff]
      %v556 = vld [vmem:[%s192 + $0xb40] sm:$0xff]
      %v557 = vld [vmem:[%s192 + $0xb48] sm:$0xff]
      %v558 = vld [vmem:[%s192 + $0xb50] sm:$0xff]
      %v559 = vld [vmem:[%s192 + $0xb58] sm:$0xff]
      %v560 = vld [vmem:[%s192 + $0xb60] sm:$0xff]
      %v561 = vld [vmem:[%s192 + $0xb68] sm:$0xff]
      %v562 = vld [vmem:[%s192 + $0xb70] sm:$0xff]
      %v563 = vld [vmem:[%s192 + $0xb78] sm:$0xff]
      %v564 = vld [vmem:[%s192 + $0xb80] sm:$0xff]
      %v565 = vld [vmem:[%s192 + $0xb88] sm:$0xff]
      %v566 = vld [vmem:[%s192 + $0xb90] sm:$0xff]
      %v567 = vld [vmem:[%s192 + $0xb98] sm:$0xff]
      %v568 = vld [vmem:[%s192 + $0xba0] sm:$0xff]
      %v569 = vld [vmem:[%s192 + $0xba8] sm:$0xff]
      %v570 = vld [vmem:[%s192 + $0xbb0] sm:$0xff]
      %v571 = vld [vmem:[%s192 + $0xbb8] sm:$0xff]
      %v572 = vld [vmem:[%s192 + $0xbc0] sm:$0xff]
      %v573 = vld [vmem:[%s192 + $0xbc8] sm:$0xff]
      %v574 = vld [vmem:[%s192 + $0xbd0] sm:$0xff]
      %v575 = vld [vmem:[%s192 + $0xbd8] sm:$0xff]
      %v576 = vld [vmem:[%s192 + $0xbe0] sm:$0xff]
      %v577 = vld [vmem:[%s192 + $0xbe8] sm:$0xff]
      %v578 = vld [vmem:[%s192 + $0xbf0] sm:$0xff]
      %v579 = vld [vmem:[%s192 + $0xbf8] sm:$0xff]
      %v580 = vld [vmem:[%s192 + $0xc00] sm:$0xff]
      %v581 = vld [vmem:[%s192 + $0xc08] sm:$0xff]
      %v582 = vld [vmem:[%s192 + $0xc10] sm:$0xff]
      %v583 = vld [vmem:[%s192 + $0xc18] sm:$0xff]
      %v584 = vld [vmem:[%s192 + $0xc20] sm:$0xff]
      %v585 = vld [vmem:[%s192 + $0xc28] sm:$0xff]
      %v586 = vld [vmem:[%s192 + $0xc30] sm:$0xff]
      %v587 = vld [vmem:[%s192 + $0xc38] sm:$0xff]
      %v588 = vld [vmem:[%s192 + $0xc40] sm:$0xff]
      %v589 = vld [vmem:[%s192 + $0xc48] sm:$0xff]
      %v590 = vld [vmem:[%s192 + $0xc50] sm:$0xff]
      %v591 = vld [vmem:[%s192 + $0xc58] sm:$0xff]
      %v592 = vld [vmem:[%s192 + $0xc60] sm:$0xff]
      %v593 = vld [vmem:[%s192 + $0xc68] sm:$0xff]
      %v594 = vld [vmem:[%s192 + $0xc70] sm:$0xff]
      %v595 = vld [vmem:[%s192 + $0xc78] sm:$0xff]
      %v596 = vld [vmem:[%s192 + $0xc80] sm:$0xff]
      %v597 = vld [vmem:[%s192 + $0xc88] sm:$0xff]
      %v598 = vld [vmem:[%s192 + $0xc90] sm:$0xff]
      %v599 = vld [vmem:[%s192 + $0xc98] sm:$0xff]
      %v600 = vld [vmem:[%s192 + $0xca0] sm:$0xff]
      %v601 = vld [vmem:[%s192 + $0xca8] sm:$0xff]
      %v602 = vld [vmem:[%s192 + $0xcb0] sm:$0xff]
      %v603 = vld [vmem:[%s192 + $0xcb8] sm:$0xff]
      %v604 = vld [vmem:[%s192 + $0xcc0] sm:$0xff]
      %v605 = vld [vmem:[%s192 + $0xcc8] sm:$0xff]
      %v606 = vld [vmem:[%s192 + $0xcd0] sm:$0xff]
      %v607 = vld [vmem:[%s192 + $0xcd8] sm:$0xff]
      %v608 = vld [vmem:[%s192 + $0xce0] sm:$0xff]
      %v609 = vld [vmem:[%s192 + $0xce8] sm:$0xff]
      %v610 = vld [vmem:[%s192 + $0xcf0] sm:$0xff]
      %v611 = vld [vmem:[%s192 + $0xcf8] sm:$0xff]
      %v612 = vld [vmem:[%s192 + $0xd00] sm:$0xff]
      %v613 = vld [vmem:[%s192 + $0xd08] sm:$0xff]
      %v614 = vld [vmem:[%s192 + $0xd10] sm:$0xff]
      %v615 = vld [vmem:[%s192 + $0xd18] sm:$0xff]
      %v616 = vld [vmem:[%s192 + $0xd20] sm:$0xff]
      %v617 = vld [vmem:[%s192 + $0xd28] sm:$0xff]
      %v618 = vld [vmem:[%s192 + $0xd30] sm:$0xff]
      %v619 = vld [vmem:[%s192 + $0xd38] sm:$0xff]
      %v620 = vld [vmem:[%s192 + $0xd40] sm:$0xff]
      %v621 = vld [vmem:[%s192 + $0xd48] sm:$0xff]
      %v622 = vld [vmem:[%s192 + $0xd50] sm:$0xff]
      %v623 = vld [vmem:[%s192 + $0xd58] sm:$0xff]
      %v624 = vld [vmem:[%s192 + $0xd60] sm:$0xff]
      %v625 = vld [vmem:[%s192 + $0xd68] sm:$0xff]
      %v626 = vld [vmem:[%s192 + $0xd70] sm:$0xff]
      %v627 = vld [vmem:[%s192 + $0xd78] sm:$0xff]
      %v628 = vld [vmem:[%s192 + $0xd80] sm:$0xff]
      %v629 = vld [vmem:[%s192 + $0xd88] sm:$0xff]
      %v630 = vld [vmem:[%s192 + $0xd90] sm:$0xff]
      %v631 = vld [vmem:[%s192 + $0xd98] sm:$0xff]
      %v632 = vld [vmem:[%s192 + $0xda0] sm:$0xff]
      %v633 = vld [vmem:[%s192 + $0xda8] sm:$0xff]
      %v634 = vld [vmem:[%s192 + $0xdb0] sm:$0xff]
      %v635 = vld [vmem:[%s192 + $0xdb8] sm:$0xff]
      %v636 = vld [vmem:[%s192 + $0xdc0] sm:$0xff]
      %v637 = vld [vmem:[%s192 + $0xdc8] sm:$0xff]
      %v638 = vld [vmem:[%s192 + $0xdd0] sm:$0xff]
      %v639 = vld [vmem:[%s192 + $0xdd8] sm:$0xff]
      %v640 = vld [vmem:[%s192 + $0xde0] sm:$0xff]
      %v641 = vld [vmem:[%s192 + $0xde8] sm:$0xff]
      %v642 = vld [vmem:[%s192 + $0xdf0] sm:$0xff]
      %v643 = vld [vmem:[%s192 + $0xdf8] sm:$0xff]
      %v644 = vld [vmem:[%s192 + $0xe00] sm:$0xff]
      %v645 = vld [vmem:[%s192 + $0xe08] sm:$0xff]
      %v646 = vld [vmem:[%s192 + $0xe10] sm:$0xff]
      %v647 = vld [vmem:[%s192 + $0xe18] sm:$0xff]
      %v648 = vld [vmem:[%s192 + $0xe20] sm:$0xff]
      %v649 = vld [vmem:[%s192 + $0xe28] sm:$0xff]
      %v650 = vld [vmem:[%s192 + $0xe30] sm:$0xff]
      %v651 = vld [vmem:[%s192 + $0xe38] sm:$0xff]
      %v652 = vld [vmem:[%s192 + $0xe40] sm:$0xff]
      %v653 = vld [vmem:[%s192 + $0xe48] sm:$0xff]
      %v654 = vld [vmem:[%s192 + $0xe50] sm:$0xff]
      %v655 = vld [vmem:[%s192 + $0xe58] sm:$0xff]
      %v656 = vld [vmem:[%s192 + $0xe60] sm:$0xff]
      %v657 = vld [vmem:[%s192 + $0xe68] sm:$0xff]
      %v658 = vld [vmem:[%s192 + $0xe70] sm:$0xff]
      %v659 = vld [vmem:[%s192 + $0xe78] sm:$0xff]
      %v660 = vld [vmem:[%s192 + $0xe80] sm:$0xff]
      %v661 = vld [vmem:[%s192 + $0xe88] sm:$0xff]
      %v662 = vld [vmem:[%s192 + $0xe90] sm:$0xff]
      %v663 = vld [vmem:[%s192 + $0xe98] sm:$0xff]
      %v664 = vld [vmem:[%s192 + $0xea0] sm:$0xff]
      %v665 = vld [vmem:[%s192 + $0xea8] sm:$0xff]
      %v666 = vld [vmem:[%s192 + $0xeb0] sm:$0xff]
      %v667 = vld [vmem:[%s192 + $0xeb8] sm:$0xff]
      %v668 = vld [vmem:[%s192 + $0xec0] sm:$0xff]
      %v669 = vld [vmem:[%s192 + $0xec8] sm:$0xff]
      %v670 = vld [vmem:[%s192 + $0xed0] sm:$0xff]
      %v671 = vld [vmem:[%s192 + $0xed8] sm:$0xff]
      %v672 = vld [vmem:[%s192 + $0xee0] sm:$0xff]
      %v673 = vld [vmem:[%s192 + $0xee8] sm:$0xff]
      %v674 = vld [vmem:[%s192 + $0xef0] sm:$0xff]
      %v675 = vld [vmem:[%s192 + $0xef8] sm:$0xff]
      %v676 = vld [vmem:[%s192 + $0xf00] sm:$0xff]
      %v677 = vld [vmem:[%s192 + $0xf08] sm:$0xff]
      %v678 = vld [vmem:[%s192 + $0xf10] sm:$0xff]
      %v679 = vld [vmem:[%s192 + $0xf18] sm:$0xff]
      %v680 = vld [vmem:[%s192 + $0xf20] sm:$0xff]
      %v681 = vld [vmem:[%s192 + $0xf28] sm:$0xff]
      %v682 = vld [vmem:[%s192 + $0xf30] sm:$0xff]
      %v683 = vld [vmem:[%s192 + $0xf38] sm:$0xff]
      %v684 = vld [vmem:[%s192 + $0xf40] sm:$0xff]
      %v685 = vld [vmem:[%s192 + $0xf48] sm:$0xff]
      %v686 = vld [vmem:[%s192 + $0xf50] sm:$0xff]
      %v687 = vld [vmem:[%s192 + $0xf58] sm:$0xff]
      %v688 = vld [vmem:[%s192 + $0xf60] sm:$0xff]
      %v689 = vld [vmem:[%s192 + $0xf68] sm:$0xff]
      %v690 = vld [vmem:[%s192 + $0xf70] sm:$0xff]
      %v691 = vld [vmem:[%s192 + $0xf78] sm:$0xff]
      %v692 = vld [vmem:[%s192 + $0xf80] sm:$0xff]
      %v693 = vld [vmem:[%s192 + $0xf88] sm:$0xff]
      %v694 = vld [vmem:[%s192 + $0xf90] sm:$0xff]
      %v695 = vld [vmem:[%s192 + $0xf98] sm:$0xff]
      %v696 = vld [vmem:[%s192 + $0xfa0] sm:$0xff]
      %v697 = vld [vmem:[%s192 + $0xfa8] sm:$0xff]
      %v698 = vld [vmem:[%s192 + $0xfb0] sm:$0xff]
      %v699 = vld [vmem:[%s192 + $0xfb8] sm:$0xff]
      %v700 = vld [vmem:[%s192 + $0xfc0] sm:$0xff]
      %v701 = vld [vmem:[%s192 + $0xfc8] sm:$0xff]
      %v702 = vld [vmem:[%s192 + $0xfd0] sm:$0xff]
      %v703 = vld [vmem:[%s192 + $0xfd8] sm:$0xff]
      %v704 = vld [vmem:[%s192 + $0xfe0] sm:$0xff]
      %v705 = vld [vmem:[%s192 + $0xfe8] sm:$0xff]
      %v706 = vld [vmem:[%s192 + $0xff0] sm:$0xff]
      %v707 = vld [vmem:[%s192 + $0xff8] sm:$0xff]
      %v708 = vld [vmem:[%s1] sm:$0xff]
      %v709 = vld [vmem:[%s1 + $0x8] sm:$0xff]
      %v710 = vld [vmem:[%s1 + $0x10] sm:$0xff]
      %v711 = vld [vmem:[%s1 + $0x18] sm:$0xff]
      %v716 = vperm.slane %v708, 0
      %v717 = vperm.slane %v708, 1
      %v718 = vperm.slane %v708, 2
      %v719 = vperm.slane %v708, 3
      %v720 = vperm.slane %v708, 4
      %v721 = vperm.slane %v708, 5
      %v722 = vperm.slane %v708, 6
      %v723 = vperm.slane %v708, 7
      %v724 = vperm.slane %v709, 0
      %v725 = vperm.slane %v709, 1
      %v726 = vperm.slane %v709, 2
      %v727 = vperm.slane %v709, 3
      %v728 = vperm.slane %v709, 4
      %v729 = vperm.slane %v709, 5
      %v730 = vperm.slane %v709, 6
      %v731 = vperm.slane %v709, 7
      %v732 = vperm.slane %v710, 0
      %v733 = vperm.slane %v710, 1
      %v734 = vperm.slane %v710, 2
      %v735 = vperm.slane %v710, 3
      %v736 = vperm.slane %v710, 4
      %v737 = vperm.slane %v710, 5
      %v738 = vperm.slane %v710, 6
      %v739 = vperm.slane %v710, 7
      %v740 = vperm.slane %v711, 0
      %v741 = vperm.slane %v711, 1
      %v742 = vperm.slane %v711, 2
      %v743 = vperm.slane %v711, 3
      %v744 = vperm.slane %v711, 4
      %v745 = vperm.slane %v711, 5
      %v746 = vperm.slane %v711, 6
      %v747 = vperm.slane %v711, 7
      %v780 = vadd.f32 %v196, %v716
      %v781 = vadd.f32 %v197, %v717
      %v782 = vadd.f32 %v198, %v718
      %v783 = vadd.f32 %v199, %v719
      %v784 = vadd.f32 %v200, %v720
      %v785 = vadd.f32 %v201, %v721
      %v786 = vadd.f32 %v202, %v722
      %v787 = vadd.f32 %v203, %v723
      %v788 = vadd.f32 %v204, %v724
      %v789 = vadd.f32 %v205, %v725
      %v790 = vadd.f32 %v206, %v726
      %v791 = vadd.f32 %v207, %v727
      %v792 = vadd.f32 %v208, %v728
      %v793 = vadd.f32 %v209, %v729
      %v794 = vadd.f32 %v210, %v730
      %v795 = vadd.f32 %v211, %v731
      %v796 = vadd.f32 %v212, %v732
      %v797 = vadd.f32 %v213, %v733
      %v798 = vadd.f32 %v214, %v734
      %v799 = vadd.f32 %v215, %v735
      %v800 = vadd.f32 %v216, %v736
      %v801 = vadd.f32 %v217, %v737
      %v802 = vadd.f32 %v218, %v738
      %v803 = vadd.f32 %v219, %v739
      %v804 = vadd.f32 %v220, %v740
      %v805 = vadd.f32 %v221, %v741
      %v806 = vadd.f32 %v222, %v742
      %v807 = vadd.f32 %v223, %v743
      %v808 = vadd.f32 %v224, %v744
      %v809 = vadd.f32 %v225, %v745
      %v810 = vadd.f32 %v226, %v746
      %v811 = vadd.f32 %v227, %v747
      %v812 = vadd.f32 %v228, %v716
      %v813 = vadd.f32 %v229, %v717
      %v814 = vadd.f32 %v230, %v718
      %v815 = vadd.f32 %v231, %v719
      %v816 = vadd.f32 %v232, %v720
      %v817 = vadd.f32 %v233, %v721
      %v818 = vadd.f32 %v234, %v722
      %v819 = vadd.f32 %v235, %v723
      %v820 = vadd.f32 %v236, %v724
      %v821 = vadd.f32 %v237, %v725
      %v822 = vadd.f32 %v238, %v726
      %v823 = vadd.f32 %v239, %v727
      %v824 = vadd.f32 %v240, %v728
      %v825 = vadd.f32 %v241, %v729
      %v826 = vadd.f32 %v242, %v730
      %v827 = vadd.f32 %v243, %v731
      %v828 = vadd.f32 %v244, %v732
      %v829 = vadd.f32 %v245, %v733
      %v830 = vadd.f32 %v246, %v734
      %v831 = vadd.f32 %v247, %v735
      %v832 = vadd.f32 %v248, %v736
      %v833 = vadd.f32 %v249, %v737
      %v834 = vadd.f32 %v250, %v738
      %v835 = vadd.f32 %v251, %v739
      %v836 = vadd.f32 %v252, %v740
      %v837 = vadd.f32 %v253, %v741
      %v838 = vadd.f32 %v254, %v742
      %v839 = vadd.f32 %v255, %v743
      %v840 = vadd.f32 %v256, %v744
      %v841 = vadd.f32 %v257, %v745
      %v842 = vadd.f32 %v258, %v746
      %v843 = vadd.f32 %v259, %v747
      %v844 = vadd.f32 %v260, %v716
      %v845 = vadd.f32 %v261, %v717
      %v846 = vadd.f32 %v262, %v718
      %v847 = vadd.f32 %v263, %v719
      %v848 = vadd.f32 %v264, %v720
      %v849 = vadd.f32 %v265, %v721
      %v850 = vadd.f32 %v266, %v722
      %v851 = vadd.f32 %v267, %v723
      %v852 = vadd.f32 %v268, %v724
      %v853 = vadd.f32 %v269, %v725
      %v854 = vadd.f32 %v270, %v726
      %v855 = vadd.f32 %v271, %v727
      %v856 = vadd.f32 %v272, %v728
      %v857 = vadd.f32 %v273, %v729
      %v858 = vadd.f32 %v274, %v730
      %v859 = vadd.f32 %v275, %v731
      %v860 = vadd.f32 %v276, %v732
      %v861 = vadd.f32 %v277, %v733
      %v862 = vadd.f32 %v278, %v734
      %v863 = vadd.f32 %v279, %v735
      %v864 = vadd.f32 %v280, %v736
      %v865 = vadd.f32 %v281, %v737
      %v866 = vadd.f32 %v282, %v738
      %v867 = vadd.f32 %v283, %v739
      %v868 = vadd.f32 %v284, %v740
      %v869 = vadd.f32 %v285, %v741
      %v870 = vadd.f32 %v286, %v742
      %v871 = vadd.f32 %v287, %v743
      %v872 = vadd.f32 %v288, %v744
      %v873 = vadd.f32 %v289, %v745
      %v874 = vadd.f32 %v290, %v746
      %v875 = vadd.f32 %v291, %v747
      %v876 = vadd.f32 %v292, %v716
      %v877 = vadd.f32 %v293, %v717
      %v878 = vadd.f32 %v294, %v718
      %v879 = vadd.f32 %v295, %v719
      %v880 = vadd.f32 %v296, %v720
      %v881 = vadd.f32 %v297, %v721
      %v882 = vadd.f32 %v298, %v722
      %v883 = vadd.f32 %v299, %v723
      %v884 = vadd.f32 %v300, %v724
      %v885 = vadd.f32 %v301, %v725
      %v886 = vadd.f32 %v302, %v726
      %v887 = vadd.f32 %v303, %v727
      %v888 = vadd.f32 %v304, %v728
      %v889 = vadd.f32 %v305, %v729
      %v890 = vadd.f32 %v306, %v730
      %v891 = vadd.f32 %v307, %v731
      %v892 = vadd.f32 %v308, %v732
      %v893 = vadd.f32 %v309, %v733
      %v894 = vadd.f32 %v310, %v734
      %v895 = vadd.f32 %v311, %v735
      %v896 = vadd.f32 %v312, %v736
      %v897 = vadd.f32 %v313, %v737
      %v898 = vadd.f32 %v314, %v738
      %v899 = vadd.f32 %v315, %v739
      %v900 = vadd.f32 %v316, %v740
      %v901 = vadd.f32 %v317, %v741
      %v902 = vadd.f32 %v318, %v742
      %v903 = vadd.f32 %v319, %v743
      %v904 = vadd.f32 %v320, %v744
      %v905 = vadd.f32 %v321, %v745
      %v906 = vadd.f32 %v322, %v746
      %v907 = vadd.f32 %v323, %v747
      %v908 = vadd.f32 %v324, %v716
      %v909 = vadd.f32 %v325, %v717
      %v910 = vadd.f32 %v326, %v718
      %v911 = vadd.f32 %v327, %v719
      %v912 = vadd.f32 %v328, %v720
      %v913 = vadd.f32 %v329, %v721
      %v914 = vadd.f32 %v330, %v722
      %v915 = vadd.f32 %v331, %v723
      %v916 = vadd.f32 %v332, %v724
      %v917 = vadd.f32 %v333, %v725
      %v918 = vadd.f32 %v334, %v726
      %v919 = vadd.f32 %v335, %v727
      %v920 = vadd.f32 %v336, %v728
      %v921 = vadd.f32 %v337, %v729
      %v922 = vadd.f32 %v338, %v730
      %v923 = vadd.f32 %v339, %v731
      %v924 = vadd.f32 %v340, %v732
      %v925 = vadd.f32 %v341, %v733
      %v926 = vadd.f32 %v342, %v734
      %v927 = vadd.f32 %v343, %v735
      %v928 = vadd.f32 %v344, %v736
      %v929 = vadd.f32 %v345, %v737
      %v930 = vadd.f32 %v346, %v738
      %v931 = vadd.f32 %v347, %v739
      %v932 = vadd.f32 %v348, %v740
      %v933 = vadd.f32 %v349, %v741
      %v934 = vadd.f32 %v350, %v742
      %v935 = vadd.f32 %v351, %v743
      %v936 = vadd.f32 %v352, %v744
      %v937 = vadd.f32 %v353, %v745
      %v938 = vadd.f32 %v354, %v746
      %v939 = vadd.f32 %v355, %v747
      %v940 = vadd.f32 %v356, %v716
      %v941 = vadd.f32 %v357, %v717
      %v942 = vadd.f32 %v358, %v718
      %v943 = vadd.f32 %v359, %v719
      %v944 = vadd.f32 %v360, %v720
      %v945 = vadd.f32 %v361, %v721
      %v946 = vadd.f32 %v362, %v722
      %v947 = vadd.f32 %v363, %v723
      %v948 = vadd.f32 %v364, %v724
      %v949 = vadd.f32 %v365, %v725
      %v950 = vadd.f32 %v366, %v726
      %v951 = vadd.f32 %v367, %v727
      %v952 = vadd.f32 %v368, %v728
      %v953 = vadd.f32 %v369, %v729
      %v954 = vadd.f32 %v370, %v730
      %v955 = vadd.f32 %v371, %v731
      %v956 = vadd.f32 %v372, %v732
      %v957 = vadd.f32 %v373, %v733
      %v958 = vadd.f32 %v374, %v734
      %v959 = vadd.f32 %v375, %v735
      %v960 = vadd.f32 %v376, %v736
      %v961 = vadd.f32 %v377, %v737
      %v962 = vadd.f32 %v378, %v738
      %v963 = vadd.f32 %v379, %v739
      %v964 = vadd.f32 %v380, %v740
      %v965 = vadd.f32 %v381, %v741
      %v966 = vadd.f32 %v382, %v742
      %v967 = vadd.f32 %v383, %v743
      %v968 = vadd.f32 %v384, %v744
      %v969 = vadd.f32 %v385, %v745
      %v970 = vadd.f32 %v386, %v746
      %v971 = vadd.f32 %v387, %v747
      %v972 = vadd.f32 %v388, %v716
      %v973 = vadd.f32 %v389, %v717
      %v974 = vadd.f32 %v390, %v718
      %v975 = vadd.f32 %v391, %v719
      %v976 = vadd.f32 %v392, %v720
      %v977 = vadd.f32 %v393, %v721
      %v978 = vadd.f32 %v394, %v722
      %v979 = vadd.f32 %v395, %v723
      %v980 = vadd.f32 %v396, %v724
      %v981 = vadd.f32 %v397, %v725
      %v982 = vadd.f32 %v398, %v726
      %v983 = vadd.f32 %v399, %v727
      %v984 = vadd.f32 %v400, %v728
      %v985 = vadd.f32 %v401, %v729
      %v986 = vadd.f32 %v402, %v730
      %v987 = vadd.f32 %v403, %v731
      %v988 = vadd.f32 %v404, %v732
      %v989 = vadd.f32 %v405, %v733
      %v990 = vadd.f32 %v406, %v734
      %v991 = vadd.f32 %v407, %v735
      %v992 = vadd.f32 %v408, %v736
      %v993 = vadd.f32 %v409, %v737
      %v994 = vadd.f32 %v410, %v738
      %v995 = vadd.f32 %v411, %v739
      %v996 = vadd.f32 %v412, %v740
      %v997 = vadd.f32 %v413, %v741
      %v998 = vadd.f32 %v414, %v742
      %v999 = vadd.f32 %v415, %v743
      %v1000 = vadd.f32 %v416, %v744
      %v1001 = vadd.f32 %v417, %v745
      %v1002 = vadd.f32 %v418, %v746
      %v1003 = vadd.f32 %v419, %v747
      %v1004 = vadd.f32 %v420, %v716
      %v1005 = vadd.f32 %v421, %v717
      %v1006 = vadd.f32 %v422, %v718
      %v1007 = vadd.f32 %v423, %v719
      %v1008 = vadd.f32 %v424, %v720
      %v1009 = vadd.f32 %v425, %v721
      %v1010 = vadd.f32 %v426, %v722
      %v1011 = vadd.f32 %v427, %v723
      %v1012 = vadd.f32 %v428, %v724
      %v1013 = vadd.f32 %v429, %v725
      %v1014 = vadd.f32 %v430, %v726
      %v1015 = vadd.f32 %v431, %v727
      %v1016 = vadd.f32 %v432, %v728
      %v1017 = vadd.f32 %v433, %v729
      %v1018 = vadd.f32 %v434, %v730
      %v1019 = vadd.f32 %v435, %v731
      %v1020 = vadd.f32 %v436, %v732
      %v1021 = vadd.f32 %v437, %v733
      %v1022 = vadd.f32 %v438, %v734
      %v1023 = vadd.f32 %v439, %v735
      %v1024 = vadd.f32 %v440, %v736
      %v1025 = vadd.f32 %v441, %v737
      %v1026 = vadd.f32 %v442, %v738
      %v1027 = vadd.f32 %v443, %v739
      %v1028 = vadd.f32 %v444, %v740
      %v1029 = vadd.f32 %v445, %v741
      %v1030 = vadd.f32 %v446, %v742
      %v1031 = vadd.f32 %v447, %v743
      %v1032 = vadd.f32 %v448, %v744
      %v1033 = vadd.f32 %v449, %v745
      %v1034 = vadd.f32 %v450, %v746
      %v1035 = vadd.f32 %v451, %v747
      %v1036 = vadd.f32 %v452, %v716
      %v1037 = vadd.f32 %v453, %v717
      %v1038 = vadd.f32 %v454, %v718
      %v1039 = vadd.f32 %v455, %v719
      %v1040 = vadd.f32 %v456, %v720
      %v1041 = vadd.f32 %v457, %v721
      %v1042 = vadd.f32 %v458, %v722
      %v1043 = vadd.f32 %v459, %v723
      %v1044 = vadd.f32 %v460, %v724
      %v1045 = vadd.f32 %v461, %v725
      %v1046 = vadd.f32 %v462, %v726
      %v1047 = vadd.f32 %v463, %v727
      %v1048 = vadd.f32 %v464, %v728
      %v1049 = vadd.f32 %v465, %v729
      %v1050 = vadd.f32 %v466, %v730
      %v1051 = vadd.f32 %v467, %v731
      %v1052 = vadd.f32 %v468, %v732
      %v1053 = vadd.f32 %v469, %v733
      %v1054 = vadd.f32 %v470, %v734
      %v1055 = vadd.f32 %v471, %v735
      %v1056 = vadd.f32 %v472, %v736
      %v1057 = vadd.f32 %v473, %v737
      %v1058 = vadd.f32 %v474, %v738
      %v1059 = vadd.f32 %v475, %v739
      %v1060 = vadd.f32 %v476, %v740
      %v1061 = vadd.f32 %v477, %v741
      %v1062 = vadd.f32 %v478, %v742
      %v1063 = vadd.f32 %v479, %v743
      %v1064 = vadd.f32 %v480, %v744
      %v1065 = vadd.f32 %v481, %v745
      %v1066 = vadd.f32 %v482, %v746
      %v1067 = vadd.f32 %v483, %v747
      %v1068 = vadd.f32 %v484, %v716
      %v1069 = vadd.f32 %v485, %v717
      %v1070 = vadd.f32 %v486, %v718
      %v1071 = vadd.f32 %v487, %v719
      %v1072 = vadd.f32 %v488, %v720
      %v1073 = vadd.f32 %v489, %v721
      %v1074 = vadd.f32 %v490, %v722
      %v1075 = vadd.f32 %v491, %v723
      %v1076 = vadd.f32 %v492, %v724
      %v1077 = vadd.f32 %v493, %v725
      %v1078 = vadd.f32 %v494, %v726
      %v1079 = vadd.f32 %v495, %v727
      %v1080 = vadd.f32 %v496, %v728
      %v1081 = vadd.f32 %v497, %v729
      %v1082 = vadd.f32 %v498, %v730
      %v1083 = vadd.f32 %v499, %v731
      %v1084 = vadd.f32 %v500, %v732
      %v1085 = vadd.f32 %v501, %v733
      %v1086 = vadd.f32 %v502, %v734
      %v1087 = vadd.f32 %v503, %v735
      %v1088 = vadd.f32 %v504, %v736
      %v1089 = vadd.f32 %v505, %v737
      %v1090 = vadd.f32 %v506, %v738
      %v1091 = vadd.f32 %v507, %v739
      %v1092 = vadd.f32 %v508, %v740
      %v1093 = vadd.f32 %v509, %v741
      %v1094 = vadd.f32 %v510, %v742
      %v1095 = vadd.f32 %v511, %v743
      %v1096 = vadd.f32 %v512, %v744
      %v1097 = vadd.f32 %v513, %v745
      %v1098 = vadd.f32 %v514, %v746
      %v1099 = vadd.f32 %v515, %v747
      %v1100 = vadd.f32 %v516, %v716
      %v1101 = vadd.f32 %v517, %v717
      %v1102 = vadd.f32 %v518, %v718
      %v1103 = vadd.f32 %v519, %v719
      %v1104 = vadd.f32 %v520, %v720
      %v1105 = vadd.f32 %v521, %v721
      %v1106 = vadd.f32 %v522, %v722
      %v1107 = vadd.f32 %v523, %v723
      %v1108 = vadd.f32 %v524, %v724
      %v1109 = vadd.f32 %v525, %v725
      %v1110 = vadd.f32 %v526, %v726
      %v1111 = vadd.f32 %v527, %v727
      %v1112 = vadd.f32 %v528, %v728
      %v1113 = vadd.f32 %v529, %v729
      %v1114 = vadd.f32 %v530, %v730
      %v1115 = vadd.f32 %v531, %v731
      %v1116 = vadd.f32 %v532, %v732
      %v1117 = vadd.f32 %v533, %v733
      %v1118 = vadd.f32 %v534, %v734
      %v1119 = vadd.f32 %v535, %v735
      %v1120 = vadd.f32 %v536, %v736
      %v1121 = vadd.f32 %v537, %v737
      %v1122 = vadd.f32 %v538, %v738
      %v1123 = vadd.f32 %v539, %v739
      %v1124 = vadd.f32 %v540, %v740
      %v1125 = vadd.f32 %v541, %v741
      %v1126 = vadd.f32 %v542, %v742
      %v1127 = vadd.f32 %v543, %v743
      %v1128 = vadd.f32 %v544, %v744
      %v1129 = vadd.f32 %v545, %v745
      %v1130 = vadd.f32 %v546, %v746
      %v1131 = vadd.f32 %v547, %v747
      %v1132 = vadd.f32 %v548, %v716
      %v1133 = vadd.f32 %v549, %v717
      %v1134 = vadd.f32 %v550, %v718
      %v1135 = vadd.f32 %v551, %v719
      %v1136 = vadd.f32 %v552, %v720
      %v1137 = vadd.f32 %v553, %v721
      %v1138 = vadd.f32 %v554, %v722
      %v1139 = vadd.f32 %v555, %v723
      %v1140 = vadd.f32 %v556, %v724
      %v1141 = vadd.f32 %v557, %v725
      %v1142 = vadd.f32 %v558, %v726
      %v1143 = vadd.f32 %v559, %v727
      %v1144 = vadd.f32 %v560, %v728
      %v1145 = vadd.f32 %v561, %v729
      %v1146 = vadd.f32 %v562, %v730
      %v1147 = vadd.f32 %v563, %v731
      %v1148 = vadd.f32 %v564, %v732
      %v1149 = vadd.f32 %v565, %v733
      %v1150 = vadd.f32 %v566, %v734
      %v1151 = vadd.f32 %v567, %v735
      %v1152 = vadd.f32 %v568, %v736
      %v1153 = vadd.f32 %v569, %v737
      %v1154 = vadd.f32 %v570, %v738
      %v1155 = vadd.f32 %v571, %v739
      %v1156 = vadd.f32 %v572, %v740
      %v1157 = vadd.f32 %v573, %v741
      %v1158 = vadd.f32 %v574, %v742
      %v1159 = vadd.f32 %v575, %v743
      %v1160 = vadd.f32 %v576, %v744
      %v1161 = vadd.f32 %v577, %v745
      %v1162 = vadd.f32 %v578, %v746
      %v1163 = vadd.f32 %v579, %v747
      %v1164 = vadd.f32 %v580, %v716
      %v1165 = vadd.f32 %v581, %v717
      %v1166 = vadd.f32 %v582, %v718
      %v1167 = vadd.f32 %v583, %v719
      %v1168 = vadd.f32 %v584, %v720
      %v1169 = vadd.f32 %v585, %v721
      %v1170 = vadd.f32 %v586, %v722
      %v1171 = vadd.f32 %v587, %v723
      %v1172 = vadd.f32 %v588, %v724
      %v1173 = vadd.f32 %v589, %v725
      %v1174 = vadd.f32 %v590, %v726
      %v1175 = vadd.f32 %v591, %v727
      %v1176 = vadd.f32 %v592, %v728
      %v1177 = vadd.f32 %v593, %v729
      %v1178 = vadd.f32 %v594, %v730
      %v1179 = vadd.f32 %v595, %v731
      %v1180 = vadd.f32 %v596, %v732
      %v1181 = vadd.f32 %v597, %v733
      %v1182 = vadd.f32 %v598, %v734
      %v1183 = vadd.f32 %v599, %v735
      %v1184 = vadd.f32 %v600, %v736
      %v1185 = vadd.f32 %v601, %v737
      %v1186 = vadd.f32 %v602, %v738
      %v1187 = vadd.f32 %v603, %v739
      %v1188 = vadd.f32 %v604, %v740
      %v1189 = vadd.f32 %v605, %v741
      %v1190 = vadd.f32 %v606, %v742
      %v1191 = vadd.f32 %v607, %v743
      %v1192 = vadd.f32 %v608, %v744
      %v1193 = vadd.f32 %v609, %v745
      %v1194 = vadd.f32 %v610, %v746
      %v1195 = vadd.f32 %v611, %v747
      %v1196 = vadd.f32 %v612, %v716
      %v1197 = vadd.f32 %v613, %v717
      %v1198 = vadd.f32 %v614, %v718
      %v1199 = vadd.f32 %v615, %v719
      %v1200 = vadd.f32 %v616, %v720
      %v1201 = vadd.f32 %v617, %v721
      %v1202 = vadd.f32 %v618, %v722
      %v1203 = vadd.f32 %v619, %v723
      %v1204 = vadd.f32 %v620, %v724
      %v1205 = vadd.f32 %v621, %v725
      %v1206 = vadd.f32 %v622, %v726
      %v1207 = vadd.f32 %v623, %v727
      %v1208 = vadd.f32 %v624, %v728
      %v1209 = vadd.f32 %v625, %v729
      %v1210 = vadd.f32 %v626, %v730
      %v1211 = vadd.f32 %v627, %v731
      %v1212 = vadd.f32 %v628, %v732
      %v1213 = vadd.f32 %v629, %v733
      %v1214 = vadd.f32 %v630, %v734
      %v1215 = vadd.f32 %v631, %v735
      %v1216 = vadd.f32 %v632, %v736
      %v1217 = vadd.f32 %v633, %v737
      %v1218 = vadd.f32 %v634, %v738
      %v1219 = vadd.f32 %v635, %v739
      %v1220 = vadd.f32 %v636, %v740
      %v1221 = vadd.f32 %v637, %v741
      %v1222 = vadd.f32 %v638, %v742
      %v1223 = vadd.f32 %v639, %v743
      %v1224 = vadd.f32 %v640, %v744
      %v1225 = vadd.f32 %v641, %v745
      %v1226 = vadd.f32 %v642, %v746
      %v1227 = vadd.f32 %v643, %v747
      %v1228 = vadd.f32 %v644, %v716
      %v1229 = vadd.f32 %v645, %v717
      %v1230 = vadd.f32 %v646, %v718
      %v1231 = vadd.f32 %v647, %v719
      %v1232 = vadd.f32 %v648, %v720
      %v1233 = vadd.f32 %v649, %v721
      %v1234 = vadd.f32 %v650, %v722
      %v1235 = vadd.f32 %v651, %v723
      %v1236 = vadd.f32 %v652, %v724
      %v1237 = vadd.f32 %v653, %v725
      %v1238 = vadd.f32 %v654, %v726
      %v1239 = vadd.f32 %v655, %v727
      %v1240 = vadd.f32 %v656, %v728
      %v1241 = vadd.f32 %v657, %v729
      %v1242 = vadd.f32 %v658, %v730
      %v1243 = vadd.f32 %v659, %v731
      %v1244 = vadd.f32 %v660, %v732
      %v1245 = vadd.f32 %v661, %v733
      %v1246 = vadd.f32 %v662, %v734
      %v1247 = vadd.f32 %v663, %v735
      %v1248 = vadd.f32 %v664, %v736
      %v1249 = vadd.f32 %v665, %v737
      %v1250 = vadd.f32 %v666, %v738
      %v1251 = vadd.f32 %v667, %v739
      %v1252 = vadd.f32 %v668, %v740
      %v1253 = vadd.f32 %v669, %v741
      %v1254 = vadd.f32 %v670, %v742
      %v1255 = vadd.f32 %v671, %v743
      %v1256 = vadd.f32 %v672, %v744
      %v1257 = vadd.f32 %v673, %v745
      %v1258 = vadd.f32 %v674, %v746
      %v1259 = vadd.f32 %v675, %v747
      %v1260 = vadd.f32 %v676, %v716
      %v1261 = vadd.f32 %v677, %v717
      %v1262 = vadd.f32 %v678, %v718
      %v1263 = vadd.f32 %v679, %v719
      %v1264 = vadd.f32 %v680, %v720
      %v1265 = vadd.f32 %v681, %v721
      %v1266 = vadd.f32 %v682, %v722
      %v1267 = vadd.f32 %v683, %v723
      %v1268 = vadd.f32 %v684, %v724
      %v1269 = vadd.f32 %v685, %v725
      %v1270 = vadd.f32 %v686, %v726
      %v1271 = vadd.f32 %v687, %v727
      %v1272 = vadd.f32 %v688, %v728
      %v1273 = vadd.f32 %v689, %v729
      %v1274 = vadd.f32 %v690, %v730
      %v1275 = vadd.f32 %v691, %v731
      %v1276 = vadd.f32 %v692, %v732
      %v1277 = vadd.f32 %v693, %v733
      %v1278 = vadd.f32 %v694, %v734
      %v1279 = vadd.f32 %v695, %v735
      %v1280 = vadd.f32 %v696, %v736
      %v1281 = vadd.f32 %v697, %v737
      %v1282 = vadd.f32 %v698, %v738
      %v1283 = vadd.f32 %v699, %v739
      %v1284 = vadd.f32 %v700, %v740
      %v1285 = vadd.f32 %v701, %v741
      %v1286 = vadd.f32 %v702, %v742
      %v1287 = vadd.f32 %v703, %v743
      %v1288 = vadd.f32 %v704, %v744
      %v1289 = vadd.f32 %v705, %v745
      %v1290 = vadd.f32 %v706, %v746
      %v1291 = vadd.f32 %v707, %v747
      %v1292 = vmax.f32 %v780, 0.0
      %v1293 = vmax.f32 %v781, 0.0
      %v1294 = vmax.f32 %v782, 0.0
      %v1295 = vmax.f32 %v783, 0.0
      %v1296 = vmax.f32 %v784, 0.0
      %v1297 = vmax.f32 %v785, 0.0
      %v1298 = vmax.f32 %v786, 0.0
      %v1299 = vmax.f32 %v787, 0.0
      %v1300 = vmax.f32 %v788, 0.0
      %v1301 = vmax.f32 %v789, 0.0
      %v1302 = vmax.f32 %v790, 0.0
      %v1303 = vmax.f32 %v791, 0.0
      %v1304 = vmax.f32 %v792, 0.0
      %v1305 = vmax.f32 %v793, 0.0
      %v1306 = vmax.f32 %v794, 0.0
      %v1307 = vmax.f32 %v795, 0.0
      %v1308 = vmax.f32 %v796, 0.0
      %v1309 = vmax.f32 %v797, 0.0
      %v1310 = vmax.f32 %v798, 0.0
      %v1311 = vmax.f32 %v799, 0.0
      %v1312 = vmax.f32 %v800, 0.0
      %v1313 = vmax.f32 %v801, 0.0
      %v1314 = vmax.f32 %v802, 0.0
      %v1315 = vmax.f32 %v803, 0.0
      %v1316 = vmax.f32 %v804, 0.0
      %v1317 = vmax.f32 %v805, 0.0
      %v1318 = vmax.f32 %v806, 0.0
      %v1319 = vmax.f32 %v807, 0.0
      %v1320 = vmax.f32 %v808, 0.0
      %v1321 = vmax.f32 %v809, 0.0
      %v1322 = vmax.f32 %v810, 0.0
      %v1323 = vmax.f32 %v811, 0.0
      %v1324 = vmax.f32 %v812, 0.0
      %v1325 = vmax.f32 %v813, 0.0
      %v1326 = vmax.f32 %v814, 0.0
      %v1327 = vmax.f32 %v815, 0.0
      %v1328 = vmax.f32 %v816, 0.0
      %v1329 = vmax.f32 %v817, 0.0
      %v1330 = vmax.f32 %v818, 0.0
      %v1331 = vmax.f32 %v819, 0.0
      %v1332 = vmax.f32 %v820, 0.0
      %v1333 = vmax.f32 %v821, 0.0
      %v1334 = vmax.f32 %v822, 0.0
      %v1335 = vmax.f32 %v823, 0.0
      %v1336 = vmax.f32 %v824, 0.0
      %v1337 = vmax.f32 %v825, 0.0
      %v1338 = vmax.f32 %v826, 0.0
      %v1339 = vmax.f32 %v827, 0.0
      %v1340 = vmax.f32 %v828, 0.0
      %v1341 = vmax.f32 %v829, 0.0
      %v1342 = vmax.f32 %v830, 0.0
      %v1343 = vmax.f32 %v831, 0.0
      %v1344 = vmax.f32 %v832, 0.0
      %v1345 = vmax.f32 %v833, 0.0
      %v1346 = vmax.f32 %v834, 0.0
      %v1347 = vmax.f32 %v835, 0.0
      %v1348 = vmax.f32 %v836, 0.0
      %v1349 = vmax.f32 %v837, 0.0
      %v1350 = vmax.f32 %v838, 0.0
      %v1351 = vmax.f32 %v839, 0.0
      %v1352 = vmax.f32 %v840, 0.0
      %v1353 = vmax.f32 %v841, 0.0
      %v1354 = vmax.f32 %v842, 0.0
      %v1355 = vmax.f32 %v843, 0.0
      %v1356 = vmax.f32 %v844, 0.0
      %v1357 = vmax.f32 %v845, 0.0
      %v1358 = vmax.f32 %v846, 0.0
      %v1359 = vmax.f32 %v847, 0.0
      %v1360 = vmax.f32 %v848, 0.0
      %v1361 = vmax.f32 %v849, 0.0
      %v1362 = vmax.f32 %v850, 0.0
      %v1363 = vmax.f32 %v851, 0.0
      %v1364 = vmax.f32 %v852, 0.0
      %v1365 = vmax.f32 %v853, 0.0
      %v1366 = vmax.f32 %v854, 0.0
      %v1367 = vmax.f32 %v855, 0.0
      %v1368 = vmax.f32 %v856, 0.0
      %v1369 = vmax.f32 %v857, 0.0
      %v1370 = vmax.f32 %v858, 0.0
      %v1371 = vmax.f32 %v859, 0.0
      %v1372 = vmax.f32 %v860, 0.0
      %v1373 = vmax.f32 %v861, 0.0
      %v1374 = vmax.f32 %v862, 0.0
      %v1375 = vmax.f32 %v863, 0.0
      %v1376 = vmax.f32 %v864, 0.0
      %v1377 = vmax.f32 %v865, 0.0
      %v1378 = vmax.f32 %v866, 0.0
      %v1379 = vmax.f32 %v867, 0.0
      %v1380 = vmax.f32 %v868, 0.0
      %v1381 = vmax.f32 %v869, 0.0
      %v1382 = vmax.f32 %v870, 0.0
      %v1383 = vmax.f32 %v871, 0.0
      %v1384 = vmax.f32 %v872, 0.0
      %v1385 = vmax.f32 %v873, 0.0
      %v1386 = vmax.f32 %v874, 0.0
      %v1387 = vmax.f32 %v875, 0.0
      %v1388 = vmax.f32 %v876, 0.0
      %v1389 = vmax.f32 %v877, 0.0
      %v1390 = vmax.f32 %v878, 0.0
      %v1391 = vmax.f32 %v879, 0.0
      %v1392 = vmax.f32 %v880, 0.0
      %v1393 = vmax.f32 %v881, 0.0
      %v1394 = vmax.f32 %v882, 0.0
      %v1395 = vmax.f32 %v883, 0.0
      %v1396 = vmax.f32 %v884, 0.0
      %v1397 = vmax.f32 %v885, 0.0
      %v1398 = vmax.f32 %v886, 0.0
      %v1399 = vmax.f32 %v887, 0.0
      %v1400 = vmax.f32 %v888, 0.0
      %v1401 = vmax.f32 %v889, 0.0
      %v1402 = vmax.f32 %v890, 0.0
      %v1403 = vmax.f32 %v891, 0.0
      %v1404 = vmax.f32 %v892, 0.0
      %v1405 = vmax.f32 %v893, 0.0
      %v1406 = vmax.f32 %v894, 0.0
      %v1407 = vmax.f32 %v895, 0.0
      %v1408 = vmax.f32 %v896, 0.0
      %v1409 = vmax.f32 %v897, 0.0
      %v1410 = vmax.f32 %v898, 0.0
      %v1411 = vmax.f32 %v899, 0.0
      %v1412 = vmax.f32 %v900, 0.0
      %v1413 = vmax.f32 %v901, 0.0
      %v1414 = vmax.f32 %v902, 0.0
      %v1415 = vmax.f32 %v903, 0.0
      %v1416 = vmax.f32 %v904, 0.0
      %v1417 = vmax.f32 %v905, 0.0
      %v1418 = vmax.f32 %v906, 0.0
      %v1419 = vmax.f32 %v907, 0.0
      %v1420 = vmax.f32 %v908, 0.0
      %v1421 = vmax.f32 %v909, 0.0
      %v1422 = vmax.f32 %v910, 0.0
      %v1423 = vmax.f32 %v911, 0.0
      %v1424 = vmax.f32 %v912, 0.0
      %v1425 = vmax.f32 %v913, 0.0
      %v1426 = vmax.f32 %v914, 0.0
      %v1427 = vmax.f32 %v915, 0.0
      %v1428 = vmax.f32 %v916, 0.0
      %v1429 = vmax.f32 %v917, 0.0
      %v1430 = vmax.f32 %v918, 0.0
      %v1431 = vmax.f32 %v919, 0.0
      %v1432 = vmax.f32 %v920, 0.0
      %v1433 = vmax.f32 %v921, 0.0
      %v1434 = vmax.f32 %v922, 0.0
      %v1435 = vmax.f32 %v923, 0.0
      %v1436 = vmax.f32 %v924, 0.0
      %v1437 = vmax.f32 %v925, 0.0
      %v1438 = vmax.f32 %v926, 0.0
      %v1439 = vmax.f32 %v927, 0.0
      %v1440 = vmax.f32 %v928, 0.0
      %v1441 = vmax.f32 %v929, 0.0
      %v1442 = vmax.f32 %v930, 0.0
      %v1443 = vmax.f32 %v931, 0.0
      %v1444 = vmax.f32 %v932, 0.0
      %v1445 = vmax.f32 %v933, 0.0
      %v1446 = vmax.f32 %v934, 0.0
      %v1447 = vmax.f32 %v935, 0.0
      %v1448 = vmax.f32 %v936, 0.0
      %v1449 = vmax.f32 %v937, 0.0
      %v1450 = vmax.f32 %v938, 0.0
      %v1451 = vmax.f32 %v939, 0.0
      %v1452 = vmax.f32 %v940, 0.0
      %v1453 = vmax.f32 %v941, 0.0
      %v1454 = vmax.f32 %v942, 0.0
      %v1455 = vmax.f32 %v943, 0.0
      %v1456 = vmax.f32 %v944, 0.0
      %v1457 = vmax.f32 %v945, 0.0
      %v1458 = vmax.f32 %v946, 0.0
      %v1459 = vmax.f32 %v947, 0.0
      %v1460 = vmax.f32 %v948, 0.0
      %v1461 = vmax.f32 %v949, 0.0
      %v1462 = vmax.f32 %v950, 0.0
      %v1463 = vmax.f32 %v951, 0.0
      %v1464 = vmax.f32 %v952, 0.0
      %v1465 = vmax.f32 %v953, 0.0
      %v1466 = vmax.f32 %v954, 0.0
      %v1467 = vmax.f32 %v955, 0.0
      %v1468 = vmax.f32 %v956, 0.0
      %v1469 = vmax.f32 %v957, 0.0
      %v1470 = vmax.f32 %v958, 0.0
      %v1471 = vmax.f32 %v959, 0.0
      %v1472 = vmax.f32 %v960, 0.0
      %v1473 = vmax.f32 %v961, 0.0
      %v1474 = vmax.f32 %v962, 0.0
      %v1475 = vmax.f32 %v963, 0.0
      %v1476 = vmax.f32 %v964, 0.0
      %v1477 = vmax.f32 %v965, 0.0
      %v1478 = vmax.f32 %v966, 0.0
      %v1479 = vmax.f32 %v967, 0.0
      %v1480 = vmax.f32 %v968, 0.0
      %v1481 = vmax.f32 %v969, 0.0
      %v1482 = vmax.f32 %v970, 0.0
      %v1483 = vmax.f32 %v971, 0.0
      %v1484 = vmax.f32 %v972, 0.0
      %v1485 = vmax.f32 %v973, 0.0
      %v1486 = vmax.f32 %v974, 0.0
      %v1487 = vmax.f32 %v975, 0.0
      %v1488 = vmax.f32 %v976, 0.0
      %v1489 = vmax.f32 %v977, 0.0
      %v1490 = vmax.f32 %v978, 0.0
      %v1491 = vmax.f32 %v979, 0.0
      %v1492 = vmax.f32 %v980, 0.0
      %v1493 = vmax.f32 %v981, 0.0
      %v1494 = vmax.f32 %v982, 0.0
      %v1495 = vmax.f32 %v983, 0.0
      %v1496 = vmax.f32 %v984, 0.0
      %v1497 = vmax.f32 %v985, 0.0
      %v1498 = vmax.f32 %v986, 0.0
      %v1499 = vmax.f32 %v987, 0.0
      %v1500 = vmax.f32 %v988, 0.0
      %v1501 = vmax.f32 %v989, 0.0
      %v1502 = vmax.f32 %v990, 0.0
      %v1503 = vmax.f32 %v991, 0.0
      %v1504 = vmax.f32 %v992, 0.0
      %v1505 = vmax.f32 %v993, 0.0
      %v1506 = vmax.f32 %v994, 0.0
      %v1507 = vmax.f32 %v995, 0.0
      %v1508 = vmax.f32 %v996, 0.0
      %v1509 = vmax.f32 %v997, 0.0
      %v1510 = vmax.f32 %v998, 0.0
      %v1511 = vmax.f32 %v999, 0.0
      %v1512 = vmax.f32 %v1000, 0.0
      %v1513 = vmax.f32 %v1001, 0.0
      %v1514 = vmax.f32 %v1002, 0.0
      %v1515 = vmax.f32 %v1003, 0.0
      %v1516 = vmax.f32 %v1004, 0.0
      %v1517 = vmax.f32 %v1005, 0.0
      %v1518 = vmax.f32 %v1006, 0.0
      %v1519 = vmax.f32 %v1007, 0.0
      %v1520 = vmax.f32 %v1008, 0.0
      %v1521 = vmax.f32 %v1009, 0.0
      %v1522 = vmax.f32 %v1010, 0.0
      %v1523 = vmax.f32 %v1011, 0.0
      %v1524 = vmax.f32 %v1012, 0.0
      %v1525 = vmax.f32 %v1013, 0.0
      %v1526 = vmax.f32 %v1014, 0.0
      %v1527 = vmax.f32 %v1015, 0.0
      %v1528 = vmax.f32 %v1016, 0.0
      %v1529 = vmax.f32 %v1017, 0.0
      %v1530 = vmax.f32 %v1018, 0.0
      %v1531 = vmax.f32 %v1019, 0.0
      %v1532 = vmax.f32 %v1020, 0.0
      %v1533 = vmax.f32 %v1021, 0.0
      %v1534 = vmax.f32 %v1022, 0.0
      %v1535 = vmax.f32 %v1023, 0.0
      %v1536 = vmax.f32 %v1024, 0.0
      %v1537 = vmax.f32 %v1025, 0.0
      %v1538 = vmax.f32 %v1026, 0.0
      %v1539 = vmax.f32 %v1027, 0.0
      %v1540 = vmax.f32 %v1028, 0.0
      %v1541 = vmax.f32 %v1029, 0.0
      %v1542 = vmax.f32 %v1030, 0.0
      %v1543 = vmax.f32 %v1031, 0.0
      %v1544 = vmax.f32 %v1032, 0.0
      %v1545 = vmax.f32 %v1033, 0.0
      %v1546 = vmax.f32 %v1034, 0.0
      %v1547 = vmax.f32 %v1035, 0.0
      %v1548 = vmax.f32 %v1036, 0.0
      %v1549 = vmax.f32 %v1037, 0.0
      %v1550 = vmax.f32 %v1038, 0.0
      %v1551 = vmax.f32 %v1039, 0.0
      %v1552 = vmax.f32 %v1040, 0.0
      %v1553 = vmax.f32 %v1041, 0.0
      %v1554 = vmax.f32 %v1042, 0.0
      %v1555 = vmax.f32 %v1043, 0.0
      %v1556 = vmax.f32 %v1044, 0.0
      %v1557 = vmax.f32 %v1045, 0.0
      %v1558 = vmax.f32 %v1046, 0.0
      %v1559 = vmax.f32 %v1047, 0.0
      %v1560 = vmax.f32 %v1048, 0.0
      %v1561 = vmax.f32 %v1049, 0.0
      %v1562 = vmax.f32 %v1050, 0.0
      %v1563 = vmax.f32 %v1051, 0.0
      %v1564 = vmax.f32 %v1052, 0.0
      %v1565 = vmax.f32 %v1053, 0.0
      %v1566 = vmax.f32 %v1054, 0.0
      %v1567 = vmax.f32 %v1055, 0.0
      %v1568 = vmax.f32 %v1056, 0.0
      %v1569 = vmax.f32 %v1057, 0.0
      %v1570 = vmax.f32 %v1058, 0.0
      %v1571 = vmax.f32 %v1059, 0.0
      %v1572 = vmax.f32 %v1060, 0.0
      %v1573 = vmax.f32 %v1061, 0.0
      %v1574 = vmax.f32 %v1062, 0.0
      %v1575 = vmax.f32 %v1063, 0.0
      %v1576 = vmax.f32 %v1064, 0.0
      %v1577 = vmax.f32 %v1065, 0.0
      %v1578 = vmax.f32 %v1066, 0.0
      %v1579 = vmax.f32 %v1067, 0.0
      %v1580 = vmax.f32 %v1068, 0.0
      %v1581 = vmax.f32 %v1069, 0.0
      %v1582 = vmax.f32 %v1070, 0.0
      %v1583 = vmax.f32 %v1071, 0.0
      %v1584 = vmax.f32 %v1072, 0.0
      %v1585 = vmax.f32 %v1073, 0.0
      %v1586 = vmax.f32 %v1074, 0.0
      %v1587 = vmax.f32 %v1075, 0.0
      %v1588 = vmax.f32 %v1076, 0.0
      %v1589 = vmax.f32 %v1077, 0.0
      %v1590 = vmax.f32 %v1078, 0.0
      %v1591 = vmax.f32 %v1079, 0.0
      %v1592 = vmax.f32 %v1080, 0.0
      %v1593 = vmax.f32 %v1081, 0.0
      %v1594 = vmax.f32 %v1082, 0.0
      %v1595 = vmax.f32 %v1083, 0.0
      %v1596 = vmax.f32 %v1084, 0.0
      %v1597 = vmax.f32 %v1085, 0.0
      %v1598 = vmax.f32 %v1086, 0.0
      %v1599 = vmax.f32 %v1087, 0.0
      %v1600 = vmax.f32 %v1088, 0.0
      %v1601 = vmax.f32 %v1089, 0.0
      %v1602 = vmax.f32 %v1090, 0.0
      %v1603 = vmax.f32 %v1091, 0.0
      %v1604 = vmax.f32 %v1092, 0.0
      %v1605 = vmax.f32 %v1093, 0.0
      %v1606 = vmax.f32 %v1094, 0.0
      %v1607 = vmax.f32 %v1095, 0.0
      %v1608 = vmax.f32 %v1096, 0.0
      %v1609 = vmax.f32 %v1097, 0.0
      %v1610 = vmax.f32 %v1098, 0.0
      %v1611 = vmax.f32 %v1099, 0.0
      %v1612 = vmax.f32 %v1100, 0.0
      %v1613 = vmax.f32 %v1101, 0.0
      %v1614 = vmax.f32 %v1102, 0.0
      %v1615 = vmax.f32 %v1103, 0.0
      %v1616 = vmax.f32 %v1104, 0.0
      %v1617 = vmax.f32 %v1105, 0.0
      %v1618 = vmax.f32 %v1106, 0.0
      %v1619 = vmax.f32 %v1107, 0.0
      %v1620 = vmax.f32 %v1108, 0.0
      %v1621 = vmax.f32 %v1109, 0.0
      %v1622 = vmax.f32 %v1110, 0.0
      %v1623 = vmax.f32 %v1111, 0.0
      %v1624 = vmax.f32 %v1112, 0.0
      %v1625 = vmax.f32 %v1113, 0.0
      %v1626 = vmax.f32 %v1114, 0.0
      %v1627 = vmax.f32 %v1115, 0.0
      %v1628 = vmax.f32 %v1116, 0.0
      %v1629 = vmax.f32 %v1117, 0.0
      %v1630 = vmax.f32 %v1118, 0.0
      %v1631 = vmax.f32 %v1119, 0.0
      %v1632 = vmax.f32 %v1120, 0.0
      %v1633 = vmax.f32 %v1121, 0.0
      %v1634 = vmax.f32 %v1122, 0.0
      %v1635 = vmax.f32 %v1123, 0.0
      %v1636 = vmax.f32 %v1124, 0.0
      %v1637 = vmax.f32 %v1125, 0.0
      %v1638 = vmax.f32 %v1126, 0.0
      %v1639 = vmax.f32 %v1127, 0.0
      %v1640 = vmax.f32 %v1128, 0.0
      %v1641 = vmax.f32 %v1129, 0.0
      %v1642 = vmax.f32 %v1130, 0.0
      %v1643 = vmax.f32 %v1131, 0.0
      %v1644 = vmax.f32 %v1132, 0.0
      %v1645 = vmax.f32 %v1133, 0.0
      %v1646 = vmax.f32 %v1134, 0.0
      %v1647 = vmax.f32 %v1135, 0.0
      %v1648 = vmax.f32 %v1136, 0.0
      %v1649 = vmax.f32 %v1137, 0.0
      %v1650 = vmax.f32 %v1138, 0.0
      %v1651 = vmax.f32 %v1139, 0.0
      %v1652 = vmax.f32 %v1140, 0.0
      %v1653 = vmax.f32 %v1141, 0.0
      %v1654 = vmax.f32 %v1142, 0.0
      %v1655 = vmax.f32 %v1143, 0.0
      %v1656 = vmax.f32 %v1144, 0.0
      %v1657 = vmax.f32 %v1145, 0.0
      %v1658 = vmax.f32 %v1146, 0.0
      %v1659 = vmax.f32 %v1147, 0.0
      %v1660 = vmax.f32 %v1148, 0.0
      %v1661 = vmax.f32 %v1149, 0.0
      %v1662 = vmax.f32 %v1150, 0.0
      %v1663 = vmax.f32 %v1151, 0.0
      %v1664 = vmax.f32 %v1152, 0.0
      %v1665 = vmax.f32 %v1153, 0.0
      %v1666 = vmax.f32 %v1154, 0.0
      %v1667 = vmax.f32 %v1155, 0.0
      %v1668 = vmax.f32 %v1156, 0.0
      %v1669 = vmax.f32 %v1157, 0.0
      %v1670 = vmax.f32 %v1158, 0.0
      %v1671 = vmax.f32 %v1159, 0.0
      %v1672 = vmax.f32 %v1160, 0.0
      %v1673 = vmax.f32 %v1161, 0.0
      %v1674 = vmax.f32 %v1162, 0.0
      %v1675 = vmax.f32 %v1163, 0.0
      %v1676 = vmax.f32 %v1164, 0.0
      %v1677 = vmax.f32 %v1165, 0.0
      %v1678 = vmax.f32 %v1166, 0.0
      %v1679 = vmax.f32 %v1167, 0.0
      %v1680 = vmax.f32 %v1168, 0.0
      %v1681 = vmax.f32 %v1169, 0.0
      %v1682 = vmax.f32 %v1170, 0.0
      %v1683 = vmax.f32 %v1171, 0.0
      %v1684 = vmax.f32 %v1172, 0.0
      %v1685 = vmax.f32 %v1173, 0.0
      %v1686 = vmax.f32 %v1174, 0.0
      %v1687 = vmax.f32 %v1175, 0.0
      %v1688 = vmax.f32 %v1176, 0.0
      %v1689 = vmax.f32 %v1177, 0.0
      %v1690 = vmax.f32 %v1178, 0.0
      %v1691 = vmax.f32 %v1179, 0.0
      %v1692 = vmax.f32 %v1180, 0.0
      %v1693 = vmax.f32 %v1181, 0.0
      %v1694 = vmax.f32 %v1182, 0.0
      %v1695 = vmax.f32 %v1183, 0.0
      %v1696 = vmax.f32 %v1184, 0.0
      %v1697 = vmax.f32 %v1185, 0.0
      %v1698 = vmax.f32 %v1186, 0.0
      %v1699 = vmax.f32 %v1187, 0.0
      %v1700 = vmax.f32 %v1188, 0.0
      %v1701 = vmax.f32 %v1189, 0.0
      %v1702 = vmax.f32 %v1190, 0.0
      %v1703 = vmax.f32 %v1191, 0.0
      %v1704 = vmax.f32 %v1192, 0.0
      %v1705 = vmax.f32 %v1193, 0.0
      %v1706 = vmax.f32 %v1194, 0.0
      %v1707 = vmax.f32 %v1195, 0.0
      %v1708 = vmax.f32 %v1196, 0.0
      %v1709 = vmax.f32 %v1197, 0.0
      %v1710 = vmax.f32 %v1198, 0.0
      %v1711 = vmax.f32 %v1199, 0.0
      %v1712 = vmax.f32 %v1200, 0.0
      %v1713 = vmax.f32 %v1201, 0.0
      %v1714 = vmax.f32 %v1202, 0.0
      %v1715 = vmax.f32 %v1203, 0.0
      %v1716 = vmax.f32 %v1204, 0.0
      %v1717 = vmax.f32 %v1205, 0.0
      %v1718 = vmax.f32 %v1206, 0.0
      %v1719 = vmax.f32 %v1207, 0.0
      %v1720 = vmax.f32 %v1208, 0.0
      %v1721 = vmax.f32 %v1209, 0.0
      %v1722 = vmax.f32 %v1210, 0.0
      %v1723 = vmax.f32 %v1211, 0.0
      %v1724 = vmax.f32 %v1212, 0.0
      %v1725 = vmax.f32 %v1213, 0.0
      %v1726 = vmax.f32 %v1214, 0.0
      %v1727 = vmax.f32 %v1215, 0.0
      %v1728 = vmax.f32 %v1216, 0.0
      %v1729 = vmax.f32 %v1217, 0.0
      %v1730 = vmax.f32 %v1218, 0.0
      %v1731 = vmax.f32 %v1219, 0.0
      %v1732 = vmax.f32 %v1220, 0.0
      %v1733 = vmax.f32 %v1221, 0.0
      %v1734 = vmax.f32 %v1222, 0.0
      %v1735 = vmax.f32 %v1223, 0.0
      %v1736 = vmax.f32 %v1224, 0.0
      %v1737 = vmax.f32 %v1225, 0.0
      %v1738 = vmax.f32 %v1226, 0.0
      %v1739 = vmax.f32 %v1227, 0.0
      %v1740 = vmax.f32 %v1228, 0.0
      %v1741 = vmax.f32 %v1229, 0.0
      %v1742 = vmax.f32 %v1230, 0.0
      %v1743 = vmax.f32 %v1231, 0.0
      %v1744 = vmax.f32 %v1232, 0.0
      %v1745 = vmax.f32 %v1233, 0.0
      %v1746 = vmax.f32 %v1234, 0.0
      %v1747 = vmax.f32 %v1235, 0.0
      %v1748 = vmax.f32 %v1236, 0.0
      %v1749 = vmax.f32 %v1237, 0.0
      %v1750 = vmax.f32 %v1238, 0.0
      %v1751 = vmax.f32 %v1239, 0.0
      %v1752 = vmax.f32 %v1240, 0.0
      %v1753 = vmax.f32 %v1241, 0.0
      %v1754 = vmax.f32 %v1242, 0.0
      %v1755 = vmax.f32 %v1243, 0.0
      %v1756 = vmax.f32 %v1244, 0.0
      %v1757 = vmax.f32 %v1245, 0.0
      %v1758 = vmax.f32 %v1246, 0.0
      %v1759 = vmax.f32 %v1247, 0.0
      %v1760 = vmax.f32 %v1248, 0.0
      %v1761 = vmax.f32 %v1249, 0.0
      %v1762 = vmax.f32 %v1250, 0.0
      %v1763 = vmax.f32 %v1251, 0.0
      %v1764 = vmax.f32 %v1252, 0.0
      %v1765 = vmax.f32 %v1253, 0.0
      %v1766 = vmax.f32 %v1254, 0.0
      %v1767 = vmax.f32 %v1255, 0.0
      %v1768 = vmax.f32 %v1256, 0.0
      %v1769 = vmax.f32 %v1257, 0.0
      %v1770 = vmax.f32 %v1258, 0.0
      %v1771 = vmax.f32 %v1259, 0.0
      %v1772 = vmax.f32 %v1260, 0.0
      %v1773 = vmax.f32 %v1261, 0.0
      %v1774 = vmax.f32 %v1262, 0.0
      %v1775 = vmax.f32 %v1263, 0.0
      %v1776 = vmax.f32 %v1264, 0.0
      %v1777 = vmax.f32 %v1265, 0.0
      %v1778 = vmax.f32 %v1266, 0.0
      %v1779 = vmax.f32 %v1267, 0.0
      %v1780 = vmax.f32 %v1268, 0.0
      %v1781 = vmax.f32 %v1269, 0.0
      %v1782 = vmax.f32 %v1270, 0.0
      %v1783 = vmax.f32 %v1271, 0.0
      %v1784 = vmax.f32 %v1272, 0.0
      %v1785 = vmax.f32 %v1273, 0.0
      %v1786 = vmax.f32 %v1274, 0.0
      %v1787 = vmax.f32 %v1275, 0.0
      %v1788 = vmax.f32 %v1276, 0.0
      %v1789 = vmax.f32 %v1277, 0.0
      %v1790 = vmax.f32 %v1278, 0.0
      %v1791 = vmax.f32 %v1279, 0.0
      %v1792 = vmax.f32 %v1280, 0.0
      %v1793 = vmax.f32 %v1281, 0.0
      %v1794 = vmax.f32 %v1282, 0.0
      %v1795 = vmax.f32 %v1283, 0.0
      %v1796 = vmax.f32 %v1284, 0.0
      %v1797 = vmax.f32 %v1285, 0.0
      %v1798 = vmax.f32 %v1286, 0.0
      %v1799 = vmax.f32 %v1287, 0.0
      %v1800 = vmax.f32 %v1288, 0.0
      %v1801 = vmax.f32 %v1289, 0.0
      %v1802 = vmax.f32 %v1290, 0.0
      %v1803 = vmax.f32 %v1291, 0.0
      %v1804 = vld [vmem:[%s2] sm:$0xff]
      %v1805 = vld [vmem:[%s2 + $0x8] sm:$0xff]
      %v1806 = vld [vmem:[%s2 + $0x10] sm:$0xff]
      %v1807 = vld [vmem:[%s2 + $0x18] sm:$0xff]
      %v1812 = vperm.slane %v1804, 0
      %v1813 = vperm.slane %v1804, 1
      %v1814 = vperm.slane %v1804, 2
      %v1815 = vperm.slane %v1804, 3
      %v1816 = vperm.slane %v1804, 4
      %v1817 = vperm.slane %v1804, 5
      %v1818 = vperm.slane %v1804, 6
      %v1819 = vperm.slane %v1804, 7
      %v1820 = vperm.slane %v1805, 0
      %v1821 = vperm.slane %v1805, 1
      %v1822 = vperm.slane %v1805, 2
      %v1823 = vperm.slane %v1805, 3
      %v1824 = vperm.slane %v1805, 4
      %v1825 = vperm.slane %v1805, 5
      %v1826 = vperm.slane %v1805, 6
      %v1827 = vperm.slane %v1805, 7
      %v1828 = vperm.slane %v1806, 0
      %v1829 = vperm.slane %v1806, 1
      %v1830 = vperm.slane %v1806, 2
      %v1831 = vperm.slane %v1806, 3
      %v1832 = vperm.slane %v1806, 4
      %v1833 = vperm.slane %v1806, 5
      %v1834 = vperm.slane %v1806, 6
      %v1835 = vperm.slane %v1806, 7
      %v1836 = vperm.slane %v1807, 0
      %v1837 = vperm.slane %v1807, 1
      %v1838 = vperm.slane %v1807, 2
      %v1839 = vperm.slane %v1807, 3
      %v1840 = vperm.slane %v1807, 4
      %v1841 = vperm.slane %v1807, 5
      %v1842 = vperm.slane %v1807, 6
      %v1843 = vperm.slane %v1807, 7
      %v1876 = vmul.f32 %v1292, %v1812
      %v1877 = vmul.f32 %v1293, %v1813
      %v1878 = vmul.f32 %v1294, %v1814
      %v1879 = vmul.f32 %v1295, %v1815
      %v1880 = vmul.f32 %v1296, %v1816
      %v1881 = vmul.f32 %v1297, %v1817
      %v1882 = vmul.f32 %v1298, %v1818
      %v1883 = vmul.f32 %v1299, %v1819
      %v1884 = vmul.f32 %v1300, %v1820
      %v1885 = vmul.f32 %v1301, %v1821
      %v1886 = vmul.f32 %v1302, %v1822
      %v1887 = vmul.f32 %v1303, %v1823
      %v1888 = vmul.f32 %v1304, %v1824
      %v1889 = vmul.f32 %v1305, %v1825
      %v1890 = vmul.f32 %v1306, %v1826
      %v1891 = vmul.f32 %v1307, %v1827
      %v1892 = vmul.f32 %v1308, %v1828
      %v1893 = vmul.f32 %v1309, %v1829
      %v1894 = vmul.f32 %v1310, %v1830
      %v1895 = vmul.f32 %v1311, %v1831
      %v1896 = vmul.f32 %v1312, %v1832
      %v1897 = vmul.f32 %v1313, %v1833
      %v1898 = vmul.f32 %v1314, %v1834
      %v1899 = vmul.f32 %v1315, %v1835
      %v1900 = vmul.f32 %v1316, %v1836
      %v1901 = vmul.f32 %v1317, %v1837
      %v1902 = vmul.f32 %v1318, %v1838
      %v1903 = vmul.f32 %v1319, %v1839
      %v1904 = vmul.f32 %v1320, %v1840
      %v1905 = vmul.f32 %v1321, %v1841
      %v1906 = vmul.f32 %v1322, %v1842
      %v1907 = vmul.f32 %v1323, %v1843
      %v1908 = vmul.f32 %v1324, %v1812
      %v1909 = vmul.f32 %v1325, %v1813
      %v1910 = vmul.f32 %v1326, %v1814
      %v1911 = vmul.f32 %v1327, %v1815
      %v1912 = vmul.f32 %v1328, %v1816
      %v1913 = vmul.f32 %v1329, %v1817
      %v1914 = vmul.f32 %v1330, %v1818
      %v1915 = vmul.f32 %v1331, %v1819
      %v1916 = vmul.f32 %v1332, %v1820
      %v1917 = vmul.f32 %v1333, %v1821
      %v1918 = vmul.f32 %v1334, %v1822
      %v1919 = vmul.f32 %v1335, %v1823
      %v1920 = vmul.f32 %v1336, %v1824
      %v1921 = vmul.f32 %v1337, %v1825
      %v1922 = vmul.f32 %v1338, %v1826
      %v1923 = vmul.f32 %v1339, %v1827
      %v1924 = vmul.f32 %v1340, %v1828
      %v1925 = vmul.f32 %v1341, %v1829
      %v1926 = vmul.f32 %v1342, %v1830
      %v1927 = vmul.f32 %v1343, %v1831
      %v1928 = vmul.f32 %v1344, %v1832
      %v1929 = vmul.f32 %v1345, %v1833
      %v1930 = vmul.f32 %v1346, %v1834
      %v1931 = vmul.f32 %v1347, %v1835
      %v1932 = vmul.f32 %v1348, %v1836
      %v1933 = vmul.f32 %v1349, %v1837
      %v1934 = vmul.f32 %v1350, %v1838
      %v1935 = vmul.f32 %v1351, %v1839
      %v1936 = vmul.f32 %v1352, %v1840
      %v1937 = vmul.f32 %v1353, %v1841
      %v1938 = vmul.f32 %v1354, %v1842
      %v1939 = vmul.f32 %v1355, %v1843
      %v1940 = vmul.f32 %v1356, %v1812
      %v1941 = vmul.f32 %v1357, %v1813
      %v1942 = vmul.f32 %v1358, %v1814
      %v1943 = vmul.f32 %v1359, %v1815
      %v1944 = vmul.f32 %v1360, %v1816
      %v1945 = vmul.f32 %v1361, %v1817
      %v1946 = vmul.f32 %v1362, %v1818
      %v1947 = vmul.f32 %v1363, %v1819
      %v1948 = vmul.f32 %v1364, %v1820
      %v1949 = vmul.f32 %v1365, %v1821
      %v1950 = vmul.f32 %v1366, %v1822
      %v1951 = vmul.f32 %v1367, %v1823
      %v1952 = vmul.f32 %v1368, %v1824
      %v1953 = vmul.f32 %v1369, %v1825
      %v1954 = vmul.f32 %v1370, %v1826
      %v1955 = vmul.f32 %v1371, %v1827
      %v1956 = vmul.f32 %v1372, %v1828
      %v1957 = vmul.f32 %v1373, %v1829
      %v1958 = vmul.f32 %v1374, %v1830
      %v1959 = vmul.f32 %v1375, %v1831
      %v1960 = vmul.f32 %v1376, %v1832
      %v1961 = vmul.f32 %v1377, %v1833
      %v1962 = vmul.f32 %v1378, %v1834
      %v1963 = vmul.f32 %v1379, %v1835
      %v1964 = vmul.f32 %v1380, %v1836
      %v1965 = vmul.f32 %v1381, %v1837
      %v1966 = vmul.f32 %v1382, %v1838
      %v1967 = vmul.f32 %v1383, %v1839
      %v1968 = vmul.f32 %v1384, %v1840
      %v1969 = vmul.f32 %v1385, %v1841
      %v1970 = vmul.f32 %v1386, %v1842
      %v1971 = vmul.f32 %v1387, %v1843
      %v1972 = vmul.f32 %v1388, %v1812
      %v1973 = vmul.f32 %v1389, %v1813
      %v1974 = vmul.f32 %v1390, %v1814
      %v1975 = vmul.f32 %v1391, %v1815
      %v1976 = vmul.f32 %v1392, %v1816
      %v1977 = vmul.f32 %v1393, %v1817
      %v1978 = vmul.f32 %v1394, %v1818
      %v1979 = vmul.f32 %v1395, %v1819
      %v1980 = vmul.f32 %v1396, %v1820
      %v1981 = vmul.f32 %v1397, %v1821
      %v1982 = vmul.f32 %v1398, %v1822
      %v1983 = vmul.f32 %v1399, %v1823
      %v1984 = vmul.f32 %v1400, %v1824
      %v1985 = vmul.f32 %v1401, %v1825
      %v1986 = vmul.f32 %v1402, %v1826
      %v1987 = vmul.f32 %v1403, %v1827
      %v1988 = vmul.f32 %v1404, %v1828
      %v1989 = vmul.f32 %v1405, %v1829
      %v1990 = vmul.f32 %v1406, %v1830
      %v1991 = vmul.f32 %v1407, %v1831
      %v1992 = vmul.f32 %v1408, %v1832
      %v1993 = vmul.f32 %v1409, %v1833
      %v1994 = vmul.f32 %v1410, %v1834
      %v1995 = vmul.f32 %v1411, %v1835
      %v1996 = vmul.f32 %v1412, %v1836
      %v1997 = vmul.f32 %v1413, %v1837
      %v1998 = vmul.f32 %v1414, %v1838
      %v1999 = vmul.f32 %v1415, %v1839
      %v2000 = vmul.f32 %v1416, %v1840
      %v2001 = vmul.f32 %v1417, %v1841
      %v2002 = vmul.f32 %v1418, %v1842
      %v2003 = vmul.f32 %v1419, %v1843
      %v2004 = vmul.f32 %v1420, %v1812
      %v2005 = vmul.f32 %v1421, %v1813
      %v2006 = vmul.f32 %v1422, %v1814
      %v2007 = vmul.f32 %v1423, %v1815
      %v2008 = vmul.f32 %v1424, %v1816
      %v2009 = vmul.f32 %v1425, %v1817
      %v2010 = vmul.f32 %v1426, %v1818
      %v2011 = vmul.f32 %v1427, %v1819
      %v2012 = vmul.f32 %v1428, %v1820
      %v2013 = vmul.f32 %v1429, %v1821
      %v2014 = vmul.f32 %v1430, %v1822
      %v2015 = vmul.f32 %v1431, %v1823
      %v2016 = vmul.f32 %v1432, %v1824
      %v2017 = vmul.f32 %v1433, %v1825
      %v2018 = vmul.f32 %v1434, %v1826
      %v2019 = vmul.f32 %v1435, %v1827
      %v2020 = vmul.f32 %v1436, %v1828
      %v2021 = vmul.f32 %v1437, %v1829
      %v2022 = vmul.f32 %v1438, %v1830
      %v2023 = vmul.f32 %v1439, %v1831
      %v2024 = vmul.f32 %v1440, %v1832
      %v2025 = vmul.f32 %v1441, %v1833
      %v2026 = vmul.f32 %v1442, %v1834
      %v2027 = vmul.f32 %v1443, %v1835
      %v2028 = vmul.f32 %v1444, %v1836
      %v2029 = vmul.f32 %v1445, %v1837
      %v2030 = vmul.f32 %v1446, %v1838
      %v2031 = vmul.f32 %v1447, %v1839
      %v2032 = vmul.f32 %v1448, %v1840
      %v2033 = vmul.f32 %v1449, %v1841
      %v2034 = vmul.f32 %v1450, %v1842
      %v2035 = vmul.f32 %v1451, %v1843
      %v2036 = vmul.f32 %v1452, %v1812
      %v2037 = vmul.f32 %v1453, %v1813
      %v2038 = vmul.f32 %v1454, %v1814
      %v2039 = vmul.f32 %v1455, %v1815
      %v2040 = vmul.f32 %v1456, %v1816
      %v2041 = vmul.f32 %v1457, %v1817
      %v2042 = vmul.f32 %v1458, %v1818
      %v2043 = vmul.f32 %v1459, %v1819
      %v2044 = vmul.f32 %v1460, %v1820
      %v2045 = vmul.f32 %v1461, %v1821
      %v2046 = vmul.f32 %v1462, %v1822
      %v2047 = vmul.f32 %v1463, %v1823
      %v2048 = vmul.f32 %v1464, %v1824
      %v2049 = vmul.f32 %v1465, %v1825
      %v2050 = vmul.f32 %v1466, %v1826
      %v2051 = vmul.f32 %v1467, %v1827
      %v2052 = vmul.f32 %v1468, %v1828
      %v2053 = vmul.f32 %v1469, %v1829
      %v2054 = vmul.f32 %v1470, %v1830
      %v2055 = vmul.f32 %v1471, %v1831
      %v2056 = vmul.f32 %v1472, %v1832
      %v2057 = vmul.f32 %v1473, %v1833
      %v2058 = vmul.f32 %v1474, %v1834
      %v2059 = vmul.f32 %v1475, %v1835
      %v2060 = vmul.f32 %v1476, %v1836
      %v2061 = vmul.f32 %v1477, %v1837
      %v2062 = vmul.f32 %v1478, %v1838
      %v2063 = vmul.f32 %v1479, %v1839
      %v2064 = vmul.f32 %v1480, %v1840
      %v2065 = vmul.f32 %v1481, %v1841
      %v2066 = vmul.f32 %v1482, %v1842
      %v2067 = vmul.f32 %v1483, %v1843
      %v2068 = vmul.f32 %v1484, %v1812
      %v2069 = vmul.f32 %v1485, %v1813
      %v2070 = vmul.f32 %v1486, %v1814
      %v2071 = vmul.f32 %v1487, %v1815
      %v2072 = vmul.f32 %v1488, %v1816
      %v2073 = vmul.f32 %v1489, %v1817
      %v2074 = vmul.f32 %v1490, %v1818
      %v2075 = vmul.f32 %v1491, %v1819
      %v2076 = vmul.f32 %v1492, %v1820
      %v2077 = vmul.f32 %v1493, %v1821
      %v2078 = vmul.f32 %v1494, %v1822
      %v2079 = vmul.f32 %v1495, %v1823
      %v2080 = vmul.f32 %v1496, %v1824
      %v2081 = vmul.f32 %v1497, %v1825
      %v2082 = vmul.f32 %v1498, %v1826
      %v2083 = vmul.f32 %v1499, %v1827
      %v2084 = vmul.f32 %v1500, %v1828
      %v2085 = vmul.f32 %v1501, %v1829
      %v2086 = vmul.f32 %v1502, %v1830
      %v2087 = vmul.f32 %v1503, %v1831
      %v2088 = vmul.f32 %v1504, %v1832
      %v2089 = vmul.f32 %v1505, %v1833
      %v2090 = vmul.f32 %v1506, %v1834
      %v2091 = vmul.f32 %v1507, %v1835
      %v2092 = vmul.f32 %v1508, %v1836
      %v2093 = vmul.f32 %v1509, %v1837
      %v2094 = vmul.f32 %v1510, %v1838
      %v2095 = vmul.f32 %v1511, %v1839
      %v2096 = vmul.f32 %v1512, %v1840
      %v2097 = vmul.f32 %v1513, %v1841
      %v2098 = vmul.f32 %v1514, %v1842
      %v2099 = vmul.f32 %v1515, %v1843
      %v2100 = vmul.f32 %v1516, %v1812
      %v2101 = vmul.f32 %v1517, %v1813
      %v2102 = vmul.f32 %v1518, %v1814
      %v2103 = vmul.f32 %v1519, %v1815
      %v2104 = vmul.f32 %v1520, %v1816
      %v2105 = vmul.f32 %v1521, %v1817
      %v2106 = vmul.f32 %v1522, %v1818
      %v2107 = vmul.f32 %v1523, %v1819
      %v2108 = vmul.f32 %v1524, %v1820
      %v2109 = vmul.f32 %v1525, %v1821
      %v2110 = vmul.f32 %v1526, %v1822
      %v2111 = vmul.f32 %v1527, %v1823
      %v2112 = vmul.f32 %v1528, %v1824
      %v2113 = vmul.f32 %v1529, %v1825
      %v2114 = vmul.f32 %v1530, %v1826
      %v2115 = vmul.f32 %v1531, %v1827
      %v2116 = vmul.f32 %v1532, %v1828
      %v2117 = vmul.f32 %v1533, %v1829
      %v2118 = vmul.f32 %v1534, %v1830
      %v2119 = vmul.f32 %v1535, %v1831
      %v2120 = vmul.f32 %v1536, %v1832
      %v2121 = vmul.f32 %v1537, %v1833
      %v2122 = vmul.f32 %v1538, %v1834
      %v2123 = vmul.f32 %v1539, %v1835
      %v2124 = vmul.f32 %v1540, %v1836
      %v2125 = vmul.f32 %v1541, %v1837
      %v2126 = vmul.f32 %v1542, %v1838
      %v2127 = vmul.f32 %v1543, %v1839
      %v2128 = vmul.f32 %v1544, %v1840
      %v2129 = vmul.f32 %v1545, %v1841
      %v2130 = vmul.f32 %v1546, %v1842
      %v2131 = vmul.f32 %v1547, %v1843
      %v2132 = vmul.f32 %v1548, %v1812
      %v2133 = vmul.f32 %v1549, %v1813
      %v2134 = vmul.f32 %v1550, %v1814
      %v2135 = vmul.f32 %v1551, %v1815
      %v2136 = vmul.f32 %v1552, %v1816
      %v2137 = vmul.f32 %v1553, %v1817
      %v2138 = vmul.f32 %v1554, %v1818
      %v2139 = vmul.f32 %v1555, %v1819
      %v2140 = vmul.f32 %v1556, %v1820
      %v2141 = vmul.f32 %v1557, %v1821
      %v2142 = vmul.f32 %v1558, %v1822
      %v2143 = vmul.f32 %v1559, %v1823
      %v2144 = vmul.f32 %v1560, %v1824
      %v2145 = vmul.f32 %v1561, %v1825
      %v2146 = vmul.f32 %v1562, %v1826
      %v2147 = vmul.f32 %v1563, %v1827
      %v2148 = vmul.f32 %v1564, %v1828
      %v2149 = vmul.f32 %v1565, %v1829
      %v2150 = vmul.f32 %v1566, %v1830
      %v2151 = vmul.f32 %v1567, %v1831
      %v2152 = vmul.f32 %v1568, %v1832
      %v2153 = vmul.f32 %v1569, %v1833
      %v2154 = vmul.f32 %v1570, %v1834
      %v2155 = vmul.f32 %v1571, %v1835
      %v2156 = vmul.f32 %v1572, %v1836
      %v2157 = vmul.f32 %v1573, %v1837
      %v2158 = vmul.f32 %v1574, %v1838
      %v2159 = vmul.f32 %v1575, %v1839
      %v2160 = vmul.f32 %v1576, %v1840
      %v2161 = vmul.f32 %v1577, %v1841
      %v2162 = vmul.f32 %v1578, %v1842
      %v2163 = vmul.f32 %v1579, %v1843
      %v2164 = vmul.f32 %v1580, %v1812
      %v2165 = vmul.f32 %v1581, %v1813
      %v2166 = vmul.f32 %v1582, %v1814
      %v2167 = vmul.f32 %v1583, %v1815
      %v2168 = vmul.f32 %v1584, %v1816
      %v2169 = vmul.f32 %v1585, %v1817
      %v2170 = vmul.f32 %v1586, %v1818
      %v2171 = vmul.f32 %v1587, %v1819
      %v2172 = vmul.f32 %v1588, %v1820
      %v2173 = vmul.f32 %v1589, %v1821
      %v2174 = vmul.f32 %v1590, %v1822
      %v2175 = vmul.f32 %v1591, %v1823
      %v2176 = vmul.f32 %v1592, %v1824
      %v2177 = vmul.f32 %v1593, %v1825
      %v2178 = vmul.f32 %v1594, %v1826
      %v2179 = vmul.f32 %v1595, %v1827
      %v2180 = vmul.f32 %v1596, %v1828
      %v2181 = vmul.f32 %v1597, %v1829
      %v2182 = vmul.f32 %v1598, %v1830
      %v2183 = vmul.f32 %v1599, %v1831
      %v2184 = vmul.f32 %v1600, %v1832
      %v2185 = vmul.f32 %v1601, %v1833
      %v2186 = vmul.f32 %v1602, %v1834
      %v2187 = vmul.f32 %v1603, %v1835
      %v2188 = vmul.f32 %v1604, %v1836
      %v2189 = vmul.f32 %v1605, %v1837
      %v2190 = vmul.f32 %v1606, %v1838
      %v2191 = vmul.f32 %v1607, %v1839
      %v2192 = vmul.f32 %v1608, %v1840
      %v2193 = vmul.f32 %v1609, %v1841
      %v2194 = vmul.f32 %v1610, %v1842
      %v2195 = vmul.f32 %v1611, %v1843
      %v2196 = vmul.f32 %v1612, %v1812
      %v2197 = vmul.f32 %v1613, %v1813
      %v2198 = vmul.f32 %v1614, %v1814
      %v2199 = vmul.f32 %v1615, %v1815
      %v2200 = vmul.f32 %v1616, %v1816
      %v2201 = vmul.f32 %v1617, %v1817
      %v2202 = vmul.f32 %v1618, %v1818
      %v2203 = vmul.f32 %v1619, %v1819
      %v2204 = vmul.f32 %v1620, %v1820
      %v2205 = vmul.f32 %v1621, %v1821
      %v2206 = vmul.f32 %v1622, %v1822
      %v2207 = vmul.f32 %v1623, %v1823
      %v2208 = vmul.f32 %v1624, %v1824
      %v2209 = vmul.f32 %v1625, %v1825
      %v2210 = vmul.f32 %v1626, %v1826
      %v2211 = vmul.f32 %v1627, %v1827
      %v2212 = vmul.f32 %v1628, %v1828
      %v2213 = vmul.f32 %v1629, %v1829
      %v2214 = vmul.f32 %v1630, %v1830
      %v2215 = vmul.f32 %v1631, %v1831
      %v2216 = vmul.f32 %v1632, %v1832
      %v2217 = vmul.f32 %v1633, %v1833
      %v2218 = vmul.f32 %v1634, %v1834
      %v2219 = vmul.f32 %v1635, %v1835
      %v2220 = vmul.f32 %v1636, %v1836
      %v2221 = vmul.f32 %v1637, %v1837
      %v2222 = vmul.f32 %v1638, %v1838
      %v2223 = vmul.f32 %v1639, %v1839
      %v2224 = vmul.f32 %v1640, %v1840
      %v2225 = vmul.f32 %v1641, %v1841
      %v2226 = vmul.f32 %v1642, %v1842
      %v2227 = vmul.f32 %v1643, %v1843
      %v2228 = vmul.f32 %v1644, %v1812
      %v2229 = vmul.f32 %v1645, %v1813
      %v2230 = vmul.f32 %v1646, %v1814
      %v2231 = vmul.f32 %v1647, %v1815
      %v2232 = vmul.f32 %v1648, %v1816
      %v2233 = vmul.f32 %v1649, %v1817
      %v2234 = vmul.f32 %v1650, %v1818
      %v2235 = vmul.f32 %v1651, %v1819
      %v2236 = vmul.f32 %v1652, %v1820
      %v2237 = vmul.f32 %v1653, %v1821
      %v2238 = vmul.f32 %v1654, %v1822
      %v2239 = vmul.f32 %v1655, %v1823
      %v2240 = vmul.f32 %v1656, %v1824
      %v2241 = vmul.f32 %v1657, %v1825
      %v2242 = vmul.f32 %v1658, %v1826
      %v2243 = vmul.f32 %v1659, %v1827
      %v2244 = vmul.f32 %v1660, %v1828
      %v2245 = vmul.f32 %v1661, %v1829
      %v2246 = vmul.f32 %v1662, %v1830
      %v2247 = vmul.f32 %v1663, %v1831
      %v2248 = vmul.f32 %v1664, %v1832
      %v2249 = vmul.f32 %v1665, %v1833
      %v2250 = vmul.f32 %v1666, %v1834
      %v2251 = vmul.f32 %v1667, %v1835
      %v2252 = vmul.f32 %v1668, %v1836
      %v2253 = vmul.f32 %v1669, %v1837
      %v2254 = vmul.f32 %v1670, %v1838
      %v2255 = vmul.f32 %v1671, %v1839
      %v2256 = vmul.f32 %v1672, %v1840
      %v2257 = vmul.f32 %v1673, %v1841
      %v2258 = vmul.f32 %v1674, %v1842
      %v2259 = vmul.f32 %v1675, %v1843
      %v2260 = vmul.f32 %v1676, %v1812
      %v2261 = vmul.f32 %v1677, %v1813
      %v2262 = vmul.f32 %v1678, %v1814
      %v2263 = vmul.f32 %v1679, %v1815
      %v2264 = vmul.f32 %v1680, %v1816
      %v2265 = vmul.f32 %v1681, %v1817
      %v2266 = vmul.f32 %v1682, %v1818
      %v2267 = vmul.f32 %v1683, %v1819
      %v2268 = vmul.f32 %v1684, %v1820
      %v2269 = vmul.f32 %v1685, %v1821
      %v2270 = vmul.f32 %v1686, %v1822
      %v2271 = vmul.f32 %v1687, %v1823
      %v2272 = vmul.f32 %v1688, %v1824
      %v2273 = vmul.f32 %v1689, %v1825
      %v2274 = vmul.f32 %v1690, %v1826
      %v2275 = vmul.f32 %v1691, %v1827
      %v2276 = vmul.f32 %v1692, %v1828
      %v2277 = vmul.f32 %v1693, %v1829
      %v2278 = vmul.f32 %v1694, %v1830
      %v2279 = vmul.f32 %v1695, %v1831
      %v2280 = vmul.f32 %v1696, %v1832
      %v2281 = vmul.f32 %v1697, %v1833
      %v2282 = vmul.f32 %v1698, %v1834
      %v2283 = vmul.f32 %v1699, %v1835
      %v2284 = vmul.f32 %v1700, %v1836
      %v2285 = vmul.f32 %v1701, %v1837
      %v2286 = vmul.f32 %v1702, %v1838
      %v2287 = vmul.f32 %v1703, %v1839
      %v2288 = vmul.f32 %v1704, %v1840
      %v2289 = vmul.f32 %v1705, %v1841
      %v2290 = vmul.f32 %v1706, %v1842
      %v2291 = vmul.f32 %v1707, %v1843
      %v2292 = vmul.f32 %v1708, %v1812
      %v2293 = vmul.f32 %v1709, %v1813
      %v2294 = vmul.f32 %v1710, %v1814
      %v2295 = vmul.f32 %v1711, %v1815
      %v2296 = vmul.f32 %v1712, %v1816
      %v2297 = vmul.f32 %v1713, %v1817
      %v2298 = vmul.f32 %v1714, %v1818
      %v2299 = vmul.f32 %v1715, %v1819
      %v2300 = vmul.f32 %v1716, %v1820
      %v2301 = vmul.f32 %v1717, %v1821
      %v2302 = vmul.f32 %v1718, %v1822
      %v2303 = vmul.f32 %v1719, %v1823
      %v2304 = vmul.f32 %v1720, %v1824
      %v2305 = vmul.f32 %v1721, %v1825
      %v2306 = vmul.f32 %v1722, %v1826
      %v2307 = vmul.f32 %v1723, %v1827
      %v2308 = vmul.f32 %v1724, %v1828
      %v2309 = vmul.f32 %v1725, %v1829
      %v2310 = vmul.f32 %v1726, %v1830
      %v2311 = vmul.f32 %v1727, %v1831
      %v2312 = vmul.f32 %v1728, %v1832
      %v2313 = vmul.f32 %v1729, %v1833
      %v2314 = vmul.f32 %v1730, %v1834
      %v2315 = vmul.f32 %v1731, %v1835
      %v2316 = vmul.f32 %v1732, %v1836
      %v2317 = vmul.f32 %v1733, %v1837
      %v2318 = vmul.f32 %v1734, %v1838
      %v2319 = vmul.f32 %v1735, %v1839
      %v2320 = vmul.f32 %v1736, %v1840
      %v2321 = vmul.f32 %v1737, %v1841
      %v2322 = vmul.f32 %v1738, %v1842
      %v2323 = vmul.f32 %v1739, %v1843
      %v2324 = vmul.f32 %v1740, %v1812
      %v2325 = vmul.f32 %v1741, %v1813
      %v2326 = vmul.f32 %v1742, %v1814
      %v2327 = vmul.f32 %v1743, %v1815
      %v2328 = vmul.f32 %v1744, %v1816
      %v2329 = vmul.f32 %v1745, %v1817
      %v2330 = vmul.f32 %v1746, %v1818
      %v2331 = vmul.f32 %v1747, %v1819
      %v2332 = vmul.f32 %v1748, %v1820
      %v2333 = vmul.f32 %v1749, %v1821
      %v2334 = vmul.f32 %v1750, %v1822
      %v2335 = vmul.f32 %v1751, %v1823
      %v2336 = vmul.f32 %v1752, %v1824
      %v2337 = vmul.f32 %v1753, %v1825
      %v2338 = vmul.f32 %v1754, %v1826
      %v2339 = vmul.f32 %v1755, %v1827
      %v2340 = vmul.f32 %v1756, %v1828
      %v2341 = vmul.f32 %v1757, %v1829
      %v2342 = vmul.f32 %v1758, %v1830
      %v2343 = vmul.f32 %v1759, %v1831
      %v2344 = vmul.f32 %v1760, %v1832
      %v2345 = vmul.f32 %v1761, %v1833
      %v2346 = vmul.f32 %v1762, %v1834
      %v2347 = vmul.f32 %v1763, %v1835
      %v2348 = vmul.f32 %v1764, %v1836
      %v2349 = vmul.f32 %v1765, %v1837
      %v2350 = vmul.f32 %v1766, %v1838
      %v2351 = vmul.f32 %v1767, %v1839
      %v2352 = vmul.f32 %v1768, %v1840
      %v2353 = vmul.f32 %v1769, %v1841
      %v2354 = vmul.f32 %v1770, %v1842
      %v2355 = vmul.f32 %v1771, %v1843
      %v2356 = vmul.f32 %v1772, %v1812
      %v2357 = vmul.f32 %v1773, %v1813
      %v2358 = vmul.f32 %v1774, %v1814
      %v2359 = vmul.f32 %v1775, %v1815
      %v2360 = vmul.f32 %v1776, %v1816
      %v2361 = vmul.f32 %v1777, %v1817
      %v2362 = vmul.f32 %v1778, %v1818
      %v2363 = vmul.f32 %v1779, %v1819
      %v2364 = vmul.f32 %v1780, %v1820
      %v2365 = vmul.f32 %v1781, %v1821
      %v2366 = vmul.f32 %v1782, %v1822
      %v2367 = vmul.f32 %v1783, %v1823
      %v2368 = vmul.f32 %v1784, %v1824
      %v2369 = vmul.f32 %v1785, %v1825
      %v2370 = vmul.f32 %v1786, %v1826
      %v2371 = vmul.f32 %v1787, %v1827
      %v2372 = vmul.f32 %v1788, %v1828
      %v2373 = vmul.f32 %v1789, %v1829
      %v2374 = vmul.f32 %v1790, %v1830
      %v2375 = vmul.f32 %v1791, %v1831
      %v2376 = vmul.f32 %v1792, %v1832
      %v2377 = vmul.f32 %v1793, %v1833
      %v2378 = vmul.f32 %v1794, %v1834
      %v2379 = vmul.f32 %v1795, %v1835
      %v2380 = vmul.f32 %v1796, %v1836
      %v2381 = vmul.f32 %v1797, %v1837
      %v2382 = vmul.f32 %v1798, %v1838
      %v2383 = vmul.f32 %v1799, %v1839
      %v2384 = vmul.f32 %v1800, %v1840
      %v2385 = vmul.f32 %v1801, %v1841
      %v2386 = vmul.f32 %v1802, %v1842
      %v2387 = vmul.f32 %v1803, %v1843
      %v2388 = vadd.f32 %v1876, %v1877
      %v2389 = vadd.f32 %v2388, %v1878
      %v2390 = vadd.f32 %v2389, %v1879
      %v2391 = vadd.f32 %v2390, %v1880
      %v2392 = vadd.f32 %v2391, %v1881
      %v2393 = vadd.f32 %v2392, %v1882
      %v2394 = vadd.f32 %v2393, %v1883
      %v2395 = vadd.f32 %v2394, %v1884
      %v2396 = vadd.f32 %v2395, %v1885
      %v2397 = vadd.f32 %v2396, %v1886
      %v2398 = vadd.f32 %v2397, %v1887
      %v2399 = vadd.f32 %v2398, %v1888
      %v2400 = vadd.f32 %v2399, %v1889
      %v2401 = vadd.f32 %v2400, %v1890
      %v2402 = vadd.f32 %v2401, %v1891
      %v2403 = vadd.f32 %v2402, %v1892
      %v2404 = vadd.f32 %v2403, %v1893
      %v2405 = vadd.f32 %v2404, %v1894
      %v2406 = vadd.f32 %v2405, %v1895
      %v2407 = vadd.f32 %v2406, %v1896
      %v2408 = vadd.f32 %v2407, %v1897
      %v2409 = vadd.f32 %v2408, %v1898
      %v2410 = vadd.f32 %v2409, %v1899
      %v2411 = vadd.f32 %v2410, %v1900
      %v2412 = vadd.f32 %v2411, %v1901
      %v2413 = vadd.f32 %v2412, %v1902
      %v2414 = vadd.f32 %v2413, %v1903
      %v2415 = vadd.f32 %v2414, %v1904
      %v2416 = vadd.f32 %v2415, %v1905
      %v2417 = vadd.f32 %v2416, %v1906
      %v2418 = vadd.f32 %v2417, %v1907
      %2419 = vadd.xlane.f32.xlu0 %v2418
      %v2420 = vpop.xlane.xlu0 %2419
      %v2421 = vadd.f32 %v1908, %v1909
      %v2422 = vadd.f32 %v2421, %v1910
      %v2423 = vadd.f32 %v2422, %v1911
      %v2424 = vadd.f32 %v2423, %v1912
      %v2425 = vadd.f32 %v2424, %v1913
      %v2426 = vadd.f32 %v2425, %v1914
      %v2427 = vadd.f32 %v2426, %v1915
      %v2428 = vadd.f32 %v2427, %v1916
      %v2429 = vadd.f32 %v2428, %v1917
      %v2430 = vadd.f32 %v2429, %v1918
      %v2431 = vadd.f32 %v2430, %v1919
      %v2432 = vadd.f32 %v2431, %v1920
      %v2433 = vadd.f32 %v2432, %v1921
      %v2434 = vadd.f32 %v2433, %v1922
      %v2435 = vadd.f32 %v2434, %v1923
      %v2436 = vadd.f32 %v2435, %v1924
      %v2437 = vadd.f32 %v2436, %v1925
      %v2438 = vadd.f32 %v2437, %v1926
      %v2439 = vadd.f32 %v2438, %v1927
      %v2440 = vadd.f32 %v2439, %v1928
      %v2441 = vadd.f32 %v2440, %v1929
      %v2442 = vadd.f32 %v2441, %v1930
      %v2443 = vadd.f32 %v2442, %v1931
      %v2444 = vadd.f32 %v2443, %v1932
      %v2445 = vadd.f32 %v2444, %v1933
      %v2446 = vadd.f32 %v2445, %v1934
      %v2447 = vadd.f32 %v2446, %v1935
      %v2448 = vadd.f32 %v2447, %v1936
      %v2449 = vadd.f32 %v2448, %v1937
      %v2450 = vadd.f32 %v2449, %v1938
      %v2451 = vadd.f32 %v2450, %v1939
      %2452 = vadd.xlane.f32.xlu0 %v2451
      %v2453 = vpop.xlane.xlu0 %2452
      %v2454 = vadd.f32 %v1940, %v1941
      %v2455 = vadd.f32 %v2454, %v1942
      %v2456 = vadd.f32 %v2455, %v1943
      %v2457 = vadd.f32 %v2456, %v1944
      %v2458 = vadd.f32 %v2457, %v1945
      %v2459 = vadd.f32 %v2458, %v1946
      %v2460 = vadd.f32 %v2459, %v1947
      %v2461 = vadd.f32 %v2460, %v1948
      %v2462 = vadd.f32 %v2461, %v1949
      %v2463 = vadd.f32 %v2462, %v1950
      %v2464 = vadd.f32 %v2463, %v1951
      %v2465 = vadd.f32 %v2464, %v1952
      %v2466 = vadd.f32 %v2465, %v1953
      %v2467 = vadd.f32 %v2466, %v1954
      %v2468 = vadd.f32 %v2467, %v1955
      %v2469 = vadd.f32 %v2468, %v1956
      %v2470 = vadd.f32 %v2469, %v1957
      %v2471 = vadd.f32 %v2470, %v1958
      %v2472 = vadd.f32 %v2471, %v1959
      %v2473 = vadd.f32 %v2472, %v1960
      %v2474 = vadd.f32 %v2473, %v1961
      %v2475 = vadd.f32 %v2474, %v1962
      %v2476 = vadd.f32 %v2475, %v1963
      %v2477 = vadd.f32 %v2476, %v1964
      %v2478 = vadd.f32 %v2477, %v1965
      %v2479 = vadd.f32 %v2478, %v1966
      %v2480 = vadd.f32 %v2479, %v1967
      %v2481 = vadd.f32 %v2480, %v1968
      %v2482 = vadd.f32 %v2481, %v1969
      %v2483 = vadd.f32 %v2482, %v1970
      %v2484 = vadd.f32 %v2483, %v1971
      %2485 = vadd.xlane.f32.xlu0 %v2484
      %v2486 = vpop.xlane.xlu0 %2485
      %v2487 = vadd.f32 %v1972, %v1973
      %v2488 = vadd.f32 %v2487, %v1974
      %v2489 = vadd.f32 %v2488, %v1975
      %v2490 = vadd.f32 %v2489, %v1976
      %v2491 = vadd.f32 %v2490, %v1977
      %v2492 = vadd.f32 %v2491, %v1978
      %v2493 = vadd.f32 %v2492, %v1979
      %v2494 = vadd.f32 %v2493, %v1980
      %v2495 = vadd.f32 %v2494, %v1981
      %v2496 = vadd.f32 %v2495, %v1982
      %v2497 = vadd.f32 %v2496, %v1983
      %v2498 = vadd.f32 %v2497, %v1984
      %v2499 = vadd.f32 %v2498, %v1985
      %v2500 = vadd.f32 %v2499, %v1986
      %v2501 = vadd.f32 %v2500, %v1987
      %v2502 = vadd.f32 %v2501, %v1988
      %v2503 = vadd.f32 %v2502, %v1989
      %v2504 = vadd.f32 %v2503, %v1990
      %v2505 = vadd.f32 %v2504, %v1991
      %v2506 = vadd.f32 %v2505, %v1992
      %v2507 = vadd.f32 %v2506, %v1993
      %v2508 = vadd.f32 %v2507, %v1994
      %v2509 = vadd.f32 %v2508, %v1995
      %v2510 = vadd.f32 %v2509, %v1996
      %v2511 = vadd.f32 %v2510, %v1997
      %v2512 = vadd.f32 %v2511, %v1998
      %v2513 = vadd.f32 %v2512, %v1999
      %v2514 = vadd.f32 %v2513, %v2000
      %v2515 = vadd.f32 %v2514, %v2001
      %v2516 = vadd.f32 %v2515, %v2002
      %v2517 = vadd.f32 %v2516, %v2003
      %2518 = vadd.xlane.f32.xlu0 %v2517
      %v2519 = vpop.xlane.xlu0 %2518
      %v2520 = vadd.f32 %v2004, %v2005
      %v2521 = vadd.f32 %v2520, %v2006
      %v2522 = vadd.f32 %v2521, %v2007
      %v2523 = vadd.f32 %v2522, %v2008
      %v2524 = vadd.f32 %v2523, %v2009
      %v2525 = vadd.f32 %v2524, %v2010
      %v2526 = vadd.f32 %v2525, %v2011
      %v2527 = vadd.f32 %v2526, %v2012
      %v2528 = vadd.f32 %v2527, %v2013
      %v2529 = vadd.f32 %v2528, %v2014
      %v2530 = vadd.f32 %v2529, %v2015
      %v2531 = vadd.f32 %v2530, %v2016
      %v2532 = vadd.f32 %v2531, %v2017
      %v2533 = vadd.f32 %v2532, %v2018
      %v2534 = vadd.f32 %v2533, %v2019
      %v2535 = vadd.f32 %v2534, %v2020
      %v2536 = vadd.f32 %v2535, %v2021
      %v2537 = vadd.f32 %v2536, %v2022
      %v2538 = vadd.f32 %v2537, %v2023
      %v2539 = vadd.f32 %v2538, %v2024
      %v2540 = vadd.f32 %v2539, %v2025
      %v2541 = vadd.f32 %v2540, %v2026
      %v2542 = vadd.f32 %v2541, %v2027
      %v2543 = vadd.f32 %v2542, %v2028
      %v2544 = vadd.f32 %v2543, %v2029
      %v2545 = vadd.f32 %v2544, %v2030
      %v2546 = vadd.f32 %v2545, %v2031
      %v2547 = vadd.f32 %v2546, %v2032
      %v2548 = vadd.f32 %v2547, %v2033
      %v2549 = vadd.f32 %v2548, %v2034
      %v2550 = vadd.f32 %v2549, %v2035
      %2551 = vadd.xlane.f32.xlu0 %v2550
      %v2552 = vpop.xlane.xlu0 %2551
      %v2553 = vadd.f32 %v2036, %v2037
      %v2554 = vadd.f32 %v2553, %v2038
      %v2555 = vadd.f32 %v2554, %v2039
      %v2556 = vadd.f32 %v2555, %v2040
      %v2557 = vadd.f32 %v2556, %v2041
      %v2558 = vadd.f32 %v2557, %v2042
      %v2559 = vadd.f32 %v2558, %v2043
      %v2560 = vadd.f32 %v2559, %v2044
      %v2561 = vadd.f32 %v2560, %v2045
      %v2562 = vadd.f32 %v2561, %v2046
      %v2563 = vadd.f32 %v2562, %v2047
      %v2564 = vadd.f32 %v2563, %v2048
      %v2565 = vadd.f32 %v2564, %v2049
      %v2566 = vadd.f32 %v2565, %v2050
      %v2567 = vadd.f32 %v2566, %v2051
      %v2568 = vadd.f32 %v2567, %v2052
      %v2569 = vadd.f32 %v2568, %v2053
      %v2570 = vadd.f32 %v2569, %v2054
      %v2571 = vadd.f32 %v2570, %v2055
      %v2572 = vadd.f32 %v2571, %v2056
      %v2573 = vadd.f32 %v2572, %v2057
      %v2574 = vadd.f32 %v2573, %v2058
      %v2575 = vadd.f32 %v2574, %v2059
      %v2576 = vadd.f32 %v2575, %v2060
      %v2577 = vadd.f32 %v2576, %v2061
      %v2578 = vadd.f32 %v2577, %v2062
      %v2579 = vadd.f32 %v2578, %v2063
      %v2580 = vadd.f32 %v2579, %v2064
      %v2581 = vadd.f32 %v2580, %v2065
      %v2582 = vadd.f32 %v2581, %v2066
      %v2583 = vadd.f32 %v2582, %v2067
      %2584 = vadd.xlane.f32.xlu0 %v2583
      %v2585 = vpop.xlane.xlu0 %2584
      %v2586 = vadd.f32 %v2068, %v2069
      %v2587 = vadd.f32 %v2586, %v2070
      %v2588 = vadd.f32 %v2587, %v2071
      %v2589 = vadd.f32 %v2588, %v2072
      %v2590 = vadd.f32 %v2589, %v2073
      %v2591 = vadd.f32 %v2590, %v2074
      %v2592 = vadd.f32 %v2591, %v2075
      %v2593 = vadd.f32 %v2592, %v2076
      %v2594 = vadd.f32 %v2593, %v2077
      %v2595 = vadd.f32 %v2594, %v2078
      %v2596 = vadd.f32 %v2595, %v2079
      %v2597 = vadd.f32 %v2596, %v2080
      %v2598 = vadd.f32 %v2597, %v2081
      %v2599 = vadd.f32 %v2598, %v2082
      %v2600 = vadd.f32 %v2599, %v2083
      %v2601 = vadd.f32 %v2600, %v2084
      %v2602 = vadd.f32 %v2601, %v2085
      %v2603 = vadd.f32 %v2602, %v2086
      %v2604 = vadd.f32 %v2603, %v2087
      %v2605 = vadd.f32 %v2604, %v2088
      %v2606 = vadd.f32 %v2605, %v2089
      %v2607 = vadd.f32 %v2606, %v2090
      %v2608 = vadd.f32 %v2607, %v2091
      %v2609 = vadd.f32 %v2608, %v2092
      %v2610 = vadd.f32 %v2609, %v2093
      %v2611 = vadd.f32 %v2610, %v2094
      %v2612 = vadd.f32 %v2611, %v2095
      %v2613 = vadd.f32 %v2612, %v2096
      %v2614 = vadd.f32 %v2613, %v2097
      %v2615 = vadd.f32 %v2614, %v2098
      %v2616 = vadd.f32 %v2615, %v2099
      %2617 = vadd.xlane.f32.xlu0 %v2616
      %v2618 = vpop.xlane.xlu0 %2617
      %v2619 = vadd.f32 %v2100, %v2101
      %v2620 = vadd.f32 %v2619, %v2102
      %v2621 = vadd.f32 %v2620, %v2103
      %v2622 = vadd.f32 %v2621, %v2104
      %v2623 = vadd.f32 %v2622, %v2105
      %v2624 = vadd.f32 %v2623, %v2106
      %v2625 = vadd.f32 %v2624, %v2107
      %v2626 = vadd.f32 %v2625, %v2108
      %v2627 = vadd.f32 %v2626, %v2109
      %v2628 = vadd.f32 %v2627, %v2110
      %v2629 = vadd.f32 %v2628, %v2111
      %v2630 = vadd.f32 %v2629, %v2112
      %v2631 = vadd.f32 %v2630, %v2113
      %v2632 = vadd.f32 %v2631, %v2114
      %v2633 = vadd.f32 %v2632, %v2115
      %v2634 = vadd.f32 %v2633, %v2116
      %v2635 = vadd.f32 %v2634, %v2117
      %v2636 = vadd.f32 %v2635, %v2118
      %v2637 = vadd.f32 %v2636, %v2119
      %v2638 = vadd.f32 %v2637, %v2120
      %v2639 = vadd.f32 %v2638, %v2121
      %v2640 = vadd.f32 %v2639, %v2122
      %v2641 = vadd.f32 %v2640, %v2123
      %v2642 = vadd.f32 %v2641, %v2124
      %v2643 = vadd.f32 %v2642, %v2125
      %v2644 = vadd.f32 %v2643, %v2126
      %v2645 = vadd.f32 %v2644, %v2127
      %v2646 = vadd.f32 %v2645, %v2128
      %v2647 = vadd.f32 %v2646, %v2129
      %v2648 = vadd.f32 %v2647, %v2130
      %v2649 = vadd.f32 %v2648, %v2131
      %2650 = vadd.xlane.f32.xlu0 %v2649
      %v2651 = vpop.xlane.xlu0 %2650
      %v2652 = vadd.f32 %v2132, %v2133
      %v2653 = vadd.f32 %v2652, %v2134
      %v2654 = vadd.f32 %v2653, %v2135
      %v2655 = vadd.f32 %v2654, %v2136
      %v2656 = vadd.f32 %v2655, %v2137
      %v2657 = vadd.f32 %v2656, %v2138
      %v2658 = vadd.f32 %v2657, %v2139
      %v2659 = vadd.f32 %v2658, %v2140
      %v2660 = vadd.f32 %v2659, %v2141
      %v2661 = vadd.f32 %v2660, %v2142
      %v2662 = vadd.f32 %v2661, %v2143
      %v2663 = vadd.f32 %v2662, %v2144
      %v2664 = vadd.f32 %v2663, %v2145
      %v2665 = vadd.f32 %v2664, %v2146
      %v2666 = vadd.f32 %v2665, %v2147
      %v2667 = vadd.f32 %v2666, %v2148
      %v2668 = vadd.f32 %v2667, %v2149
      %v2669 = vadd.f32 %v2668, %v2150
      %v2670 = vadd.f32 %v2669, %v2151
      %v2671 = vadd.f32 %v2670, %v2152
      %v2672 = vadd.f32 %v2671, %v2153
      %v2673 = vadd.f32 %v2672, %v2154
      %v2674 = vadd.f32 %v2673, %v2155
      %v2675 = vadd.f32 %v2674, %v2156
      %v2676 = vadd.f32 %v2675, %v2157
      %v2677 = vadd.f32 %v2676, %v2158
      %v2678 = vadd.f32 %v2677, %v2159
      %v2679 = vadd.f32 %v2678, %v2160
      %v2680 = vadd.f32 %v2679, %v2161
      %v2681 = vadd.f32 %v2680, %v2162
      %v2682 = vadd.f32 %v2681, %v2163
      %2683 = vadd.xlane.f32.xlu0 %v2682
      %v2684 = vpop.xlane.xlu0 %2683
      %v2685 = vadd.f32 %v2164, %v2165
      %v2686 = vadd.f32 %v2685, %v2166
      %v2687 = vadd.f32 %v2686, %v2167
      %v2688 = vadd.f32 %v2687, %v2168
      %v2689 = vadd.f32 %v2688, %v2169
      %v2690 = vadd.f32 %v2689, %v2170
      %v2691 = vadd.f32 %v2690, %v2171
      %v2692 = vadd.f32 %v2691, %v2172
      %v2693 = vadd.f32 %v2692, %v2173
      %v2694 = vadd.f32 %v2693, %v2174
      %v2695 = vadd.f32 %v2694, %v2175
      %v2696 = vadd.f32 %v2695, %v2176
      %v2697 = vadd.f32 %v2696, %v2177
      %v2698 = vadd.f32 %v2697, %v2178
      %v2699 = vadd.f32 %v2698, %v2179
      %v2700 = vadd.f32 %v2699, %v2180
      %v2701 = vadd.f32 %v2700, %v2181
      %v2702 = vadd.f32 %v2701, %v2182
      %v2703 = vadd.f32 %v2702, %v2183
      %v2704 = vadd.f32 %v2703, %v2184
      %v2705 = vadd.f32 %v2704, %v2185
      %v2706 = vadd.f32 %v2705, %v2186
      %v2707 = vadd.f32 %v2706, %v2187
      %v2708 = vadd.f32 %v2707, %v2188
      %v2709 = vadd.f32 %v2708, %v2189
      %v2710 = vadd.f32 %v2709, %v2190
      %v2711 = vadd.f32 %v2710, %v2191
      %v2712 = vadd.f32 %v2711, %v2192
      %v2713 = vadd.f32 %v2712, %v2193
      %v2714 = vadd.f32 %v2713, %v2194
      %v2715 = vadd.f32 %v2714, %v2195
      %2716 = vadd.xlane.f32.xlu0 %v2715
      %v2717 = vpop.xlane.xlu0 %2716
      %v2718 = vadd.f32 %v2196, %v2197
      %v2719 = vadd.f32 %v2718, %v2198
      %v2720 = vadd.f32 %v2719, %v2199
      %v2721 = vadd.f32 %v2720, %v2200
      %v2722 = vadd.f32 %v2721, %v2201
      %v2723 = vadd.f32 %v2722, %v2202
      %v2724 = vadd.f32 %v2723, %v2203
      %v2725 = vadd.f32 %v2724, %v2204
      %v2726 = vadd.f32 %v2725, %v2205
      %v2727 = vadd.f32 %v2726, %v2206
      %v2728 = vadd.f32 %v2727, %v2207
      %v2729 = vadd.f32 %v2728, %v2208
      %v2730 = vadd.f32 %v2729, %v2209
      %v2731 = vadd.f32 %v2730, %v2210
      %v2732 = vadd.f32 %v2731, %v2211
      %v2733 = vadd.f32 %v2732, %v2212
      %v2734 = vadd.f32 %v2733, %v2213
      %v2735 = vadd.f32 %v2734, %v2214
      %v2736 = vadd.f32 %v2735, %v2215
      %v2737 = vadd.f32 %v2736, %v2216
      %v2738 = vadd.f32 %v2737, %v2217
      %v2739 = vadd.f32 %v2738, %v2218
      %v2740 = vadd.f32 %v2739, %v2219
      %v2741 = vadd.f32 %v2740, %v2220
      %v2742 = vadd.f32 %v2741, %v2221
      %v2743 = vadd.f32 %v2742, %v2222
      %v2744 = vadd.f32 %v2743, %v2223
      %v2745 = vadd.f32 %v2744, %v2224
      %v2746 = vadd.f32 %v2745, %v2225
      %v2747 = vadd.f32 %v2746, %v2226
      %v2748 = vadd.f32 %v2747, %v2227
      %2749 = vadd.xlane.f32.xlu0 %v2748
      %v2750 = vpop.xlane.xlu0 %2749
      %v2751 = vadd.f32 %v2228, %v2229
      %v2752 = vadd.f32 %v2751, %v2230
      %v2753 = vadd.f32 %v2752, %v2231
      %v2754 = vadd.f32 %v2753, %v2232
      %v2755 = vadd.f32 %v2754, %v2233
      %v2756 = vadd.f32 %v2755, %v2234
      %v2757 = vadd.f32 %v2756, %v2235
      %v2758 = vadd.f32 %v2757, %v2236
      %v2759 = vadd.f32 %v2758, %v2237
      %v2760 = vadd.f32 %v2759, %v2238
      %v2761 = vadd.f32 %v2760, %v2239
      %v2762 = vadd.f32 %v2761, %v2240
      %v2763 = vadd.f32 %v2762, %v2241
      %v2764 = vadd.f32 %v2763, %v2242
      %v2765 = vadd.f32 %v2764, %v2243
      %v2766 = vadd.f32 %v2765, %v2244
      %v2767 = vadd.f32 %v2766, %v2245
      %v2768 = vadd.f32 %v2767, %v2246
      %v2769 = vadd.f32 %v2768, %v2247
      %v2770 = vadd.f32 %v2769, %v2248
      %v2771 = vadd.f32 %v2770, %v2249
      %v2772 = vadd.f32 %v2771, %v2250
      %v2773 = vadd.f32 %v2772, %v2251
      %v2774 = vadd.f32 %v2773, %v2252
      %v2775 = vadd.f32 %v2774, %v2253
      %v2776 = vadd.f32 %v2775, %v2254
      %v2777 = vadd.f32 %v2776, %v2255
      %v2778 = vadd.f32 %v2777, %v2256
      %v2779 = vadd.f32 %v2778, %v2257
      %v2780 = vadd.f32 %v2779, %v2258
      %v2781 = vadd.f32 %v2780, %v2259
      %2782 = vadd.xlane.f32.xlu0 %v2781
      %v2783 = vpop.xlane.xlu0 %2782
      %v2784 = vadd.f32 %v2260, %v2261
      %v2785 = vadd.f32 %v2784, %v2262
      %v2786 = vadd.f32 %v2785, %v2263
      %v2787 = vadd.f32 %v2786, %v2264
      %v2788 = vadd.f32 %v2787, %v2265
      %v2789 = vadd.f32 %v2788, %v2266
      %v2790 = vadd.f32 %v2789, %v2267
      %v2791 = vadd.f32 %v2790, %v2268
      %v2792 = vadd.f32 %v2791, %v2269
      %v2793 = vadd.f32 %v2792, %v2270
      %v2794 = vadd.f32 %v2793, %v2271
      %v2795 = vadd.f32 %v2794, %v2272
      %v2796 = vadd.f32 %v2795, %v2273
      %v2797 = vadd.f32 %v2796, %v2274
      %v2798 = vadd.f32 %v2797, %v2275
      %v2799 = vadd.f32 %v2798, %v2276
      %v2800 = vadd.f32 %v2799, %v2277
      %v2801 = vadd.f32 %v2800, %v2278
      %v2802 = vadd.f32 %v2801, %v2279
      %v2803 = vadd.f32 %v2802, %v2280
      %v2804 = vadd.f32 %v2803, %v2281
      %v2805 = vadd.f32 %v2804, %v2282
      %v2806 = vadd.f32 %v2805, %v2283
      %v2807 = vadd.f32 %v2806, %v2284
      %v2808 = vadd.f32 %v2807, %v2285
      %v2809 = vadd.f32 %v2808, %v2286
      %v2810 = vadd.f32 %v2809, %v2287
      %v2811 = vadd.f32 %v2810, %v2288
      %v2812 = vadd.f32 %v2811, %v2289
      %v2813 = vadd.f32 %v2812, %v2290
      %v2814 = vadd.f32 %v2813, %v2291
      %2815 = vadd.xlane.f32.xlu0 %v2814
      %v2816 = vpop.xlane.xlu0 %2815
      %v2817 = vadd.f32 %v2292, %v2293
      %v2818 = vadd.f32 %v2817, %v2294
      %v2819 = vadd.f32 %v2818, %v2295
      %v2820 = vadd.f32 %v2819, %v2296
      %v2821 = vadd.f32 %v2820, %v2297
      %v2822 = vadd.f32 %v2821, %v2298
      %v2823 = vadd.f32 %v2822, %v2299
      %v2824 = vadd.f32 %v2823, %v2300
      %v2825 = vadd.f32 %v2824, %v2301
      %v2826 = vadd.f32 %v2825, %v2302
      %v2827 = vadd.f32 %v2826, %v2303
      %v2828 = vadd.f32 %v2827, %v2304
      %v2829 = vadd.f32 %v2828, %v2305
      %v2830 = vadd.f32 %v2829, %v2306
      %v2831 = vadd.f32 %v2830, %v2307
      %v2832 = vadd.f32 %v2831, %v2308
      %v2833 = vadd.f32 %v2832, %v2309
      %v2834 = vadd.f32 %v2833, %v2310
      %v2835 = vadd.f32 %v2834, %v2311
      %v2836 = vadd.f32 %v2835, %v2312
      %v2837 = vadd.f32 %v2836, %v2313
      %v2838 = vadd.f32 %v2837, %v2314
      %v2839 = vadd.f32 %v2838, %v2315
      %v2840 = vadd.f32 %v2839, %v2316
      %v2841 = vadd.f32 %v2840, %v2317
      %v2842 = vadd.f32 %v2841, %v2318
      %v2843 = vadd.f32 %v2842, %v2319
      %v2844 = vadd.f32 %v2843, %v2320
      %v2845 = vadd.f32 %v2844, %v2321
      %v2846 = vadd.f32 %v2845, %v2322
      %v2847 = vadd.f32 %v2846, %v2323
      %2848 = vadd.xlane.f32.xlu0 %v2847
      %v2849 = vpop.xlane.xlu0 %2848
      %v2850 = vadd.f32 %v2324, %v2325
      %v2851 = vadd.f32 %v2850, %v2326
      %v2852 = vadd.f32 %v2851, %v2327
      %v2853 = vadd.f32 %v2852, %v2328
      %v2854 = vadd.f32 %v2853, %v2329
      %v2855 = vadd.f32 %v2854, %v2330
      %v2856 = vadd.f32 %v2855, %v2331
      %v2857 = vadd.f32 %v2856, %v2332
      %v2858 = vadd.f32 %v2857, %v2333
      %v2859 = vadd.f32 %v2858, %v2334
      %v2860 = vadd.f32 %v2859, %v2335
      %v2861 = vadd.f32 %v2860, %v2336
      %v2862 = vadd.f32 %v2861, %v2337
      %v2863 = vadd.f32 %v2862, %v2338
      %v2864 = vadd.f32 %v2863, %v2339
      %v2865 = vadd.f32 %v2864, %v2340
      %v2866 = vadd.f32 %v2865, %v2341
      %v2867 = vadd.f32 %v2866, %v2342
      %v2868 = vadd.f32 %v2867, %v2343
      %v2869 = vadd.f32 %v2868, %v2344
      %v2870 = vadd.f32 %v2869, %v2345
      %v2871 = vadd.f32 %v2870, %v2346
      %v2872 = vadd.f32 %v2871, %v2347
      %v2873 = vadd.f32 %v2872, %v2348
      %v2874 = vadd.f32 %v2873, %v2349
      %v2875 = vadd.f32 %v2874, %v2350
      %v2876 = vadd.f32 %v2875, %v2351
      %v2877 = vadd.f32 %v2876, %v2352
      %v2878 = vadd.f32 %v2877, %v2353
      %v2879 = vadd.f32 %v2878, %v2354
      %v2880 = vadd.f32 %v2879, %v2355
      %2881 = vadd.xlane.f32.xlu0 %v2880
      %v2882 = vpop.xlane.xlu0 %2881
      %v2883 = vadd.f32 %v2356, %v2357
      %v2884 = vadd.f32 %v2883, %v2358
      %v2885 = vadd.f32 %v2884, %v2359
      %v2886 = vadd.f32 %v2885, %v2360
      %v2887 = vadd.f32 %v2886, %v2361
      %v2888 = vadd.f32 %v2887, %v2362
      %v2889 = vadd.f32 %v2888, %v2363
      %v2890 = vadd.f32 %v2889, %v2364
      %v2891 = vadd.f32 %v2890, %v2365
      %v2892 = vadd.f32 %v2891, %v2366
      %v2893 = vadd.f32 %v2892, %v2367
      %v2894 = vadd.f32 %v2893, %v2368
      %v2895 = vadd.f32 %v2894, %v2369
      %v2896 = vadd.f32 %v2895, %v2370
      %v2897 = vadd.f32 %v2896, %v2371
      %v2898 = vadd.f32 %v2897, %v2372
      %v2899 = vadd.f32 %v2898, %v2373
      %v2900 = vadd.f32 %v2899, %v2374
      %v2901 = vadd.f32 %v2900, %v2375
      %v2902 = vadd.f32 %v2901, %v2376
      %v2903 = vadd.f32 %v2902, %v2377
      %v2904 = vadd.f32 %v2903, %v2378
      %v2905 = vadd.f32 %v2904, %v2379
      %v2906 = vadd.f32 %v2905, %v2380
      %v2907 = vadd.f32 %v2906, %v2381
      %v2908 = vadd.f32 %v2907, %v2382
      %v2909 = vadd.f32 %v2908, %v2383
      %v2910 = vadd.f32 %v2909, %v2384
      %v2911 = vadd.f32 %v2910, %v2385
      %v2912 = vadd.f32 %v2911, %v2386
      %v2913 = vadd.f32 %v2912, %v2387
      %2914 = vadd.xlane.f32.xlu0 %v2913
      %v2915 = vpop.xlane.xlu0 %2914
      %v2916 = vadd.f32 %v2420, %v2453
      %v2917 = vadd.f32 %v2916, %v2486
      %v2918 = vadd.f32 %v2917, %v2519
      %v2919 = vadd.f32 %v2918, %v2552
      %v2920 = vadd.f32 %v2919, %v2585
      %v2921 = vadd.f32 %v2920, %v2618
      %v2922 = vadd.f32 %v2921, %v2651
      %v2923 = vadd.f32 %v2922, %v2684
      %v2924 = vadd.f32 %v2923, %v2717
      %v2925 = vadd.f32 %v2924, %v2750
      %v2926 = vadd.f32 %v2925, %v2783
      %v2927 = vadd.f32 %v2926, %v2816
      %v2928 = vadd.f32 %v2927, %v2849
      %v2929 = vadd.f32 %v2928, %v2882
      %v2930 = vadd.f32 %v2929, %v2915
      %v2931 = vrot.slane %v2930, 4
      %v2932 = vadd.f32 %v2930, %v2931
      %v2933 = vrot.slane %v2932, 2
      %v2934 = vadd.f32 %v2932, %v2933
      %v2935 = vrot.slane %v2934, 1
      %v2936 = vadd.f32 %v2934, %v2935
      %v2937 = vmul.f32 %v2936, 6.1035156e-05
      %v2938 = vld [vmem:[#allocation2] sm:$0x1]
      %v2939 = vadd.f32 %v2937, %v2938
      %vm2940 = vcmask 0
      %2941 = vst.msk [vmem:[%s195] sm:$0x1] %vm2940, %v2939
      %p2942 = scmp.lt.s32.totalorder %s17, 1
      %s2943 = scalar_select %p2942, %s17, 1
      %s2944 = scalar_lea.vmem %s4, %s2943
      // Predicated region
      $region37: #{forward.3} parent=35 // pred_check
        %p2945 = pneg %p124
      $region38: #{forward.3} parent=35 // pred_check_branch
        %2947 = sbr.rel (%p2945) target = $region40
      $region39: #{forward.3} parent=35 // pred_region
        _
      $region40: #{forward.3} parent=35 // pred_fallthru
        _
    $region36: #{forward.3} parent=5 // pred_fallthru
      _
    %p2948 = scmp.le.s32.totalorder 2, %s12
    // Predicated region
    $region41: #{forward.3} parent=5 // pred_check
      %p2949 = pneg %p2948
    $region42: #{forward.3} parent=5 // pred_check_branch
      %2951 = sbr.rel (%p2949) target = $region44
    $region43: #{forward.3} parent=5 // pred_region
      %s2952 = ssub.s32 %s12, 2
      // Predicated region
      $region45: #{forward.3} parent=43 // pred_check
        %p2953 = pneg %p130
      $region46: #{forward.3} parent=43 // pred_check_branch
        %2955 = sbr.rel (%p2953) target = $region48
      $region47: #{forward.3} parent=43 // pred_region
        %p2956 = scmp.lt.s32.totalorder %s18, 1
        %s2957 = scalar_select %p2956, %s18, 1
        %s2958 = scalar_lea.vmem %s4, %s2957
      $region48: #{forward.3} parent=43 // pred_fallthru
        _
    $region44: #{forward.3} parent=5 // pred_fallthru
      _
  $region6: #{forward.3} parent=0 // loop_footer
    %s16 = sadd.s32 1, %s12
  $region7: #{forward.3} parent=0 // loop_footer_branch
    %11 = sbr.rel target = $region3
  $region8: #{forward.3} parent=0 // loop_exit
    _

</llo_original>
